<compile_context>
chip_gen: v7x
topology: tpu7x:2x2x1
jax: 0.10.0
libtpu: 0.0.40
codegen_flags: <defaults>
</compile_context>

<pallas_src>
import jax
import jax.numpy as jnp
from jax.experimental import pallas as pl
from jax.experimental.pallas import tpu as pltpu

# Static model configuration:  (H, W, Cin, Cout, pool_k)  per conv block.
_LAYERS = (
    (16, 16, 4, 8, 2),
    (8, 8, 8, 16, 2),
    (4, 4, 16, 32, 4),
)
_NUM_CLASSES = 10
_N_CHANNEL = _LAYERS[-1][3]
_LANE = 128          # lane-dense padded width for the classifier output
_TB = 8              # batch tile per grid step

# Static sanity checks (pooling divisibility + 1x1 final spatial => flatten is valid).
for _i, (_H, _W, _Ci, _Co, _k) in enumerate(_LAYERS):
    assert _H % _k == 0 and _W % _k == 0, "pool size must divide spatial dims"
    if _i + 1 < len(_LAYERS):
        assert _LAYERS[_i + 1][0] == _H // _k and _LAYERS[_i + 1][1] == _W // _k
        assert _LAYERS[_i + 1][2] == _Co
assert _LAYERS[-1][0] // _LAYERS[-1][4] == 1 and _LAYERS[-1][1] // _LAYERS[-1][4] == 1, (
    "flatten assumes a 1x1 final spatial map")


# ---------------------------------------------------------------------------
# Fused kernel: whole forward pass for one batch tile, resident in VMEM.
#
# Activation layout (all layers): rows = TB blocks of (H+2) [pad, H data rows,
# pad]; lanes = (W+2)*C (padded-w position major, channel minor).
#   * conv3x3  = 3 row-shifted GEMMs against banded weight matrices
#   * W-pool   = k lane-compaction 0/1 GEMMs (+ elementwise max)
#   * H-pool + scatter into the next layer's padded buffer
#              = k row-selection 0/1 GEMMs (+ elementwise max)
# ---------------------------------------------------------------------------
def _cifar_fused_kernel(x_ref,
                        m1, s1, p1, b1,
                        m2, s2, p2, b2,
                        m3, s3, p3, b3,
                        fcw_ref, fcb_ref,
                        out_ref,
                        a2_ref, a3_ref):
    act_refs = (x_ref, a2_ref, a3_ref)
    consts = ((m1, s1, p1, b1), (m2, s2, p2, b2), (m3, s3, p3, b3))
    feat = None

    for li, (H, W, Cin, Cout, k) in enumerate(_LAYERS):
        m_ref, s_ref, p_ref, b_ref = consts[li]
        a_ref = act_refs[li]
        Rw = _TB * (H + 2) - 2          # conv output rows (stay within the buffer)

        # --- 3x3 conv (stride 1, pad 1) + bias + ReLU -----------------------
        #   acc[r, w*Cout + co] = sum_di  A[r + di, :] @ M[di]
        acc = jnp.dot(a_ref[pl.ds(0, Rw), :], m_ref[0],
                      preferred_element_type=jnp.float32)
        acc = acc + jnp.dot(a_ref[pl.ds(1, Rw), :], m_ref[1],
                            preferred_element_type=jnp.float32)
        acc = acc + jnp.dot(a_ref[pl.ds(2, Rw), :], m_ref[2],
                            preferred_element_type=jnp.float32)
        acc = jnp.maximum(acc + b_ref[...], 0.0).astype(jnp.bfloat16)

        # --- max-pool, W direction: 0/1 selection GEMMs (lane compaction);
        #     output columns are already the next layer's padded row layout ---
        hp = jnp.dot(acc, s_ref[0], preferred_element_type=jnp.float32)
        for dj in range(1, k):
            hp = jnp.maximum(
                hp, jnp.dot(acc, s_ref[dj], preferred_element_type=jnp.float32))
        hp = hp.astype(jnp.bfloat16)

        # --- max-pool, H direction + row scatter, as 0/1 row-selection GEMMs
        #     (pad rows come out exactly zero; no per-row stores needed) ------
        pooled = jnp.dot(p_ref[0], hp, preferred_element_type=jnp.float32)
        for d in range(1, k):
            pooled = jnp.maximum(
                pooled, jnp.dot(p_ref[d], hp, preferred_element_type=jnp.float32))

        if li + 1 < len(_LAYERS):
            act_refs[li + 1][...] = pooled.astype(jnp.bfloat16)
        else:
            feat = pooled               # (TB, n_channel): flattened features

    # --- classifier Linear(n_channel, num_classes), N padded to 128 lanes ---
    out_ref[...] = (jnp.dot(feat, fcw_ref[...],
                            preferred_element_type=jnp.float32) + fcb_ref[...])


# ---------------------------------------------------------------------------
# Wrapper-side (XLA) constant preparation -- tiny, done once per call.
# ---------------------------------------------------------------------------
def _expand_conv_weight(w_hwio, width):
    """[3,3,Cin,Cout] -> [3, (W+2)*Cin, W*Cout] banded matrices (one per vertical
    tap) so a whole padded activation row convolves in a single GEMM."""
    cin, cout = w_hwio.shape[2], w_hwio.shape[3]
    mats = []
    for di in range(3):
        m = jnp.zeros(((width + 2) * cin, width * cout), jnp.float32)
        for dj in range(3):
            band = jnp.eye(width + 2, width, k=-dj, dtype=jnp.float32)
            m = m + jnp.kron(band, w_hwio[di, dj])
        mats.append(m)
    return jnp.stack(mats).astype(jnp.bfloat16)


def _pool_select_mats(width, channels, k, pad_out):
    """0/1 matrices doing the W-direction max-pool lane compaction.  Output
    columns are the next layer's padded row ((W/k + 2)*C with zero pad groups),
    or W/k * C for the last layer (flat features)."""
    wp = width // k
    ncol_groups = wp + 2 if pad_out else wp
    off = 1 if pad_out else 0
    eye_c = jnp.eye(channels, dtype=jnp.float32)
    mats = []
    for dj in range(k):
        f = jnp.zeros((width, ncol_groups), jnp.float32)
        f = f.at[dj + k * jnp.arange(wp), off + jnp.arange(wp)].set(1.0)
        mats.append(jnp.kron(f, eye_c))
    return jnp.stack(mats).astype(jnp.bfloat16)


def _hpool_scatter_mats(H, k, last):
    """0/1 matrices doing the H-direction max-pool AND the scatter of pooled rows
    into the next layer's padded row buffer (or into flat feature rows if `last`):
      out = max_d ( P[d] @ hp ).
    P[d][dst, src] = 1 with src = b*(H+2) + k*i + d,
    dst = b*(Hp+2) + 1 + i   (or dst = b for the last layer, where Hp == 1)."""
    Hp = H // k
    Rw = _TB * (H + 2) - 2
    n_dst = _TB if last else _TB * (Hp + 2)
    b_idx = jnp.arange(_TB)
    i_idx = jnp.arange(Hp)
    src0 = (b_idx[:, None] * (H + 2) + k * i_idx[None, :]).reshape(-1)
    if last:
        dst = jnp.repeat(b_idx, Hp)
    else:
        dst = (b_idx[:, None] * (Hp + 2) + 1 + i_idx[None, :]).reshape(-1)
    mats = []
    for d in range(k):
        mats.append(jnp.zeros((n_dst, Rw), jnp.float32).at[dst, src0 + d].set(1.0))
    return jnp.stack(mats).astype(jnp.bfloat16)


def init_params(key):
    params = {"convs": []}
    for (_, _, cin, cout, _) in _LAYERS:
        key, k1, k2 = jax.random.split(key, 3)
        w = jax.random.normal(k1, (3, 3, cin, cout), jnp.float32) * 0.1
        b = jax.random.normal(k2, (cout,), jnp.float32) * 0.1
        params["convs"].append((w, b))
    key, k1, k2 = jax.random.split(key, 3)
    params["fc_w"] = jax.random.normal(
        k1, (_N_CHANNEL, _NUM_CLASSES), jnp.float32) * 0.1
    params["fc_b"] = jax.random.normal(k2, (_NUM_CLASSES,), jnp.float32) * 0.1
    return params


def _c3(i):
    return (0, 0, 0)


def _c2(i):
    return (0, 0)


@jax.jit
def cifar_forward(x_nchw, params):
    """NCHW float32 input -> [B, num_classes] logits via one fused Pallas call."""
    H0, W0, C0 = _LAYERS[0][0], _LAYERS[0][1], _LAYERS[0][2]
    x = jnp.transpose(x_nchw, (0, 2, 3, 1)).astype(jnp.float32)     # NHWC
    B = x.shape[0]
    n_blk = -(-B // _TB)
    b_pad = n_blk * _TB

    # Pad batch to whole tiles and spatial dims by 1 (the conv's padding=1),
    # then flatten to the kernel's (row, (W+2)*C lane) layout.  Tiny HBM copy.
    xp = jnp.pad(x, ((0, b_pad - B), (1, 1), (1, 1), (0, 0)))
    x_rows = xp.reshape(b_pad * (H0 + 2), (W0 + 2) * C0).astype(jnp.bfloat16)

    # Pre-expanded constants (a few hundred KB total; VMEM-resident across grid).
    consts = []
    for li, ((w, b), (H, W, Cin, Cout, k)) in enumerate(zip(params["convs"],
                                                            _LAYERS)):
        last = li + 1 == len(_LAYERS)
        consts.append(_expand_conv_weight(w, W))
        consts.append(_pool_select_mats(W, Cout, k, pad_out=not last))
        consts.append(_hpool_scatter_mats(H, k, last))
        consts.append(jnp.tile(b, W).reshape(1, W * Cout).astype(jnp.float32))
    fcw = jnp.zeros((_N_CHANNEL, _LANE), jnp.float32
                    ).at[:, :_NUM_CLASSES].set(params["fc_w"])
    fcb = jnp.zeros((1, _LANE), jnp.float32
                    ).at[0, :_NUM_CLASSES].set(params["fc_b"])
    consts += [fcw, fcb]

    in_specs = [pl.BlockSpec((_TB * (H0 + 2), (W0 + 2) * C0), lambda i: (i, 0))]
    for c in consts:
        in_specs.append(pl.BlockSpec(c.shape, _c3 if c.ndim == 3 else _c2))

    # One scratch buffer per *intermediate* layer (layer-1 buffer is x itself).
    scratch_shapes = [
        pltpu.VMEM((_TB * (H + 2), (W + 2) * Cin), jnp.bfloat16)
        for (H, W, Cin, Cout, k) in _LAYERS[1:]
    ]

    out = pl.pallas_call(
        _cifar_fused_kernel,
        out_shape=jax.ShapeDtypeStruct((b_pad, _LANE), jnp.float32),
        grid=(n_blk,),
        in_specs=in_specs,
        out_specs=pl.BlockSpec((_TB, _LANE), lambda i: (i, 0)),
        scratch_shapes=scratch_shapes,
        compiler_params=pltpu.CompilerParams(
            dimension_semantics=("parallel",)),
    )(x_rows, *consts)
    return out[:B, :_NUM_CLASSES]


# ---------------------------------------------------------------------------
# Pure-XLA reference (f32) with identical semantics, for a numerical check.
# ---------------------------------------------------------------------------
def reference_forward(x_nchw, params):
    x = jnp.transpose(x_nchw, (0, 2, 3, 1)).astype(jnp.float32)
    for (w, b), (_, _, _, _, k) in zip(params["convs"], _LAYERS):
        x = jax.lax.conv_general_dilated(
            x, w, window_strides=(1, 1), padding="SAME",
            dimension_numbers=("NHWC", "HWIO", "NHWC"))
        x = jnp.maximum(x + b, 0.0)
        x = jax.lax.reduce_window(x, -jnp.inf, jax.lax.max,
                                  (1, k, k, 1), (1, k, k, 1), "VALID")
    feat = x.reshape(x.shape[0], -1)
    return feat @ params["fc_w"] + params["fc_b"]


if __name__ == "__main__":
    key = jax.random.PRNGKey(0)
    kx, kp = jax.random.split(key)
    x = jax.random.normal(kx, (2, 4, 16, 16), jnp.float32)   # NCHW (PyTorch)
    params = init_params(kp)

    out = cifar_forward(x, params)
    jax.block_until_ready(out)
    assert out.shape == (2, _NUM_CLASSES), out.shape

    ref = reference_forward(x, params)
    max_err = float(jnp.max(jnp.abs(out - ref)))
    assert jnp.allclose(out, ref, rtol=5e-2, atol=5e-2), f"max abs err {max_err}"
    print("KERNEL_OK")
</pallas_src>

<mosaic_0001>
module attributes {stable_mosaic.version = 11 : i64} {
  func.func @_cifar_fused_kernel(%arg0: i32, %arg1: memref<144x72xbf16, #tpu.memory_space<vmem>>, %arg2: memref<3x72x128xbf16, #tpu.memory_space<vmem>>, %arg3: memref<2x128x80xbf16, #tpu.memory_space<vmem>>, %arg4: memref<2x80x142xbf16, #tpu.memory_space<vmem>>, %arg5: memref<1x128xf32, #tpu.memory_space<vmem>>, %arg6: memref<3x80x128xbf16, #tpu.memory_space<vmem>>, %arg7: memref<2x128x96xbf16, #tpu.memory_space<vmem>>, %arg8: memref<2x48x78xbf16, #tpu.memory_space<vmem>>, %arg9: memref<1x128xf32, #tpu.memory_space<vmem>>, %arg10: memref<3x96x128xbf16, #tpu.memory_space<vmem>>, %arg11: memref<4x128x32xbf16, #tpu.memory_space<vmem>>, %arg12: memref<4x8x46xbf16, #tpu.memory_space<vmem>>, %arg13: memref<1x128xf32, #tpu.memory_space<vmem>>, %arg14: memref<32x128xf32, #tpu.memory_space<vmem>>, %arg15: memref<1x128xf32, #tpu.memory_space<vmem>>, %arg16: memref<8x128xf32, #tpu.memory_space<vmem>>, %arg17: memref<80x80xbf16, #tpu.memory_space<vmem>>, %arg18: memref<48x96xbf16, #tpu.memory_space<vmem>>) attributes {dimension_semantics = [#tpu.dimension_semantics<parallel>], iteration_bounds = array<i64: 1>, scalar_prefetch = 0 : i64, scratch_operands = 2 : i64, tpu.core_type = #tpu.core_type<tc>, window_params = [{transform_indices = @transform_0, window_bounds = array<i64: 144, 72>}, {pipeline_mode = #tpu.pipeline_mode<synchronous>, transform_indices = @transform_1, window_bounds = array<i64: 3, 72, 128>}, {pipeline_mode = #tpu.pipeline_mode<synchronous>, transform_indices = @transform_2, window_bounds = array<i64: 2, 128, 80>}, {pipeline_mode = #tpu.pipeline_mode<synchronous>, transform_indices = @transform_3, window_bounds = array<i64: 2, 80, 142>}, {pipeline_mode = #tpu.pipeline_mode<synchronous>, transform_indices = @transform_4, window_bounds = array<i64: 1, 128>}, {pipeline_mode = #tpu.pipeline_mode<synchronous>, transform_indices = @transform_5, window_bounds = array<i64: 3, 80, 128>}, {pipeline_mode = #tpu.pipeline_mode<synchronous>, transform_indices = @transform_6, window_bounds = array<i64: 2, 128, 96>}, {pipeline_mode = #tpu.pipeline_mode<synchronous>, transform_indices = @transform_7, window_bounds = array<i64: 2, 48, 78>}, {pipeline_mode = #tpu.pipeline_mode<synchronous>, transform_indices = @transform_8, window_bounds = array<i64: 1, 128>}, {pipeline_mode = #tpu.pipeline_mode<synchronous>, transform_indices = @transform_9, window_bounds = array<i64: 3, 96, 128>}, {pipeline_mode = #tpu.pipeline_mode<synchronous>, transform_indices = @transform_10, window_bounds = array<i64: 4, 128, 32>}, {pipeline_mode = #tpu.pipeline_mode<synchronous>, transform_indices = @transform_11, window_bounds = array<i64: 4, 8, 46>}, {pipeline_mode = #tpu.pipeline_mode<synchronous>, transform_indices = @transform_12, window_bounds = array<i64: 1, 128>}, {pipeline_mode = #tpu.pipeline_mode<synchronous>, transform_indices = @transform_13, window_bounds = array<i64: 32, 128>}, {pipeline_mode = #tpu.pipeline_mode<synchronous>, transform_indices = @transform_14, window_bounds = array<i64: 1, 128>}, {transform_indices = @transform_15, window_bounds = array<i64: 8, 128>}]} {
    %c0 = arith.constant 0 : index
    %c0_0 = arith.constant 0 : index
    %0 = vector.load %arg1[%c0, %c0_0] : memref<144x72xbf16, #tpu.memory_space<vmem>>, vector<142x72xbf16>
    %c0_1 = arith.constant 0 : index
    %c0_2 = arith.constant 0 : index
    %c0_3 = arith.constant 0 : index
    %1 = vector.load %arg2[%c0_1, %c0_2, %c0_3] : memref<3x72x128xbf16, #tpu.memory_space<vmem>>, vector<1x72x128xbf16>
    %2 = vector.shape_cast %1 : vector<1x72x128xbf16> to vector<72x128xbf16>
    %cst = arith.constant dense<0.000000e+00> : vector<142x128xf32>
    %3 = tpu.matmul %0, %2, %cst {dimension_numbers = #tpu.dot_dimension_numbers<[1], [0], [0], [1], [0, 0, 1, 1], [], []>} : vector<142x72xbf16>, vector<72x128xbf16>, vector<142x128xf32> -> vector<142x128xf32>
    %c1 = arith.constant 1 : index
    %c0_4 = arith.constant 0 : index
    %4 = vector.load %arg1[%c1, %c0_4] : memref<144x72xbf16, #tpu.memory_space<vmem>>, vector<142x72xbf16>
    %c1_5 = arith.constant 1 : index
    %c0_6 = arith.constant 0 : index
    %c0_7 = arith.constant 0 : index
    %5 = vector.load %arg2[%c1_5, %c0_6, %c0_7] : memref<3x72x128xbf16, #tpu.memory_space<vmem>>, vector<1x72x128xbf16>
    %6 = vector.shape_cast %5 : vector<1x72x128xbf16> to vector<72x128xbf16>
    %cst_8 = arith.constant dense<0.000000e+00> : vector<142x128xf32>
    %7 = tpu.matmul %4, %6, %cst_8 {dimension_numbers = #tpu.dot_dimension_numbers<[1], [0], [0], [1], [0, 0, 1, 1], [], []>} : vector<142x72xbf16>, vector<72x128xbf16>, vector<142x128xf32> -> vector<142x128xf32>
    %8 = arith.addf %3, %7 : vector<142x128xf32>
    %c2 = arith.constant 2 : index
    %c0_9 = arith.constant 0 : index
    %9 = vector.load %arg1[%c2, %c0_9] : memref<144x72xbf16, #tpu.memory_space<vmem>>, vector<142x72xbf16>
    %c2_10 = arith.constant 2 : index
    %c0_11 = arith.constant 0 : index
    %c0_12 = arith.constant 0 : index
    %10 = vector.load %arg2[%c2_10, %c0_11, %c0_12] : memref<3x72x128xbf16, #tpu.memory_space<vmem>>, vector<1x72x128xbf16>
    %11 = vector.shape_cast %10 : vector<1x72x128xbf16> to vector<72x128xbf16>
    %cst_13 = arith.constant dense<0.000000e+00> : vector<142x128xf32>
    %12 = tpu.matmul %9, %11, %cst_13 {dimension_numbers = #tpu.dot_dimension_numbers<[1], [0], [0], [1], [0, 0, 1, 1], [], []>} : vector<142x72xbf16>, vector<72x128xbf16>, vector<142x128xf32> -> vector<142x128xf32>
    %13 = arith.addf %8, %12 : vector<142x128xf32>
    %c0_14 = arith.constant 0 : index
    %c0_15 = arith.constant 0 : index
    %14 = vector.load %arg5[%c0_14, %c0_15] : memref<1x128xf32, #tpu.memory_space<vmem>>, vector<1x128xf32>
    %15 = vector.broadcast %14 : vector<1x128xf32> to vector<142x128xf32>
    %16 = arith.addf %13, %15 : vector<142x128xf32>
    %cst_16 = arith.constant 0.000000e+00 : f32
    %17 = vector.broadcast %cst_16 : f32 to vector<142x128xf32>
    %18 = arith.maximumf %16, %17 : vector<142x128xf32>
    %19 = arith.truncf %18 : vector<142x128xf32> to vector<142x128xbf16>
    %c0_17 = arith.constant 0 : index
    %c0_18 = arith.constant 0 : index
    %c0_19 = arith.constant 0 : index
    %20 = vector.load %arg3[%c0_17, %c0_18, %c0_19] : memref<2x128x80xbf16, #tpu.memory_space<vmem>>, vector<1x128x80xbf16>
    %21 = vector.shape_cast %20 : vector<1x128x80xbf16> to vector<128x80xbf16>
    %cst_20 = arith.constant dense<0.000000e+00> : vector<142x80xf32>
    %22 = tpu.matmul %19, %21, %cst_20 {dimension_numbers = #tpu.dot_dimension_numbers<[1], [0], [0], [1], [0, 0, 1, 1], [], []>} : vector<142x128xbf16>, vector<128x80xbf16>, vector<142x80xf32> -> vector<142x80xf32>
    %c1_21 = arith.constant 1 : index
    %c0_22 = arith.constant 0 : index
    %c0_23 = arith.constant 0 : index
    %23 = vector.load %arg3[%c1_21, %c0_22, %c0_23] : memref<2x128x80xbf16, #tpu.memory_space<vmem>>, vector<1x128x80xbf16>
    %24 = vector.shape_cast %23 : vector<1x128x80xbf16> to vector<128x80xbf16>
    %cst_24 = arith.constant dense<0.000000e+00> : vector<142x80xf32>
    %25 = tpu.matmul %19, %24, %cst_24 {dimension_numbers = #tpu.dot_dimension_numbers<[1], [0], [0], [1], [0, 0, 1, 1], [], []>} : vector<142x128xbf16>, vector<128x80xbf16>, vector<142x80xf32> -> vector<142x80xf32>
    %26 = arith.maximumf %22, %25 : vector<142x80xf32>
    %27 = arith.truncf %26 : vector<142x80xf32> to vector<142x80xbf16>
    %c0_25 = arith.constant 0 : index
    %c0_26 = arith.constant 0 : index
    %c0_27 = arith.constant 0 : index
    %28 = vector.load %arg4[%c0_25, %c0_26, %c0_27] : memref<2x80x142xbf16, #tpu.memory_space<vmem>>, vector<1x80x142xbf16>
    %29 = vector.shape_cast %28 : vector<1x80x142xbf16> to vector<80x142xbf16>
    %cst_28 = arith.constant dense<0.000000e+00> : vector<80x80xf32>
    %30 = tpu.matmul %29, %27, %cst_28 {dimension_numbers = #tpu.dot_dimension_numbers<[1], [0], [0], [1], [0, 0, 1, 1], [], []>} : vector<80x142xbf16>, vector<142x80xbf16>, vector<80x80xf32> -> vector<80x80xf32>
    %c1_29 = arith.constant 1 : index
    %c0_30 = arith.constant 0 : index
    %c0_31 = arith.constant 0 : index
    %31 = vector.load %arg4[%c1_29, %c0_30, %c0_31] : memref<2x80x142xbf16, #tpu.memory_space<vmem>>, vector<1x80x142xbf16>
    %32 = vector.shape_cast %31 : vector<1x80x142xbf16> to vector<80x142xbf16>
    %cst_32 = arith.constant dense<0.000000e+00> : vector<80x80xf32>
    %33 = tpu.matmul %32, %27, %cst_32 {dimension_numbers = #tpu.dot_dimension_numbers<[1], [0], [0], [1], [0, 0, 1, 1], [], []>} : vector<80x142xbf16>, vector<142x80xbf16>, vector<80x80xf32> -> vector<80x80xf32>
    %34 = arith.maximumf %30, %33 : vector<80x80xf32>
    %35 = arith.truncf %34 : vector<80x80xf32> to vector<80x80xbf16>
    %c0_33 = arith.constant 0 : index
    %c0_34 = arith.constant 0 : index
    %36 = vector.load %arg17[%c0_33, %c0_34] : memref<80x80xbf16, #tpu.memory_space<vmem>>, vector<80x80xbf16>
    tpu.vector_store %arg17[%c0_33, %c0_34], %35 {strides = array<i32>} : memref<80x80xbf16, #tpu.memory_space<vmem>>, vector<80x80xbf16>,
    %c0_35 = arith.constant 0 : index
    %c0_36 = arith.constant 0 : index
    %37 = vector.load %arg17[%c0_35, %c0_36] : memref<80x80xbf16, #tpu.memory_space<vmem>>, vector<78x80xbf16>
    %c0_37 = arith.constant 0 : index
    %c0_38 = arith.constant 0 : index
    %c0_39 = arith.constant 0 : index
    %38 = vector.load %arg6[%c0_37, %c0_38, %c0_39] : memref<3x80x128xbf16, #tpu.memory_space<vmem>>, vector<1x80x128xbf16>
    %39 = vector.shape_cast %38 : vector<1x80x128xbf16> to vector<80x128xbf16>
    %cst_40 = arith.constant dense<0.000000e+00> : vector<78x128xf32>
    %40 = tpu.matmul %37, %39, %cst_40 {dimension_numbers = #tpu.dot_dimension_numbers<[1], [0], [0], [1], [0, 0, 1, 1], [], []>} : vector<78x80xbf16>, vector<80x128xbf16>, vector<78x128xf32> -> vector<78x128xf32>
    %c1_41 = arith.constant 1 : index
    %c0_42 = arith.constant 0 : index
    %41 = vector.load %arg17[%c1_41, %c0_42] : memref<80x80xbf16, #tpu.memory_space<vmem>>, vector<78x80xbf16>
    %c1_43 = arith.constant 1 : index
    %c0_44 = arith.constant 0 : index
    %c0_45 = arith.constant 0 : index
    %42 = vector.load %arg6[%c1_43, %c0_44, %c0_45] : memref<3x80x128xbf16, #tpu.memory_space<vmem>>, vector<1x80x128xbf16>
    %43 = vector.shape_cast %42 : vector<1x80x128xbf16> to vector<80x128xbf16>
    %cst_46 = arith.constant dense<0.000000e+00> : vector<78x128xf32>
    %44 = tpu.matmul %41, %43, %cst_46 {dimension_numbers = #tpu.dot_dimension_numbers<[1], [0], [0], [1], [0, 0, 1, 1], [], []>} : vector<78x80xbf16>, vector<80x128xbf16>, vector<78x128xf32> -> vector<78x128xf32>
    %45 = arith.addf %40, %44 : vector<78x128xf32>
    %c2_47 = arith.constant 2 : index
    %c0_48 = arith.constant 0 : index
    %46 = vector.load %arg17[%c2_47, %c0_48] : memref<80x80xbf16, #tpu.memory_space<vmem>>, vector<78x80xbf16>
    %c2_49 = arith.constant 2 : index
    %c0_50 = arith.constant 0 : index
    %c0_51 = arith.constant 0 : index
    %47 = vector.load %arg6[%c2_49, %c0_50, %c0_51] : memref<3x80x128xbf16, #tpu.memory_space<vmem>>, vector<1x80x128xbf16>
    %48 = vector.shape_cast %47 : vector<1x80x128xbf16> to vector<80x128xbf16>
    %cst_52 = arith.constant dense<0.000000e+00> : vector<78x128xf32>
    %49 = tpu.matmul %46, %48, %cst_52 {dimension_numbers = #tpu.dot_dimension_numbers<[1], [0], [0], [1], [0, 0, 1, 1], [], []>} : vector<78x80xbf16>, vector<80x128xbf16>, vector<78x128xf32> -> vector<78x128xf32>
    %50 = arith.addf %45, %49 : vector<78x128xf32>
    %c0_53 = arith.constant 0 : index
    %c0_54 = arith.constant 0 : index
    %51 = vector.load %arg9[%c0_53, %c0_54] : memref<1x128xf32, #tpu.memory_space<vmem>>, vector<1x128xf32>
    %52 = vector.broadcast %51 : vector<1x128xf32> to vector<78x128xf32>
    %53 = arith.addf %50, %52 : vector<78x128xf32>
    %cst_55 = arith.constant 0.000000e+00 : f32
    %54 = vector.broadcast %cst_55 : f32 to vector<78x128xf32>
    %55 = arith.maximumf %53, %54 : vector<78x128xf32>
    %56 = arith.truncf %55 : vector<78x128xf32> to vector<78x128xbf16>
    %c0_56 = arith.constant 0 : index
    %c0_57 = arith.constant 0 : index
    %c0_58 = arith.constant 0 : index
    %57 = vector.load %arg7[%c0_56, %c0_57, %c0_58] : memref<2x128x96xbf16, #tpu.memory_space<vmem>>, vector<1x128x96xbf16>
    %58 = vector.shape_cast %57 : vector<1x128x96xbf16> to vector<128x96xbf16>
    %cst_59 = arith.constant dense<0.000000e+00> : vector<78x96xf32>
    %59 = tpu.matmul %56, %58, %cst_59 {dimension_numbers = #tpu.dot_dimension_numbers<[1], [0], [0], [1], [0, 0, 1, 1], [], []>} : vector<78x128xbf16>, vector<128x96xbf16>, vector<78x96xf32> -> vector<78x96xf32>
    %c1_60 = arith.constant 1 : index
    %c0_61 = arith.constant 0 : index
    %c0_62 = arith.constant 0 : index
    %60 = vector.load %arg7[%c1_60, %c0_61, %c0_62] : memref<2x128x96xbf16, #tpu.memory_space<vmem>>, vector<1x128x96xbf16>
    %61 = vector.shape_cast %60 : vector<1x128x96xbf16> to vector<128x96xbf16>
    %cst_63 = arith.constant dense<0.000000e+00> : vector<78x96xf32>
    %62 = tpu.matmul %56, %61, %cst_63 {dimension_numbers = #tpu.dot_dimension_numbers<[1], [0], [0], [1], [0, 0, 1, 1], [], []>} : vector<78x128xbf16>, vector<128x96xbf16>, vector<78x96xf32> -> vector<78x96xf32>
    %63 = arith.maximumf %59, %62 : vector<78x96xf32>
    %64 = arith.truncf %63 : vector<78x96xf32> to vector<78x96xbf16>
    %c0_64 = arith.constant 0 : index
    %c0_65 = arith.constant 0 : index
    %c0_66 = arith.constant 0 : index
    %65 = vector.load %arg8[%c0_64, %c0_65, %c0_66] : memref<2x48x78xbf16, #tpu.memory_space<vmem>>, vector<1x48x78xbf16>
    %66 = vector.shape_cast %65 : vector<1x48x78xbf16> to vector<48x78xbf16>
    %cst_67 = arith.constant dense<0.000000e+00> : vector<48x96xf32>
    %67 = tpu.matmul %66, %64, %cst_67 {dimension_numbers = #tpu.dot_dimension_numbers<[1], [0], [0], [1], [0, 0, 1, 1], [], []>} : vector<48x78xbf16>, vector<78x96xbf16>, vector<48x96xf32> -> vector<48x96xf32>
    %c1_68 = arith.constant 1 : index
    %c0_69 = arith.constant 0 : index
    %c0_70 = arith.constant 0 : index
    %68 = vector.load %arg8[%c1_68, %c0_69, %c0_70] : memref<2x48x78xbf16, #tpu.memory_space<vmem>>, vector<1x48x78xbf16>
    %69 = vector.shape_cast %68 : vector<1x48x78xbf16> to vector<48x78xbf16>
    %cst_71 = arith.constant dense<0.000000e+00> : vector<48x96xf32>
    %70 = tpu.matmul %69, %64, %cst_71 {dimension_numbers = #tpu.dot_dimension_numbers<[1], [0], [0], [1], [0, 0, 1, 1], [], []>} : vector<48x78xbf16>, vector<78x96xbf16>, vector<48x96xf32> -> vector<48x96xf32>
    %71 = arith.maximumf %67, %70 : vector<48x96xf32>
    %72 = arith.truncf %71 : vector<48x96xf32> to vector<48x96xbf16>
    %c0_72 = arith.constant 0 : index
    %c0_73 = arith.constant 0 : index
    %73 = vector.load %arg18[%c0_72, %c0_73] : memref<48x96xbf16, #tpu.memory_space<vmem>>, vector<48x96xbf16>
    tpu.vector_store %arg18[%c0_72, %c0_73], %72 {strides = array<i32>} : memref<48x96xbf16, #tpu.memory_space<vmem>>, vector<48x96xbf16>,
    %c0_74 = arith.constant 0 : index
    %c0_75 = arith.constant 0 : index
    %74 = vector.load %arg18[%c0_74, %c0_75] : memref<48x96xbf16, #tpu.memory_space<vmem>>, vector<46x96xbf16>
    %c0_76 = arith.constant 0 : index
    %c0_77 = arith.constant 0 : index
    %c0_78 = arith.constant 0 : index
    %75 = vector.load %arg10[%c0_76, %c0_77, %c0_78] : memref<3x96x128xbf16, #tpu.memory_space<vmem>>, vector<1x96x128xbf16>
    %76 = vector.shape_cast %75 : vector<1x96x128xbf16> to vector<96x128xbf16>
    %cst_79 = arith.constant dense<0.000000e+00> : vector<46x128xf32>
    %77 = tpu.matmul %74, %76, %cst_79 {dimension_numbers = #tpu.dot_dimension_numbers<[1], [0], [0], [1], [0, 0, 1, 1], [], []>} : vector<46x96xbf16>, vector<96x128xbf16>, vector<46x128xf32> -> vector<46x128xf32>
    %c1_80 = arith.constant 1 : index
    %c0_81 = arith.constant 0 : index
    %78 = vector.load %arg18[%c1_80, %c0_81] : memref<48x96xbf16, #tpu.memory_space<vmem>>, vector<46x96xbf16>
    %c1_82 = arith.constant 1 : index
    %c0_83 = arith.constant 0 : index
    %c0_84 = arith.constant 0 : index
    %79 = vector.load %arg10[%c1_82, %c0_83, %c0_84] : memref<3x96x128xbf16, #tpu.memory_space<vmem>>, vector<1x96x128xbf16>
    %80 = vector.shape_cast %79 : vector<1x96x128xbf16> to vector<96x128xbf16>
    %cst_85 = arith.constant dense<0.000000e+00> : vector<46x128xf32>
    %81 = tpu.matmul %78, %80, %cst_85 {dimension_numbers = #tpu.dot_dimension_numbers<[1], [0], [0], [1], [0, 0, 1, 1], [], []>} : vector<46x96xbf16>, vector<96x128xbf16>, vector<46x128xf32> -> vector<46x128xf32>
    %82 = arith.addf %77, %81 : vector<46x128xf32>
    %c2_86 = arith.constant 2 : index
    %c0_87 = arith.constant 0 : index
    %83 = vector.load %arg18[%c2_86, %c0_87] : memref<48x96xbf16, #tpu.memory_space<vmem>>, vector<46x96xbf16>
    %c2_88 = arith.constant 2 : index
    %c0_89 = arith.constant 0 : index
    %c0_90 = arith.constant 0 : index
    %84 = vector.load %arg10[%c2_88, %c0_89, %c0_90] : memref<3x96x128xbf16, #tpu.memory_space<vmem>>, vector<1x96x128xbf16>
    %85 = vector.shape_cast %84 : vector<1x96x128xbf16> to vector<96x128xbf16>
    %cst_91 = arith.constant dense<0.000000e+00> : vector<46x128xf32>
    %86 = tpu.matmul %83, %85, %cst_91 {dimension_numbers = #tpu.dot_dimension_numbers<[1], [0], [0], [1], [0, 0, 1, 1], [], []>} : vector<46x96xbf16>, vector<96x128xbf16>, vector<46x128xf32> -> vector<46x128xf32>
    %87 = arith.addf %82, %86 : vector<46x128xf32>
    %c0_92 = arith.constant 0 : index
    %c0_93 = arith.constant 0 : index
    %88 = vector.load %arg13[%c0_92, %c0_93] : memref<1x128xf32, #tpu.memory_space<vmem>>, vector<1x128xf32>
    %89 = vector.broadcast %88 : vector<1x128xf32> to vector<46x128xf32>
    %90 = arith.addf %87, %89 : vector<46x128xf32>
    %cst_94 = arith.constant 0.000000e+00 : f32
    %91 = vector.broadcast %cst_94 : f32 to vector<46x128xf32>
    %92 = arith.maximumf %90, %91 : vector<46x128xf32>
    %93 = arith.truncf %92 : vector<46x128xf32> to vector<46x128xbf16>
    %c0_95 = arith.constant 0 : index
    %c0_96 = arith.constant 0 : index
    %c0_97 = arith.constant 0 : index
    %94 = vector.load %arg11[%c0_95, %c0_96, %c0_97] : memref<4x128x32xbf16, #tpu.memory_space<vmem>>, vector<1x128x32xbf16>
    %95 = vector.shape_cast %94 : vector<1x128x32xbf16> to vector<128x32xbf16>
    %cst_98 = arith.constant dense<0.000000e+00> : vector<46x32xf32>
    %96 = tpu.matmul %93, %95, %cst_98 {dimension_numbers = #tpu.dot_dimension_numbers<[1], [0], [0], [1], [0, 0, 1, 1], [], []>} : vector<46x128xbf16>, vector<128x32xbf16>, vector<46x32xf32> -> vector<46x32xf32>
    %c1_99 = arith.constant 1 : index
    %c0_100 = arith.constant 0 : index
    %c0_101 = arith.constant 0 : index
    %97 = vector.load %arg11[%c1_99, %c0_100, %c0_101] : memref<4x128x32xbf16, #tpu.memory_space<vmem>>, vector<1x128x32xbf16>
    %98 = vector.shape_cast %97 : vector<1x128x32xbf16> to vector<128x32xbf16>
    %cst_102 = arith.constant dense<0.000000e+00> : vector<46x32xf32>
    %99 = tpu.matmul %93, %98, %cst_102 {dimension_numbers = #tpu.dot_dimension_numbers<[1], [0], [0], [1], [0, 0, 1, 1], [], []>} : vector<46x128xbf16>, vector<128x32xbf16>, vector<46x32xf32> -> vector<46x32xf32>
    %100 = arith.maximumf %96, %99 : vector<46x32xf32>
    %c2_103 = arith.constant 2 : index
    %c0_104 = arith.constant 0 : index
    %c0_105 = arith.constant 0 : index
    %101 = vector.load %arg11[%c2_103, %c0_104, %c0_105] : memref<4x128x32xbf16, #tpu.memory_space<vmem>>, vector<1x128x32xbf16>
    %102 = vector.shape_cast %101 : vector<1x128x32xbf16> to vector<128x32xbf16>
    %cst_106 = arith.constant dense<0.000000e+00> : vector<46x32xf32>
    %103 = tpu.matmul %93, %102, %cst_106 {dimension_numbers = #tpu.dot_dimension_numbers<[1], [0], [0], [1], [0, 0, 1, 1], [], []>} : vector<46x128xbf16>, vector<128x32xbf16>, vector<46x32xf32> -> vector<46x32xf32>
    %104 = arith.maximumf %100, %103 : vector<46x32xf32>
    %c3 = arith.constant 3 : index
    %c0_107 = arith.constant 0 : index
    %c0_108 = arith.constant 0 : index
    %105 = vector.load %arg11[%c3, %c0_107, %c0_108] : memref<4x128x32xbf16, #tpu.memory_space<vmem>>, vector<1x128x32xbf16>
    %106 = vector.shape_cast %105 : vector<1x128x32xbf16> to vector<128x32xbf16>
    %cst_109 = arith.constant dense<0.000000e+00> : vector<46x32xf32>
    %107 = tpu.matmul %93, %106, %cst_109 {dimension_numbers = #tpu.dot_dimension_numbers<[1], [0], [0], [1], [0, 0, 1, 1], [], []>} : vector<46x128xbf16>, vector<128x32xbf16>, vector<46x32xf32> -> vector<46x32xf32>
    %108 = arith.maximumf %104, %107 : vector<46x32xf32>
    %109 = arith.truncf %108 : vector<46x32xf32> to vector<46x32xbf16>
    %c0_110 = arith.constant 0 : index
    %c0_111 = arith.constant 0 : index
    %c0_112 = arith.constant 0 : index
    %110 = vector.load %arg12[%c0_110, %c0_111, %c0_112] : memref<4x8x46xbf16, #tpu.memory_space<vmem>>, vector<1x8x46xbf16>
    %111 = vector.shape_cast %110 : vector<1x8x46xbf16> to vector<8x46xbf16>
    %cst_113 = arith.constant dense<0.000000e+00> : vector<8x32xf32>
    %112 = tpu.matmul %111, %109, %cst_113 {dimension_numbers = #tpu.dot_dimension_numbers<[1], [0], [0], [1], [0, 0, 1, 1], [], []>} : vector<8x46xbf16>, vector<46x32xbf16>, vector<8x32xf32> -> vector<8x32xf32>
    %c1_114 = arith.constant 1 : index
    %c0_115 = arith.constant 0 : index
    %c0_116 = arith.constant 0 : index
    %113 = vector.load %arg12[%c1_114, %c0_115, %c0_116] : memref<4x8x46xbf16, #tpu.memory_space<vmem>>, vector<1x8x46xbf16>
    %114 = vector.shape_cast %113 : vector<1x8x46xbf16> to vector<8x46xbf16>
    %cst_117 = arith.constant dense<0.000000e+00> : vector<8x32xf32>
    %115 = tpu.matmul %114, %109, %cst_117 {dimension_numbers = #tpu.dot_dimension_numbers<[1], [0], [0], [1], [0, 0, 1, 1], [], []>} : vector<8x46xbf16>, vector<46x32xbf16>, vector<8x32xf32> -> vector<8x32xf32>
    %116 = arith.maximumf %112, %115 : vector<8x32xf32>
    %c2_118 = arith.constant 2 : index
    %c0_119 = arith.constant 0 : index
    %c0_120 = arith.constant 0 : index
    %117 = vector.load %arg12[%c2_118, %c0_119, %c0_120] : memref<4x8x46xbf16, #tpu.memory_space<vmem>>, vector<1x8x46xbf16>
    %118 = vector.shape_cast %117 : vector<1x8x46xbf16> to vector<8x46xbf16>
    %cst_121 = arith.constant dense<0.000000e+00> : vector<8x32xf32>
    %119 = tpu.matmul %118, %109, %cst_121 {dimension_numbers = #tpu.dot_dimension_numbers<[1], [0], [0], [1], [0, 0, 1, 1], [], []>} : vector<8x46xbf16>, vector<46x32xbf16>, vector<8x32xf32> -> vector<8x32xf32>
    %120 = arith.maximumf %116, %119 : vector<8x32xf32>
    %c3_122 = arith.constant 3 : index
    %c0_123 = arith.constant 0 : index
    %c0_124 = arith.constant 0 : index
    %121 = vector.load %arg12[%c3_122, %c0_123, %c0_124] : memref<4x8x46xbf16, #tpu.memory_space<vmem>>, vector<1x8x46xbf16>
    %122 = vector.shape_cast %121 : vector<1x8x46xbf16> to vector<8x46xbf16>
    %cst_125 = arith.constant dense<0.000000e+00> : vector<8x32xf32>
    %123 = tpu.matmul %122, %109, %cst_125 {dimension_numbers = #tpu.dot_dimension_numbers<[1], [0], [0], [1], [0, 0, 1, 1], [], []>} : vector<8x46xbf16>, vector<46x32xbf16>, vector<8x32xf32> -> vector<8x32xf32>
    %124 = arith.maximumf %120, %123 : vector<8x32xf32>
    %c0_126 = arith.constant 0 : index
    %c0_127 = arith.constant 0 : index
    %125 = vector.load %arg14[%c0_126, %c0_127] : memref<32x128xf32, #tpu.memory_space<vmem>>, vector<32x128xf32>
    %cst_128 = arith.constant dense<0.000000e+00> : vector<8x128xf32>
    %126 = tpu.matmul %124, %125, %cst_128 {dimension_numbers = #tpu.dot_dimension_numbers<[1], [0], [0], [1], [0, 0, 1, 1], [], []>} : vector<8x32xf32>, vector<32x128xf32>, vector<8x128xf32> -> vector<8x128xf32>
    %c0_129 = arith.constant 0 : index
    %c0_130 = arith.constant 0 : index
    %127 = vector.load %arg15[%c0_129, %c0_130] : memref<1x128xf32, #tpu.memory_space<vmem>>, vector<1x128xf32>
    %128 = vector.broadcast %127 : vector<1x128xf32> to vector<8x128xf32>
    %129 = arith.addf %126, %128 : vector<8x128xf32>
    %c0_131 = arith.constant 0 : index
    %c0_132 = arith.constant 0 : index
    %130 = vector.load %arg16[%c0_131, %c0_132] : memref<8x128xf32, #tpu.memory_space<vmem>>, vector<8x128xf32>
    tpu.vector_store %arg16[%c0_131, %c0_132], %129 {strides = array<i32>} : memref<8x128xf32, #tpu.memory_space<vmem>>, vector<8x128xf32>,
    return
  }
  func.func @transform_0(%arg0: i32) -> (i32, i32) {
    %c0_i32 = arith.constant 0 : i32
    %c0_i32_0 = arith.constant 0 : i32
    return %arg0, %c0_i32 : i32, i32
  }
  func.func @transform_1(%arg0: i32) -> (i32, i32, i32) {
    %c0_i32 = arith.constant 0 : i32
    %c0_i32_0 = arith.constant 0 : i32
    %c0_i32_1 = arith.constant 0 : i32
    %c0_i32_2 = arith.constant 0 : i32
    return %c0_i32, %c0_i32_0, %c0_i32_1 : i32, i32, i32
  }
  func.func @transform_2(%arg0: i32) -> (i32, i32, i32) {
    %c0_i32 = arith.constant 0 : i32
    %c0_i32_0 = arith.constant 0 : i32
    %c0_i32_1 = arith.constant 0 : i32
    %c0_i32_2 = arith.constant 0 : i32
    return %c0_i32, %c0_i32_0, %c0_i32_1 : i32, i32, i32
  }
  func.func @transform_3(%arg0: i32) -> (i32, i32, i32) {
    %c0_i32 = arith.constant 0 : i32
    %c0_i32_0 = arith.constant 0 : i32
    %c0_i32_1 = arith.constant 0 : i32
    %c0_i32_2 = arith.constant 0 : i32
    return %c0_i32, %c0_i32_0, %c0_i32_1 : i32, i32, i32
  }
  func.func @transform_4(%arg0: i32) -> (i32, i32) {
    %c0_i32 = arith.constant 0 : i32
    %c0_i32_0 = arith.constant 0 : i32
    %c0_i32_1 = arith.constant 0 : i32
    return %c0_i32, %c0_i32_0 : i32, i32
  }
  func.func @transform_5(%arg0: i32) -> (i32, i32, i32) {
    %c0_i32 = arith.constant 0 : i32
    %c0_i32_0 = arith.constant 0 : i32
    %c0_i32_1 = arith.constant 0 : i32
    %c0_i32_2 = arith.constant 0 : i32
    return %c0_i32, %c0_i32_0, %c0_i32_1 : i32, i32, i32
  }
  func.func @transform_6(%arg0: i32) -> (i32, i32, i32) {
    %c0_i32 = arith.constant 0 : i32
    %c0_i32_0 = arith.constant 0 : i32
    %c0_i32_1 = arith.constant 0 : i32
    %c0_i32_2 = arith.constant 0 : i32
    return %c0_i32, %c0_i32_0, %c0_i32_1 : i32, i32, i32
  }
  func.func @transform_7(%arg0: i32) -> (i32, i32, i32) {
    %c0_i32 = arith.constant 0 : i32
    %c0_i32_0 = arith.constant 0 : i32
    %c0_i32_1 = arith.constant 0 : i32
    %c0_i32_2 = arith.constant 0 : i32
    return %c0_i32, %c0_i32_0, %c0_i32_1 : i32, i32, i32
  }
  func.func @transform_8(%arg0: i32) -> (i32, i32) {
    %c0_i32 = arith.constant 0 : i32
    %c0_i32_0 = arith.constant 0 : i32
    %c0_i32_1 = arith.constant 0 : i32
    return %c0_i32, %c0_i32_0 : i32, i32
  }
  func.func @transform_9(%arg0: i32) -> (i32, i32, i32) {
    %c0_i32 = arith.constant 0 : i32
    %c0_i32_0 = arith.constant 0 : i32
    %c0_i32_1 = arith.constant 0 : i32
    %c0_i32_2 = arith.constant 0 : i32
    return %c0_i32, %c0_i32_0, %c0_i32_1 : i32, i32, i32
  }
  func.func @transform_10(%arg0: i32) -> (i32, i32, i32) {
    %c0_i32 = arith.constant 0 : i32
    %c0_i32_0 = arith.constant 0 : i32
    %c0_i32_1 = arith.constant 0 : i32
    %c0_i32_2 = arith.constant 0 : i32
    return %c0_i32, %c0_i32_0, %c0_i32_1 : i32, i32, i32
  }
  func.func @transform_11(%arg0: i32) -> (i32, i32, i32) {
    %c0_i32 = arith.constant 0 : i32
    %c0_i32_0 = arith.constant 0 : i32
    %c0_i32_1 = arith.constant 0 : i32
    %c0_i32_2 = arith.constant 0 : i32
    return %c0_i32, %c0_i32_0, %c0_i32_1 : i32, i32, i32
  }
  func.func @transform_12(%arg0: i32) -> (i32, i32) {
    %c0_i32 = arith.constant 0 : i32
    %c0_i32_0 = arith.constant 0 : i32
    %c0_i32_1 = arith.constant 0 : i32
    return %c0_i32, %c0_i32_0 : i32, i32
  }
  func.func @transform_13(%arg0: i32) -> (i32, i32) {
    %c0_i32 = arith.constant 0 : i32
    %c0_i32_0 = arith.constant 0 : i32
    %c0_i32_1 = arith.constant 0 : i32
    return %c0_i32, %c0_i32_0 : i32, i32
  }
  func.func @transform_14(%arg0: i32) -> (i32, i32) {
    %c0_i32 = arith.constant 0 : i32
    %c0_i32_0 = arith.constant 0 : i32
    %c0_i32_1 = arith.constant 0 : i32
    return %c0_i32, %c0_i32_0 : i32, i32
  }
  func.func @transform_15(%arg0: i32) -> (i32, i32) {
    %c0_i32 = arith.constant 0 : i32
    %c0_i32_0 = arith.constant 0 : i32
    return %arg0, %c0_i32 : i32, i32
  }
}

</mosaic_0001>

<llo_original>
// kernel: tile.18
$region0: #{tile.18}
  #allocation0 [shape = 's32[1]{0}', space=sflag, size = 0x4, scoped, tag = 'scoped memory for tile.18']
  %s0 = inlined_call_operand.vmem [shape: f32[8], index: 0, kind: input, shape index: {}]
  %s1 = inlined_call_operand.vmem [shape: f32[16,8], index: 1, kind: output, shape index: {}]
  // Predicated region
  $region2: #{tile.18} parent=0 // pred_check
    _
  $region3: #{tile.18} parent=0 // pred_check_branch
    %3 = sbr.rel (0) target = $region5
  $region4: #{tile.18} parent=0 // pred_region
    _
  $region5: #{tile.18} parent=0 // pred_fallthru
    _
  %v4 = vld [vmem:[%s0] ss:$0 sm:$0xff]
  %5 = vst [vmem:[%s1] sm:$0xff] %v4
  %s6 = scalar_lea.vmem %s1, 8
  %7 = vst [vmem:[%s6] sm:$0xff] %v4

// kernel: tile.19
$region0: #{tile.19}
  %s0 = inlined_call_operand.vmem [shape: f32[16,8], index: 0, kind: input, shape index: {}]
  %s1 = inlined_call_operand.vmem [shape: f32[1,128], index: 1, kind: output, shape index: {}]
  $region1: #{tile.19} parent=0
    #allocation0 [shape = 'u8[4096]{0}', space=vmem, size = 0x1000, scoped, tag = 'scoped mem for output reshape']
    %v2 = vld [vmem:[%s0] sm:$0x1]
    %vm3 = vcmask 64512
    %4 = vst.msk [vmem:[#allocation0] sm:$0x1] %vm3, %v2
    %s5 = scalar_lea.vmem %s0, 15
    %v6 = vld [vmem:[%s5] sm:$0x1]
    %7 = vrot.lane.b32.xlu0 %v6, 120
    %v8 = vpop.permute.xlu0 %7
    %vm9 = vcmask 1048512
    %10 = vst.msk [vmem:[#allocation0] sm:$0x1] %vm9, %v8
    %s11 = scalar_lea.vmem %s0, 14
    %v12 = vld [vmem:[%s11] sm:$0x1]
    %13 = vrot.lane.b32.xlu0 %v12, 112
    %v14 = vpop.permute.xlu0 %13
    %vm15 = vcmask 982912
    %16 = vst.msk [vmem:[#allocation0] sm:$0x1] %vm15, %v14
    %s17 = scalar_lea.vmem %s0, 13
    %v18 = vld [vmem:[%s17] sm:$0x1]
    %19 = vrot.lane.b32.xlu0 %v18, 104
    %v20 = vpop.permute.xlu0 %19
    %vm21 = vcmask 917312
    %22 = vst.msk [vmem:[#allocation0] sm:$0x1] %vm21, %v20
    %s23 = scalar_lea.vmem %s0, 12
    %v24 = vld [vmem:[%s23] sm:$0x1]
    %25 = vrot.lane.b32.xlu0 %v24, 96
    %v26 = vpop.permute.xlu0 %25
    %vm27 = vcmask 851712
    %28 = vst.msk [vmem:[#allocation0] sm:$0x1] %vm27, %v26
    %s29 = scalar_lea.vmem %s0, 11
    %v30 = vld [vmem:[%s29] sm:$0x1]
    %31 = vrot.lane.b32.xlu0 %v30, 88
    %v32 = vpop.permute.xlu0 %31
    %vm33 = vcmask 786112
    %34 = vst.msk [vmem:[#allocation0] sm:$0x1] %vm33, %v32
    %s35 = scalar_lea.vmem %s0, 10
    %v36 = vld [vmem:[%s35] sm:$0x1]
    %37 = vrot.lane.b32.xlu0 %v36, 80
    %v38 = vpop.permute.xlu0 %37
    %vm39 = vcmask 720512
    %40 = vst.msk [vmem:[#allocation0] sm:$0x1] %vm39, %v38
    %s41 = scalar_lea.vmem %s0, 9
    %v42 = vld [vmem:[%s41] sm:$0x1]
    %43 = vrot.lane.b32.xlu0 %v42, 72
    %v44 = vpop.permute.xlu0 %43
    %vm45 = vcmask 654912
    %46 = vst.msk [vmem:[#allocation0] sm:$0x1] %vm45, %v44
    %s47 = scalar_lea.vmem %s0, 8
    %v48 = vld [vmem:[%s47] sm:$0x1]
    %49 = vrot.lane.b32.xlu0 %v48, 64
    %v50 = vpop.permute.xlu0 %49
    %vm51 = vcmask 589312
    %52 = vst.msk [vmem:[#allocation0] sm:$0x1] %vm51, %v50
    %s53 = scalar_lea.vmem %s0, 7
    %v54 = vld [vmem:[%s53] sm:$0x1]
    %55 = vrot.lane.b32.xlu0 %v54, 56
    %v56 = vpop.permute.xlu0 %55
    %vm57 = vcmask 523712
    %58 = vst.msk [vmem:[#allocation0] sm:$0x1] %vm57, %v56
    %s59 = scalar_lea.vmem %s0, 6
    %v60 = vld [vmem:[%s59] sm:$0x1]
    %61 = vrot.lane.b32.xlu0 %v60, 48
    %v62 = vpop.permute.xlu0 %61
    %vm63 = vcmask 458112
    %64 = vst.msk [vmem:[#allocation0] sm:$0x1] %vm63, %v62
    %s65 = scalar_lea.vmem %s0, 5
    %v66 = vld [vmem:[%s65] sm:$0x1]
    %67 = vrot.lane.b32.xlu0 %v66, 40
    %v68 = vpop.permute.xlu0 %67
    %vm69 = vcmask 392512
    %70 = vst.msk [vmem:[#allocation0] sm:$0x1] %vm69, %v68
    %s71 = scalar_lea.vmem %s0, 4
    %v72 = vld [vmem:[%s71] sm:$0x1]
    %73 = vrot.lane.b32.xlu0 %v72, 32
    %v74 = vpop.permute.xlu0 %73
    %vm75 = vcmask 326912
    %76 = vst.msk [vmem:[#allocation0] sm:$0x1] %vm75, %v74
    %s77 = scalar_lea.vmem %s0, 3
    %v78 = vld [vmem:[%s77] sm:$0x1]
    %79 = vrot.lane.b32.xlu0 %v78, 24
    %v80 = vpop.permute.xlu0 %79
    %vm81 = vcmask 261312
    %82 = vst.msk [vmem:[#allocation0] sm:$0x1] %vm81, %v80
    %s83 = scalar_lea.vmem %s0, 2
    %v84 = vld [vmem:[%s83] sm:$0x1]
    %85 = vrot.lane.b32.xlu0 %v84, 16
    %v86 = vpop.permute.xlu0 %85
    %vm87 = vcmask 195712
    %88 = vst.msk [vmem:[#allocation0] sm:$0x1] %vm87, %v86
    %s89 = scalar_lea.vmem %s0, 1
    %v90 = vld [vmem:[%s89] sm:$0x1]
    %91 = vrot.lane.b32.xlu0 %v90, 8
    %v92 = vpop.permute.xlu0 %91
    %vm93 = vcmask 130112
    %94 = vst.msk [vmem:[#allocation0] sm:$0x1] %vm93, %v92
    %s96 = sshllo.u32 0, 1
    %v98 = vld [vmem:[#allocation0] sm:%s96]
    %s99 = sshllo.u32 0, 1
    %100 = vst [vmem:[%s1] sm:%s99] %v98

// kernel: tile.23
$region0: #{tile.23}
  #allocation0 [shape = 's32[1]{0}', space=sflag, size = 0x4, scoped, tag = 'scoped memory for tile.23']
  %s0 = inlined_call_operand.vmem [shape: f32[16], index: 0, kind: input, shape index: {}]
  %s1 = inlined_call_operand.vmem [shape: f32[8,16], index: 1, kind: output, shape index: {}]
  // Predicated region
  $region2: #{tile.23} parent=0 // pred_check
    _
  $region3: #{tile.23} parent=0 // pred_check_branch
    %3 = sbr.rel (0) target = $region5
  $region4: #{tile.23} parent=0 // pred_region
    _
  $region5: #{tile.23} parent=0 // pred_fallthru
    _
  %v4 = vld [vmem:[%s0] ss:$0 sm:$0xff]
  %5 = vst [vmem:[%s1] sm:$0xff] %v4

// kernel: tile.24
$region0: #{tile.24}
  %s0 = inlined_call_operand.vmem [shape: f32[8,16], index: 0, kind: input, shape index: {}]
  %s1 = inlined_call_operand.vmem [shape: f32[1,128], index: 1, kind: output, shape index: {}]
  $region1: #{tile.24} parent=0
    #allocation0 [shape = 'u8[4096]{0}', space=vmem, size = 0x1000, scoped, tag = 'scoped mem for output reshape']
    %v2 = vld [vmem:[%s0] sm:$0x1]
    %vm3 = vcmask 130048
    %4 = vst.msk [vmem:[#allocation0] sm:$0x1] %vm3, %v2
    %s5 = scalar_lea.vmem %s0, 7
    %v6 = vld [vmem:[%s5] sm:$0x1]
    %7 = vrot.lane.b32.xlu0 %v6, 112
    %v8 = vpop.permute.xlu0 %7
    %vm9 = vcmask 1048448
    %10 = vst.msk [vmem:[#allocation0] sm:$0x1] %vm9, %v8
    %s11 = scalar_lea.vmem %s0, 6
    %v12 = vld [vmem:[%s11] sm:$0x1]
    %13 = vrot.lane.b32.xlu0 %v12, 96
    %v14 = vpop.permute.xlu0 %13
    %vm15 = vcmask 917248
    %16 = vst.msk [vmem:[#allocation0] sm:$0x1] %vm15, %v14
    %s17 = scalar_lea.vmem %s0, 5
    %v18 = vld [vmem:[%s17] sm:$0x1]
    %19 = vrot.lane.b32.xlu0 %v18, 80
    %v20 = vpop.permute.xlu0 %19
    %vm21 = vcmask 786048
    %22 = vst.msk [vmem:[#allocation0] sm:$0x1] %vm21, %v20
    %s23 = scalar_lea.vmem %s0, 4
    %v24 = vld [vmem:[%s23] sm:$0x1]
    %25 = vrot.lane.b32.xlu0 %v24, 64
    %v26 = vpop.permute.xlu0 %25
    %vm27 = vcmask 654848
    %28 = vst.msk [vmem:[#allocation0] sm:$0x1] %vm27, %v26
    %s29 = scalar_lea.vmem %s0, 3
    %v30 = vld [vmem:[%s29] sm:$0x1]
    %31 = vrot.lane.b32.xlu0 %v30, 48
    %v32 = vpop.permute.xlu0 %31
    %vm33 = vcmask 523648
    %34 = vst.msk [vmem:[#allocation0] sm:$0x1] %vm33, %v32
    %s35 = scalar_lea.vmem %s0, 2
    %v36 = vld [vmem:[%s35] sm:$0x1]
    %37 = vrot.lane.b32.xlu0 %v36, 32
    %v38 = vpop.permute.xlu0 %37
    %vm39 = vcmask 392448
    %40 = vst.msk [vmem:[#allocation0] sm:$0x1] %vm39, %v38
    %s41 = scalar_lea.vmem %s0, 1
    %v42 = vld [vmem:[%s41] sm:$0x1]
    %43 = vrot.lane.b32.xlu0 %v42, 16
    %v44 = vpop.permute.xlu0 %43
    %vm45 = vcmask 261248
    %46 = vst.msk [vmem:[#allocation0] sm:$0x1] %vm45, %v44
    %s48 = sshllo.u32 0, 1
    %v50 = vld [vmem:[#allocation0] sm:%s48]
    %s51 = sshllo.u32 0, 1
    %52 = vst [vmem:[%s1] sm:%s51] %v50

// kernel: tile.28
$region0: #{tile.28}
  #allocation0 [shape = 's32[1]{0}', space=sflag, size = 0x4, scoped, tag = 'scoped memory for tile.28']
  %s0 = inlined_call_operand.vmem [shape: f32[32], index: 0, kind: input, shape index: {}]
  %s1 = inlined_call_operand.vmem [shape: f32[4,32], index: 1, kind: output, shape index: {}]
  // Predicated region
  $region2: #{tile.28} parent=0 // pred_check
    _
  $region3: #{tile.28} parent=0 // pred_check_branch
    %3 = sbr.rel (0) target = $region5
  $region4: #{tile.28} parent=0 // pred_region
    _
  $region5: #{tile.28} parent=0 // pred_fallthru
    _
  %v4 = vld [vmem:[%s0] ss:$0 sm:$0xff]
  %5 = vst [vmem:[%s1] sm:$0xf] %v4

// kernel: tile.29
$region0: #{tile.29}
  %s0 = inlined_call_operand.vmem [shape: f32[4,32], index: 0, kind: input, shape index: {}]
  %s1 = inlined_call_operand.vmem [shape: f32[1,128], index: 1, kind: output, shape index: {}]
  $region1: #{tile.29} parent=0
    #allocation0 [shape = 'u8[4096]{0}', space=vmem, size = 0x1000, scoped, tag = 'scoped mem for output reshape']
    #allocation1 [shape = 'u8[4096]{0}', space=vmem, size = 0x1000, scoped, tag = 'scoped mem for input reshape']
    %s3 = sshllo.u32 0, 4
    %v4 = vld [vmem:[%s0] sm:%s3]
    %5 = vst [vmem:[#allocation1] sm:%s3] %v4
    %v6 = vld [vmem:[#allocation1] sm:$0x1]
    %vm7 = vcmask 261120
    %8 = vst.msk [vmem:[#allocation0] sm:$0x1] %vm7, %v6
    %s9 = scalar_lea.vmem [#allocation1], 3
    %v10 = vld [vmem:[%s9] sm:$0x1]
    %11 = vrot.lane.b32.xlu0 %v10, 96
    %v12 = vpop.permute.xlu0 %11
    %vm13 = vcmask 1048320
    %14 = vst.msk [vmem:[#allocation0] sm:$0x1] %vm13, %v12
    %s15 = scalar_lea.vmem [#allocation1], 2
    %v16 = vld [vmem:[%s15] sm:$0x1]
    %17 = vrot.lane.b32.xlu0 %v16, 64
    %v18 = vpop.permute.xlu0 %17
    %vm19 = vcmask 785920
    %20 = vst.msk [vmem:[#allocation0] sm:$0x1] %vm19, %v18
    %s21 = scalar_lea.vmem [#allocation1], 1
    %v22 = vld [vmem:[%s21] sm:$0x1]
    %23 = vrot.lane.b32.xlu0 %v22, 32
    %v24 = vpop.permute.xlu0 %23
    %vm25 = vcmask 523520
    %26 = vst.msk [vmem:[#allocation0] sm:$0x1] %vm25, %v24
    %s28 = sshllo.u32 0, 1
    %v30 = vld [vmem:[#allocation0] sm:%s28]
    %s31 = sshllo.u32 0, 1
    %32 = vst [vmem:[%s1] sm:%s31] %v30

// kernel: cifar_forward.1
$region0: #{cifar_forward.1}
  #allocation0 [shape = 'u32[]', space=smem, size = 0x4, offset = 0x4, fixed_abs, tag = 'smem constant byte address 0x4 - core index']
  #allocation1 [shape = 'u32[144,128]{1,0:T(1,128)}', space=vmem, size = 0x12000, scoped, tag = 'internal scratch']
  #allocation2 [shape = 'bf16[80,80]{1,0:T(16,128)(2,1)}', space=vmem, size = 0x5000, scoped, tag = 'scratch operand']
  #allocation3 [shape = 'bf16[48,96]{1,0:T(16,128)(2,1)}', space=vmem, size = 0x3000, scoped, tag = 'scratch operand']
  %s0 = inlined_call_operand.vmem [shape: bf16[144,72], index: 0, kind: input, shape index: {}]
  %s1 = inlined_call_operand.vmem [shape: bf16[3,72,128], index: 1, kind: input, shape index: {}]
  %s2 = inlined_call_operand.vmem [shape: bf16[2,128,80], index: 2, kind: input, shape index: {}]
  %s3 = inlined_call_operand.vmem [shape: bf16[2,80,142], index: 3, kind: input, shape index: {}]
  %s4 = inlined_call_operand.vmem [shape: f32[1,128], index: 4, kind: input, shape index: {}]
  %s5 = inlined_call_operand.vmem [shape: bf16[3,80,128], index: 5, kind: input, shape index: {}]
  %s6 = inlined_call_operand.vmem [shape: bf16[2,128,96], index: 6, kind: input, shape index: {}]
  %s7 = inlined_call_operand.vmem [shape: bf16[2,48,78], index: 7, kind: input, shape index: {}]
  %s8 = inlined_call_operand.vmem [shape: f32[1,128], index: 8, kind: input, shape index: {}]
  %s9 = inlined_call_operand.vmem [shape: bf16[3,96,128], index: 9, kind: input, shape index: {}]
  %s10 = inlined_call_operand.vmem [shape: bf16[4,128,32], index: 10, kind: input, shape index: {}]
  %s11 = inlined_call_operand.vmem [shape: bf16[4,8,46], index: 11, kind: input, shape index: {}]
  %s12 = inlined_call_operand.vmem [shape: f32[1,128], index: 12, kind: input, shape index: {}]
  %s13 = inlined_call_operand.vmem [shape: f32[32,128], index: 13, kind: input, shape index: {}]
  %s14 = inlined_call_operand.vmem [shape: f32[1,128], index: 14, kind: input, shape index: {}]
  %s15 = inlined_call_operand.vmem [shape: f32[8,128], index: 15, kind: output, shape index: {}]
  %s16 = sld [smem:[#allocation0]]
  $region70: #{cifar_forward.1} parent=0
    _
  %s18 = ssub.s32 1, %s16
  %s19 = scalar_select 0, %s18, %s16
  // Predicated region
  $region2: #{cifar_forward.1} parent=0 // pred_check
    _
  $region3: #{cifar_forward.1} parent=0 // pred_check_branch
    %21 = sbr.rel (0) target = $region5
  $region4: #{cifar_forward.1} parent=0 // pred_region
    _
  $region5: #{cifar_forward.1} parent=0 // pred_fallthru
    _
  // Predicated region
  $region6: #{cifar_forward.1} parent=0 // pred_check
    _
  $region7: #{cifar_forward.1} parent=0 // pred_check_branch
    %23 = sbr.rel (0) target = $region9
  $region8: #{cifar_forward.1} parent=0 // pred_region
    _
  $region9: #{cifar_forward.1} parent=0 // pred_fallthru
    _
  // Predicated region
  $region10: #{cifar_forward.1} parent=0 // pred_check
    _
  $region11: #{cifar_forward.1} parent=0 // pred_check_branch
    %25 = sbr.rel (0) target = $region13
  $region12: #{cifar_forward.1} parent=0 // pred_region
    _
  $region13: #{cifar_forward.1} parent=0 // pred_fallthru
    _
  // Predicated region
  $region14: #{cifar_forward.1} parent=0 // pred_check
    _
  $region15: #{cifar_forward.1} parent=0 // pred_check_branch
    %27 = sbr.rel (0) target = $region17
  $region16: #{cifar_forward.1} parent=0 // pred_region
    _
  $region17: #{cifar_forward.1} parent=0 // pred_fallthru
    _
  // Predicated region
  $region18: #{cifar_forward.1} parent=0 // pred_check
    _
  $region19: #{cifar_forward.1} parent=0 // pred_check_branch
    %29 = sbr.rel (0) target = $region21
  $region20: #{cifar_forward.1} parent=0 // pred_region
    _
  $region21: #{cifar_forward.1} parent=0 // pred_fallthru
    _
  // Predicated region
  $region22: #{cifar_forward.1} parent=0 // pred_check
    _
  $region23: #{cifar_forward.1} parent=0 // pred_check_branch
    %31 = sbr.rel (0) target = $region25
  $region24: #{cifar_forward.1} parent=0 // pred_region
    _
  $region25: #{cifar_forward.1} parent=0 // pred_fallthru
    _
  // Predicated region
  $region26: #{cifar_forward.1} parent=0 // pred_check
    _
  $region27: #{cifar_forward.1} parent=0 // pred_check_branch
    %33 = sbr.rel (0) target = $region29
  $region28: #{cifar_forward.1} parent=0 // pred_region
    _
  $region29: #{cifar_forward.1} parent=0 // pred_fallthru
    _
  // Predicated region
  $region30: #{cifar_forward.1} parent=0 // pred_check
    _
  $region31: #{cifar_forward.1} parent=0 // pred_check_branch
    %35 = sbr.rel (0) target = $region33
  $region32: #{cifar_forward.1} parent=0 // pred_region
    _
  $region33: #{cifar_forward.1} parent=0 // pred_fallthru
    _
  // Predicated region
  $region34: #{cifar_forward.1} parent=0 // pred_check
    _
  $region35: #{cifar_forward.1} parent=0 // pred_check_branch
    %37 = sbr.rel (0) target = $region37
  $region36: #{cifar_forward.1} parent=0 // pred_region
    _
  $region37: #{cifar_forward.1} parent=0 // pred_fallthru
    _
  // Predicated region
  $region38: #{cifar_forward.1} parent=0 // pred_check
    _
  $region39: #{cifar_forward.1} parent=0 // pred_check_branch
    %39 = sbr.rel (0) target = $region41
  $region40: #{cifar_forward.1} parent=0 // pred_region
    _
  $region41: #{cifar_forward.1} parent=0 // pred_fallthru
    _
  // Predicated region
  $region42: #{cifar_forward.1} parent=0 // pred_check
    _
  $region43: #{cifar_forward.1} parent=0 // pred_check_branch
    %41 = sbr.rel (0) target = $region45
  $region44: #{cifar_forward.1} parent=0 // pred_region
    _
  $region45: #{cifar_forward.1} parent=0 // pred_fallthru
    _
  // Predicated region
  $region46: #{cifar_forward.1} parent=0 // pred_check
    _
  $region47: #{cifar_forward.1} parent=0 // pred_check_branch
    %43 = sbr.rel (0) target = $region49
  $region48: #{cifar_forward.1} parent=0 // pred_region
    _
  $region49: #{cifar_forward.1} parent=0 // pred_fallthru
    _
  // Predicated region
  $region50: #{cifar_forward.1} parent=0 // pred_check
    _
  $region51: #{cifar_forward.1} parent=0 // pred_check_branch
    %45 = sbr.rel (0) target = $region53
  $region52: #{cifar_forward.1} parent=0 // pred_region
    _
  $region53: #{cifar_forward.1} parent=0 // pred_fallthru
    _
  // Predicated region
  $region54: #{cifar_forward.1} parent=0 // pred_check
    _
  $region55: #{cifar_forward.1} parent=0 // pred_check_branch
    %47 = sbr.rel (0) target = $region57
  $region56: #{cifar_forward.1} parent=0 // pred_region
    _
  $region57: #{cifar_forward.1} parent=0 // pred_fallthru
    _
  // Predicated region
  $region58: #{cifar_forward.1} parent=0 // pred_check
    _
  $region59: #{cifar_forward.1} parent=0 // pred_check_branch
    %49 = sbr.rel (0) target = $region61
  $region60: #{cifar_forward.1} parent=0 // pred_region
    _
  $region61: #{cifar_forward.1} parent=0 // pred_fallthru
    _
  %v51 = vld [vmem:[%s0] sm:$0xf]
  %v52 = vld [vmem:[%s0 + $0x4] sm:$0xf]
  %v53 = vld [vmem:[%s0 + $0x8] sm:$0xf]
  %v54 = vld [vmem:[%s0 + $0xc] sm:$0xf]
  %v55 = vld [vmem:[%s0 + $0x10] sm:$0xf]
  %v56 = vld [vmem:[%s0 + $0x14] sm:$0xf]
  %v57 = vld [vmem:[%s0 + $0x18] sm:$0xf]
  %v58 = vld [vmem:[%s0 + $0x1c] sm:$0xf]
  %v59 = vld [vmem:[%s0 + $0x20] sm:$0xf]
  %v60 = vld [vmem:[%s0 + $0x24] sm:$0xf]
  %v61 = vld [vmem:[%s0 + $0x28] sm:$0xf]
  %v62 = vld [vmem:[%s0 + $0x2c] sm:$0xf]
  %v63 = vld [vmem:[%s0 + $0x30] sm:$0xf]
  %v64 = vld [vmem:[%s0 + $0x34] sm:$0xf]
  %v65 = vld [vmem:[%s0 + $0x38] sm:$0xf]
  %v66 = vld [vmem:[%s0 + $0x3c] sm:$0xf]
  %v67 = vld [vmem:[%s0 + $0x40] sm:$0xf]
  %v68 = vld [vmem:[%s0 + $0x44] sm:$0x7]
  %v69 = vld [vmem:[%s1] sm:$0xf]
  %v70 = vld [vmem:[%s1 + $0x4] sm:$0xf]
  %v71 = vld [vmem:[%s1 + $0x8] sm:$0xf]
  %v72 = vld [vmem:[%s1 + $0xc] sm:$0xf]
  %v73 = vld [vmem:[%s1 + $0x10] sm:$0xf]
  %v74 = vld [vmem:[%s1 + $0x14] sm:$0xf]
  %v75 = vld [vmem:[%s1 + $0x18] sm:$0xf]
  %v76 = vld [vmem:[%s1 + $0x1c] sm:$0xf]
  %v77 = vld [vmem:[%s1 + $0x20] sm:$0xf]
  %v78 = vld [vmem:[%s0 + $0x44] sm:$0xf]
  %s79 = scalar_lea.vmem %s1, 36
  %v80 = vld [vmem:[%s79] sm:$0xf]
  %v81 = vld [vmem:[%s79 + $0x4] sm:$0xf]
  %v82 = vld [vmem:[%s79 + $0x8] sm:$0xf]
  %v83 = vld [vmem:[%s79 + $0xc] sm:$0xf]
  %v84 = vld [vmem:[%s79 + $0x10] sm:$0xf]
  %v85 = vld [vmem:[%s79 + $0x14] sm:$0xf]
  %v86 = vld [vmem:[%s79 + $0x18] sm:$0xf]
  %v87 = vld [vmem:[%s79 + $0x1c] sm:$0xf]
  %v88 = vld [vmem:[%s79 + $0x20] sm:$0xf]
  %v107 = vunpack.c.l.b16 %v51
  %v108 = vunpack.c.l.b16 %v52
  %v109 = vunpack.c.l.b16 %v53
  %v110 = vunpack.c.l.b16 %v54
  %v111 = vunpack.c.l.b16 %v55
  %v112 = vunpack.c.l.b16 %v56
  %v113 = vunpack.c.l.b16 %v57
  %v114 = vunpack.c.l.b16 %v58
  %v115 = vunpack.c.l.b16 %v59
  %v116 = vunpack.c.l.b16 %v60
  %v117 = vunpack.c.l.b16 %v61
  %v118 = vunpack.c.l.b16 %v62
  %v119 = vunpack.c.l.b16 %v63
  %v120 = vunpack.c.l.b16 %v64
  %v121 = vunpack.c.l.b16 %v65
  %v122 = vunpack.c.l.b16 %v66
  %v123 = vunpack.c.l.b16 %v67
  %v124 = vunpack.c.l.b16 %v78
  %v125 = vpack.c.b16 %v108, %v107
  %v126 = vpack.c.b16 %v110, %v109
  %v127 = vpack.c.b16 %v112, %v111
  %v128 = vpack.c.b16 %v114, %v113
  %v129 = vpack.c.b16 %v116, %v115
  %v130 = vpack.c.b16 %v118, %v117
  %v131 = vpack.c.b16 %v120, %v119
  %v132 = vpack.c.b16 %v122, %v121
  %v133 = vpack.c.b16 %v124, %v123
  %vm134 = vsmask.f32 7424
  %v136 = vshrl.u32 %v125, 16
  %v138 = vshll.u32 %v125, 16
  %v140 = vrot.slane %v138, 1
  %v141 = vor.u32 %v136, %v140
  %v143 = vshll.u32 %v126, 16
  %v145 = vrot.slane %v143, 1
  %v146 = vsel %vm134, %v141, %v145
  %v147 = vshrl.u32 %v126, 16
  %v149 = vor.u32 %v147, %v145
  %v151 = vshll.u32 %v127, 16
  %v153 = vrot.slane %v151, 1
  %v154 = vsel %vm134, %v149, %v153
  %v155 = vshrl.u32 %v127, 16
  %v157 = vor.u32 %v155, %v153
  %v159 = vshll.u32 %v128, 16
  %v161 = vrot.slane %v159, 1
  %v162 = vsel %vm134, %v157, %v161
  %v163 = vshrl.u32 %v128, 16
  %v165 = vor.u32 %v163, %v161
  %v167 = vshll.u32 %v129, 16
  %v169 = vrot.slane %v167, 1
  %v170 = vsel %vm134, %v165, %v169
  %v171 = vshrl.u32 %v129, 16
  %v173 = vor.u32 %v171, %v169
  %v175 = vshll.u32 %v130, 16
  %v177 = vrot.slane %v175, 1
  %v178 = vsel %vm134, %v173, %v177
  %v179 = vshrl.u32 %v130, 16
  %v181 = vor.u32 %v179, %v177
  %v183 = vshll.u32 %v131, 16
  %v185 = vrot.slane %v183, 1
  %v186 = vsel %vm134, %v181, %v185
  %v187 = vshrl.u32 %v131, 16
  %v189 = vor.u32 %v187, %v185
  %v191 = vshll.u32 %v132, 16
  %v193 = vrot.slane %v191, 1
  %v194 = vsel %vm134, %v189, %v193
  %v195 = vshrl.u32 %v132, 16
  %v197 = vor.u32 %v195, %v193
  %v199 = vshll.u32 %v133, 16
  %v201 = vrot.slane %v199, 1
  %v202 = vsel %vm134, %v197, %v201
  %v203 = vshrl.u32 %v133, 16
  %v205 = vor.u32 %v203, %v201
  %v215 = vunpack.c.l.b16 %v80
  %v216 = vunpack.c.l.b16 %v81
  %v217 = vunpack.c.l.b16 %v82
  %v218 = vunpack.c.l.b16 %v83
  %v219 = vunpack.c.l.b16 %v84
  %v220 = vunpack.c.l.b16 %v85
  %v221 = vunpack.c.l.b16 %v86
  %v222 = vunpack.c.l.b16 %v87
  %v223 = vunpack.c.l.b16 %v88
  %v224 = vpack.c.b16 %v216, %v215
  %v225 = vpack.c.b16 %v218, %v217
  %v226 = vpack.c.b16 %v220, %v219
  %v227 = vpack.c.b16 %v222, %v221
  %v228 = vpack.c.b16 %v223, %v223
  %vm233 = vcmask 588800
  %v235 = vsel %vm233, %v146, 0
  %v238 = vsel %vm233, %v154, 0
  %v241 = vsel %vm233, %v162, 0
  %v244 = vsel %vm233, %v170, 0
  %v247 = vsel %vm233, %v178, 0
  %v250 = vsel %vm233, %v186, 0
  %v253 = vsel %vm233, %v194, 0
  %v256 = vsel %vm233, %v202, 0
  %v259 = vsel %vm233, %v205, 0
  %vm261 = vcmask 1043456
  %v263 = vsel %vm261, %v228, 0
  %265 = vmatprep.subr.bf16.mxu0 0
  %266 = vmatpush1.bf16.msra.mxu0 %v224
  %267 = vmatprep.subr.bf16.mxu0 0
  %268 = vmatpush1.bf16.msra.mxu0 %v225
  %269 = vmatprep.subr.bf16.mxu0 0
  %270 = vmatpush1.bf16.msra.mxu0 %v226
  %271 = vmatprep.subr.bf16.mxu0 0
  %272 = vmatpush1.bf16.msra.mxu0 %v227
  %273 = vmatprep.subr.bf16.mxu0 0
  %274 = vmatpush1.bf16.msra.mxu0 %v263
  %275 = vmatprep.subr.bf16.mxu0 0
  %276 = vmatpush1.bf16.msra.mxu0 0
  %277 = vmatprep.subr.bf16.mxu0 0
  %278 = vmatpush1.bf16.msra.mxu0 0
  %279 = vmatprep.subr.bf16.mxu0 0
  %280 = vmatpush1.bf16.msra.mxu0 0
  %281 = vmatprep.subr.bf16.mxu0 0
  %282 = vmatpush1.bf16.msra.mxu0 0
  %283 = vmatprep.subr.bf16.mxu0 0
  %284 = vmatpush1.bf16.msra.mxu0 0
  %285 = vmatprep.subr.bf16.mxu0 0
  %286 = vmatpush1.bf16.msra.mxu0 0
  %287 = vmatprep.subr.bf16.mxu0 0
  %288 = vmatpush1.bf16.msra.mxu0 0
  %289 = vmatprep.subr.bf16.mxu0 0
  %290 = vmatpush1.bf16.msra.mxu0 0
  %291 = vmatprep.subr.bf16.mxu0 0
  %292 = vmatpush1.bf16.msra.mxu0 0
  %293 = vmatprep.subr.bf16.mxu0 0
  %294 = vmatpush1.bf16.msra.mxu0 0
  %295 = vmatprep.subr.bf16.mxu0 0
  %296 = vmatpush1.bf16.msra.mxu0 0
  %297 = vmatprep.mubr.bf16.mxu0 0
  %298 = vmatmul.mubr.bf16.gmra.mrb[0].mxu0 %v235
  %v299 = vpop.f32.mrb[0].mxu0
  %v300 = vadd.f32 0.0, %v299
  %v301 = vpop.f32.mrb[0].mxu0
  %v302 = vpop.f32.mrb[0].mxu0
  %v303 = vadd.f32 0.0, %v302
  %v304 = vpop.f32.mrb[0].mxu0
  %305 = vmatprep.mubr.bf16.mxu0 0
  %306 = vmatmul.mubr.bf16.gmra.mrb[0].mxu0 %v238
  %v307 = vpop.f32.mrb[0].mxu0
  %v308 = vadd.f32 0.0, %v307
  %v309 = vpop.f32.mrb[0].mxu0
  %v310 = vpop.f32.mrb[0].mxu0
  %v311 = vadd.f32 0.0, %v310
  %v312 = vpop.f32.mrb[0].mxu0
  %313 = vmatprep.mubr.bf16.mxu0 0
  %314 = vmatmul.mubr.bf16.gmra.mrb[0].mxu0 %v241
  %v315 = vpop.f32.mrb[0].mxu0
  %v316 = vadd.f32 0.0, %v315
  %v317 = vpop.f32.mrb[0].mxu0
  %v318 = vpop.f32.mrb[0].mxu0
  %v319 = vadd.f32 0.0, %v318
  %v320 = vpop.f32.mrb[0].mxu0
  %321 = vmatprep.mubr.bf16.mxu0 0
  %322 = vmatmul.mubr.bf16.gmra.mrb[0].mxu0 %v244
  %v323 = vpop.f32.mrb[0].mxu0
  %v324 = vadd.f32 0.0, %v323
  %v325 = vpop.f32.mrb[0].mxu0
  %v326 = vpop.f32.mrb[0].mxu0
  %v327 = vadd.f32 0.0, %v326
  %v328 = vpop.f32.mrb[0].mxu0
  %329 = vmatprep.mubr.bf16.mxu0 0
  %330 = vmatmul.mubr.bf16.gmra.mrb[0].mxu0 %v247
  %v331 = vpop.f32.mrb[0].mxu0
  %v332 = vadd.f32 0.0, %v331
  %v333 = vpop.f32.mrb[0].mxu0
  %v334 = vpop.f32.mrb[0].mxu0
  %v335 = vadd.f32 0.0, %v334
  %v336 = vpop.f32.mrb[0].mxu0
  %337 = vmatprep.mubr.bf16.mxu0 0
  %338 = vmatmul.mubr.bf16.gmra.mrb[0].mxu0 %v250
  %v339 = vpop.f32.mrb[0].mxu0
  %v340 = vadd.f32 0.0, %v339
  %v341 = vpop.f32.mrb[0].mxu0
  %v342 = vpop.f32.mrb[0].mxu0
  %v343 = vadd.f32 0.0, %v342
  %v344 = vpop.f32.mrb[0].mxu0
  %345 = vmatprep.mubr.bf16.mxu0 0
  %346 = vmatmul.mubr.bf16.gmra.mrb[0].mxu0 %v253
  %v347 = vpop.f32.mrb[0].mxu0
  %v348 = vadd.f32 0.0, %v347
  %v349 = vpop.f32.mrb[0].mxu0
  %v350 = vpop.f32.mrb[0].mxu0
  %v351 = vadd.f32 0.0, %v350
  %v352 = vpop.f32.mrb[0].mxu0
  %353 = vmatprep.mubr.bf16.mxu0 0
  %354 = vmatmul.mubr.bf16.gmra.mrb[0].mxu0 %v256
  %v355 = vpop.f32.mrb[0].mxu0
  %v356 = vadd.f32 0.0, %v355
  %v357 = vpop.f32.mrb[0].mxu0
  %v358 = vpop.f32.mrb[0].mxu0
  %v359 = vadd.f32 0.0, %v358
  %v360 = vpop.f32.mrb[0].mxu0
  %361 = vmatprep.mubr.bf16.mxu0 0
  %362 = vmatmul.mubr.bf16.gmra.mrb[0].mxu0 %v259
  %v363 = vpop.f32.mrb[0].mxu0
  %v364 = vadd.f32 0.0, %v363
  %v365 = vpop.f32.mrb[0].mxu0
  %v366 = vpop.f32.mrb[0].mxu0
  %v367 = vadd.f32 0.0, %v366
  %v368 = vpop.f32.mrb[0].mxu0
  %369 = vdwg.mxu0
  %v371 = vunpack.c.l.b16 %v68
  %v372 = vpack.c.b16 %v371, %v123
  %v382 = vunpack.c.l.b16 %v69
  %v383 = vunpack.c.l.b16 %v70
  %v384 = vunpack.c.l.b16 %v71
  %v385 = vunpack.c.l.b16 %v72
  %v386 = vunpack.c.l.b16 %v73
  %v387 = vunpack.c.l.b16 %v74
  %v388 = vunpack.c.l.b16 %v75
  %v389 = vunpack.c.l.b16 %v76
  %v390 = vunpack.c.l.b16 %v77
  %v391 = vpack.c.b16 %v383, %v382
  %v392 = vpack.c.b16 %v385, %v384
  %v393 = vpack.c.b16 %v387, %v386
  %v394 = vpack.c.b16 %v389, %v388
  %v395 = vpack.c.b16 %v390, %v390
  %v400 = vsel %vm233, %v125, 0
  %v402 = vsel %vm233, %v126, 0
  %v404 = vsel %vm233, %v127, 0
  %v406 = vsel %vm233, %v128, 0
  %v408 = vsel %vm233, %v129, 0
  %v410 = vsel %vm233, %v130, 0
  %v412 = vsel %vm233, %v131, 0
  %v414 = vsel %vm233, %v132, 0
  %v417 = vsel %vm233, %v372, 0
  %v420 = vsel %vm261, %v395, 0
  %422 = vmatprep.subr.bf16.mxu0 0
  %423 = vmatpush1.bf16.msra.mxu0 %v391
  %424 = vmatprep.subr.bf16.mxu0 0
  %425 = vmatpush1.bf16.msra.mxu0 %v392
  %426 = vmatprep.subr.bf16.mxu0 0
  %427 = vmatpush1.bf16.msra.mxu0 %v393
  %428 = vmatprep.subr.bf16.mxu0 0
  %429 = vmatpush1.bf16.msra.mxu0 %v394
  %430 = vmatprep.subr.bf16.mxu0 0
  %431 = vmatpush1.bf16.msra.mxu0 %v420
  %432 = vmatprep.subr.bf16.mxu0 0
  %433 = vmatpush1.bf16.msra.mxu0 0
  %434 = vmatprep.subr.bf16.mxu0 0
  %435 = vmatpush1.bf16.msra.mxu0 0
  %436 = vmatprep.subr.bf16.mxu0 0
  %437 = vmatpush1.bf16.msra.mxu0 0
  %438 = vmatprep.subr.bf16.mxu0 0
  %439 = vmatpush1.bf16.msra.mxu0 0
  %440 = vmatprep.subr.bf16.mxu0 0
  %441 = vmatpush1.bf16.msra.mxu0 0
  %442 = vmatprep.subr.bf16.mxu0 0
  %443 = vmatpush1.bf16.msra.mxu0 0
  %444 = vmatprep.subr.bf16.mxu0 0
  %445 = vmatpush1.bf16.msra.mxu0 0
  %446 = vmatprep.subr.bf16.mxu0 0
  %447 = vmatpush1.bf16.msra.mxu0 0
  %448 = vmatprep.subr.bf16.mxu0 0
  %449 = vmatpush1.bf16.msra.mxu0 0
  %450 = vmatprep.subr.bf16.mxu0 0
  %451 = vmatpush1.bf16.msra.mxu0 0
  %452 = vmatprep.subr.bf16.mxu0 0
  %453 = vmatpush1.bf16.msra.mxu0 0
  %454 = vmatprep.mubr.bf16.mxu0 0
  %455 = vmatmul.mubr.bf16.gmra.mrb[0].mxu0 %v400
  %v456 = vpop.f32.mrb[0].mxu0
  %v457 = vadd.f32 %v300, %v456
  %v458 = vpop.f32.mrb[0].mxu0
  %v459 = vpop.f32.mrb[0].mxu0
  %v460 = vadd.f32 %v303, %v459
  %v461 = vpop.f32.mrb[0].mxu0
  %462 = vmatprep.mubr.bf16.mxu0 0
  %463 = vmatmul.mubr.bf16.gmra.mrb[0].mxu0 %v402
  %v464 = vpop.f32.mrb[0].mxu0
  %v465 = vadd.f32 %v308, %v464
  %v466 = vpop.f32.mrb[0].mxu0
  %v467 = vpop.f32.mrb[0].mxu0
  %v468 = vadd.f32 %v311, %v467
  %v469 = vpop.f32.mrb[0].mxu0
  %470 = vmatprep.mubr.bf16.mxu0 0
  %471 = vmatmul.mubr.bf16.gmra.mrb[0].mxu0 %v404
  %v472 = vpop.f32.mrb[0].mxu0
  %v473 = vadd.f32 %v316, %v472
  %v474 = vpop.f32.mrb[0].mxu0
  %v475 = vpop.f32.mrb[0].mxu0
  %v476 = vadd.f32 %v319, %v475
  %v477 = vpop.f32.mrb[0].mxu0
  %478 = vmatprep.mubr.bf16.mxu0 0
  %479 = vmatmul.mubr.bf16.gmra.mrb[0].mxu0 %v406
  %v480 = vpop.f32.mrb[0].mxu0
  %v481 = vadd.f32 %v324, %v480
  %v482 = vpop.f32.mrb[0].mxu0
  %v483 = vpop.f32.mrb[0].mxu0
  %v484 = vadd.f32 %v327, %v483
  %v485 = vpop.f32.mrb[0].mxu0
  %486 = vmatprep.mubr.bf16.mxu0 0
  %487 = vmatmul.mubr.bf16.gmra.mrb[0].mxu0 %v408
  %v488 = vpop.f32.mrb[0].mxu0
  %v489 = vadd.f32 %v332, %v488
  %v490 = vpop.f32.mrb[0].mxu0
  %v491 = vpop.f32.mrb[0].mxu0
  %v492 = vadd.f32 %v335, %v491
  %v493 = vpop.f32.mrb[0].mxu0
  %494 = vmatprep.mubr.bf16.mxu0 0
  %495 = vmatmul.mubr.bf16.gmra.mrb[0].mxu0 %v410
  %v496 = vpop.f32.mrb[0].mxu0
  %v497 = vadd.f32 %v340, %v496
  %v498 = vpop.f32.mrb[0].mxu0
  %v499 = vpop.f32.mrb[0].mxu0
  %v500 = vadd.f32 %v343, %v499
  %v501 = vpop.f32.mrb[0].mxu0
  %502 = vmatprep.mubr.bf16.mxu0 0
  %503 = vmatmul.mubr.bf16.gmra.mrb[0].mxu0 %v412
  %v504 = vpop.f32.mrb[0].mxu0
  %v505 = vadd.f32 %v348, %v504
  %v506 = vpop.f32.mrb[0].mxu0
  %v507 = vpop.f32.mrb[0].mxu0
  %v508 = vadd.f32 %v351, %v507
  %v509 = vpop.f32.mrb[0].mxu0
  %510 = vmatprep.mubr.bf16.mxu0 0
  %511 = vmatmul.mubr.bf16.gmra.mrb[0].mxu0 %v414
  %v512 = vpop.f32.mrb[0].mxu0
  %v513 = vadd.f32 %v356, %v512
  %v514 = vpop.f32.mrb[0].mxu0
  %v515 = vpop.f32.mrb[0].mxu0
  %v516 = vadd.f32 %v359, %v515
  %v517 = vpop.f32.mrb[0].mxu0
  %518 = vmatprep.mubr.bf16.mxu0 0
  %519 = vmatmul.mubr.bf16.gmra.mrb[0].mxu0 %v417
  %v520 = vpop.f32.mrb[0].mxu0
  %v521 = vadd.f32 %v364, %v520
  %v522 = vpop.f32.mrb[0].mxu0
  %v523 = vpop.f32.mrb[0].mxu0
  %v524 = vadd.f32 %v367, %v523
  %v525 = vpop.f32.mrb[0].mxu0
  %526 = vdwg.mxu0
  %v527 = vld [vmem:[%s0] sm:$0xe]
  %s528 = scalar_lea.vmem %s1, 72
  %v529 = vld [vmem:[%s528] sm:$0xf]
  %v530 = vld [vmem:[%s528 + $0x4] sm:$0xf]
  %v531 = vld [vmem:[%s528 + $0x8] sm:$0xf]
  %v532 = vld [vmem:[%s528 + $0xc] sm:$0xf]
  %v533 = vld [vmem:[%s528 + $0x10] sm:$0xf]
  %v534 = vld [vmem:[%s528 + $0x14] sm:$0xf]
  %v535 = vld [vmem:[%s528 + $0x18] sm:$0xf]
  %v536 = vld [vmem:[%s528 + $0x1c] sm:$0xf]
  %v537 = vld [vmem:[%s528 + $0x20] sm:$0xf]
  %v539 = vunpack.c.l.b16 %v527
  %v540 = vpack.c.b16 %v108, %v539
  %vm541 = vcmask 1046528
  %v542 = vrot.slane %v540, 1
  %v543 = vrot.slane %v126, 1
  %v544 = vsel %vm541, %v542, %v543
  %v545 = vrot.slane %v127, 1
  %v546 = vsel %vm541, %v543, %v545
  %v547 = vrot.slane %v128, 1
  %v548 = vsel %vm541, %v545, %v547
  %v549 = vrot.slane %v129, 1
  %v550 = vsel %vm541, %v547, %v549
  %v551 = vrot.slane %v130, 1
  %v552 = vsel %vm541, %v549, %v551
  %v553 = vrot.slane %v131, 1
  %v554 = vsel %vm541, %v551, %v553
  %v555 = vrot.slane %v132, 1
  %v556 = vsel %vm541, %v553, %v555
  %v557 = vrot.slane %v133, 1
  %v558 = vsel %vm541, %v555, %v557
  %v568 = vunpack.c.l.b16 %v529
  %v569 = vunpack.c.l.b16 %v530
  %v570 = vunpack.c.l.b16 %v531
  %v571 = vunpack.c.l.b16 %v532
  %v572 = vunpack.c.l.b16 %v533
  %v573 = vunpack.c.l.b16 %v534
  %v574 = vunpack.c.l.b16 %v535
  %v575 = vunpack.c.l.b16 %v536
  %v576 = vunpack.c.l.b16 %v537
  %v577 = vpack.c.b16 %v569, %v568
  %v578 = vpack.c.b16 %v571, %v570
  %v579 = vpack.c.b16 %v573, %v572
  %v580 = vpack.c.b16 %v575, %v574
  %v581 = vpack.c.b16 %v576, %v576
  %v587 = vsel %vm233, %v544, 0
  %v590 = vsel %vm233, %v546, 0
  %v593 = vsel %vm233, %v548, 0
  %v596 = vsel %vm233, %v550, 0
  %v599 = vsel %vm233, %v552, 0
  %v602 = vsel %vm233, %v554, 0
  %v605 = vsel %vm233, %v556, 0
  %v608 = vsel %vm233, %v558, 0
  %v611 = vsel %vm233, %v557, 0
  %v614 = vsel %vm261, %v581, 0
  %616 = vmatprep.subr.bf16.mxu0 0
  %617 = vmatpush1.bf16.msra.mxu0 %v577
  %618 = vmatprep.subr.bf16.mxu0 0
  %619 = vmatpush1.bf16.msra.mxu0 %v578
  %620 = vmatprep.subr.bf16.mxu0 0
  %621 = vmatpush1.bf16.msra.mxu0 %v579
  %622 = vmatprep.subr.bf16.mxu0 0
  %623 = vmatpush1.bf16.msra.mxu0 %v580
  %624 = vmatprep.subr.bf16.mxu0 0
  %625 = vmatpush1.bf16.msra.mxu0 %v614
  %626 = vmatprep.subr.bf16.mxu0 0
  %627 = vmatpush1.bf16.msra.mxu0 0
  %628 = vmatprep.subr.bf16.mxu0 0
  %629 = vmatpush1.bf16.msra.mxu0 0
  %630 = vmatprep.subr.bf16.mxu0 0
  %631 = vmatpush1.bf16.msra.mxu0 0
  %632 = vmatprep.subr.bf16.mxu0 0
  %633 = vmatpush1.bf16.msra.mxu0 0
  %634 = vmatprep.subr.bf16.mxu0 0
  %635 = vmatpush1.bf16.msra.mxu0 0
  %636 = vmatprep.subr.bf16.mxu0 0
  %637 = vmatpush1.bf16.msra.mxu0 0
  %638 = vmatprep.subr.bf16.mxu0 0
  %639 = vmatpush1.bf16.msra.mxu0 0
  %640 = vmatprep.subr.bf16.mxu0 0
  %641 = vmatpush1.bf16.msra.mxu0 0
  %642 = vmatprep.subr.bf16.mxu0 0
  %643 = vmatpush1.bf16.msra.mxu0 0
  %644 = vmatprep.subr.bf16.mxu0 0
  %645 = vmatpush1.bf16.msra.mxu0 0
  %646 = vmatprep.subr.bf16.mxu0 0
  %647 = vmatpush1.bf16.msra.mxu0 0
  %648 = vmatprep.mubr.bf16.mxu0 0
  %649 = vmatmul.mubr.bf16.gmra.mrb[0].mxu0 %v587
  %v650 = vpop.f32.mrb[0].mxu0
  %v651 = vadd.f32 0.0, %v650
  %v652 = vpop.f32.mrb[0].mxu0
  %v653 = vpop.f32.mrb[0].mxu0
  %v654 = vadd.f32 0.0, %v653
  %v655 = vpop.f32.mrb[0].mxu0
  %656 = vmatprep.mubr.bf16.mxu0 0
  %657 = vmatmul.mubr.bf16.gmra.mrb[0].mxu0 %v590
  %v658 = vpop.f32.mrb[0].mxu0
  %v659 = vadd.f32 0.0, %v658
  %v660 = vpop.f32.mrb[0].mxu0
  %v661 = vpop.f32.mrb[0].mxu0
  %v662 = vadd.f32 0.0, %v661
  %v663 = vpop.f32.mrb[0].mxu0
  %664 = vmatprep.mubr.bf16.mxu0 0
  %665 = vmatmul.mubr.bf16.gmra.mrb[0].mxu0 %v593
  %v666 = vpop.f32.mrb[0].mxu0
  %v667 = vadd.f32 0.0, %v666
  %v668 = vpop.f32.mrb[0].mxu0
  %v669 = vpop.f32.mrb[0].mxu0
  %v670 = vadd.f32 0.0, %v669
  %v671 = vpop.f32.mrb[0].mxu0
  %672 = vmatprep.mubr.bf16.mxu0 0
  %673 = vmatmul.mubr.bf16.gmra.mrb[0].mxu0 %v596
  %v674 = vpop.f32.mrb[0].mxu0
  %v675 = vadd.f32 0.0, %v674
  %v676 = vpop.f32.mrb[0].mxu0
  %v677 = vpop.f32.mrb[0].mxu0
  %v678 = vadd.f32 0.0, %v677
  %v679 = vpop.f32.mrb[0].mxu0
  %680 = vmatprep.mubr.bf16.mxu0 0
  %681 = vmatmul.mubr.bf16.gmra.mrb[0].mxu0 %v599
  %v682 = vpop.f32.mrb[0].mxu0
  %v683 = vadd.f32 0.0, %v682
  %v684 = vpop.f32.mrb[0].mxu0
  %v685 = vpop.f32.mrb[0].mxu0
  %v686 = vadd.f32 0.0, %v685
  %v687 = vpop.f32.mrb[0].mxu0
  %688 = vmatprep.mubr.bf16.mxu0 0
  %689 = vmatmul.mubr.bf16.gmra.mrb[0].mxu0 %v602
  %v690 = vpop.f32.mrb[0].mxu0
  %v691 = vadd.f32 0.0, %v690
  %v692 = vpop.f32.mrb[0].mxu0
  %v693 = vpop.f32.mrb[0].mxu0
  %v694 = vadd.f32 0.0, %v693
  %v695 = vpop.f32.mrb[0].mxu0
  %696 = vmatprep.mubr.bf16.mxu0 0
  %697 = vmatmul.mubr.bf16.gmra.mrb[0].mxu0 %v605
  %v698 = vpop.f32.mrb[0].mxu0
  %v699 = vadd.f32 0.0, %v698
  %v700 = vpop.f32.mrb[0].mxu0
  %v701 = vpop.f32.mrb[0].mxu0
  %v702 = vadd.f32 0.0, %v701
  %v703 = vpop.f32.mrb[0].mxu0
  %704 = vmatprep.mubr.bf16.mxu0 0
  %705 = vmatmul.mubr.bf16.gmra.mrb[0].mxu0 %v608
  %v706 = vpop.f32.mrb[0].mxu0
  %v707 = vadd.f32 0.0, %v706
  %v708 = vpop.f32.mrb[0].mxu0
  %v709 = vpop.f32.mrb[0].mxu0
  %v710 = vadd.f32 0.0, %v709
  %v711 = vpop.f32.mrb[0].mxu0
  %712 = vmatprep.mubr.bf16.mxu0 0
  %713 = vmatmul.mubr.bf16.gmra.mrb[0].mxu0 %v611
  %v714 = vpop.f32.mrb[0].mxu0
  %v715 = vadd.f32 0.0, %v714
  %v716 = vpop.f32.mrb[0].mxu0
  %v717 = vpop.f32.mrb[0].mxu0
  %v718 = vadd.f32 0.0, %v717
  %v719 = vpop.f32.mrb[0].mxu0
  %720 = vdwg.mxu0
  %v721 = vadd.f32 %v457, %v651
  %v722 = vadd.f32 %v460, %v654
  %v723 = vadd.f32 %v465, %v659
  %v724 = vadd.f32 %v468, %v662
  %v725 = vadd.f32 %v473, %v667
  %v726 = vadd.f32 %v476, %v670
  %v727 = vadd.f32 %v481, %v675
  %v728 = vadd.f32 %v484, %v678
  %v729 = vadd.f32 %v489, %v683
  %v730 = vadd.f32 %v492, %v686
  %v731 = vadd.f32 %v497, %v691
  %v732 = vadd.f32 %v500, %v694
  %v733 = vadd.f32 %v505, %v699
  %v734 = vadd.f32 %v508, %v702
  %v735 = vadd.f32 %v513, %v707
  %v736 = vadd.f32 %v516, %v710
  %v737 = vadd.f32 %v521, %v715
  %v738 = vadd.f32 %v524, %v718
  %v739 = vld [vmem:[%s4] sm:$0x1]
  %v741 = vlaneseq
  %v742 = vshrl.u32 %v741, 7
  %v743 = vsub.s32 0, %v742
  %v744 = vrot.slane %v739, %v743
  %v746 = vadd.f32 %v721, %v744
  %v747 = vadd.f32 %v722, %v744
  %v748 = vadd.f32 %v723, %v744
  %v749 = vadd.f32 %v724, %v744
  %v750 = vadd.f32 %v725, %v744
  %v751 = vadd.f32 %v726, %v744
  %v752 = vadd.f32 %v727, %v744
  %v753 = vadd.f32 %v728, %v744
  %v754 = vadd.f32 %v729, %v744
  %v755 = vadd.f32 %v730, %v744
  %v756 = vadd.f32 %v731, %v744
  %v757 = vadd.f32 %v732, %v744
  %v758 = vadd.f32 %v733, %v744
  %v759 = vadd.f32 %v734, %v744
  %v760 = vadd.f32 %v735, %v744
  %v761 = vadd.f32 %v736, %v744
  %v762 = vadd.f32 %v737, %v744
  %v763 = vadd.f32 %v738, %v744
  %v764 = vmax.f32 %v746, 0.0
  %v765 = vmax.f32 %v747, 0.0
  %v766 = vmax.f32 %v748, 0.0
  %v767 = vmax.f32 %v749, 0.0
  %v768 = vmax.f32 %v750, 0.0
  %v769 = vmax.f32 %v751, 0.0
  %v770 = vmax.f32 %v752, 0.0
  %v771 = vmax.f32 %v753, 0.0
  %v772 = vmax.f32 %v754, 0.0
  %v773 = vmax.f32 %v755, 0.0
  %v774 = vmax.f32 %v756, 0.0
  %v775 = vmax.f32 %v757, 0.0
  %v776 = vmax.f32 %v758, 0.0
  %v777 = vmax.f32 %v759, 0.0
  %v778 = vmax.f32 %v760, 0.0
  %v779 = vmax.f32 %v761, 0.0
  %v780 = vmax.f32 %v762, 0.0
  %v781 = vmax.f32 %v763, 0.0
  %v782 = vpack.c.bf16 %v765, %v764
  %v783 = vpack.c.bf16 %v767, %v766
  %v784 = vpack.c.bf16 %v769, %v768
  %v785 = vpack.c.bf16 %v771, %v770
  %v786 = vpack.c.bf16 %v773, %v772
  %v787 = vpack.c.bf16 %v775, %v774
  %v788 = vpack.c.bf16 %v777, %v776
  %v789 = vpack.c.bf16 %v779, %v778
  %v790 = vpack.c.bf16 %v781, %v780
  %v791 = vld [vmem:[%s2] sm:$0xf]
  %v792 = vld [vmem:[%s2 + $0x4] sm:$0xf]
  %v793 = vld [vmem:[%s2 + $0x8] sm:$0xf]
  %v794 = vld [vmem:[%s2 + $0xc] sm:$0xf]
  %v795 = vld [vmem:[%s2 + $0x10] sm:$0xf]
  %v796 = vld [vmem:[%s2 + $0x14] sm:$0xf]
  %v797 = vld [vmem:[%s2 + $0x18] sm:$0xf]
  %v798 = vld [vmem:[%s2 + $0x1c] sm:$0xf]
  %v799 = vld [vmem:[%s2 + $0x20] sm:$0xf]
  %v800 = vld [vmem:[%s2 + $0x24] sm:$0xf]
  %v801 = vld [vmem:[%s2 + $0x28] sm:$0xf]
  %v802 = vld [vmem:[%s2 + $0x2c] sm:$0xf]
  %v803 = vld [vmem:[%s2 + $0x30] sm:$0xf]
  %v804 = vld [vmem:[%s2 + $0x34] sm:$0xf]
  %v805 = vld [vmem:[%s2 + $0x38] sm:$0xf]
  %v806 = vld [vmem:[%s2 + $0x3c] sm:$0xf]
  %v823 = vunpack.c.l.b16 %v791
  %v824 = vunpack.c.l.b16 %v792
  %v825 = vunpack.c.l.b16 %v793
  %v826 = vunpack.c.l.b16 %v794
  %v827 = vunpack.c.l.b16 %v795
  %v828 = vunpack.c.l.b16 %v796
  %v829 = vunpack.c.l.b16 %v797
  %v830 = vunpack.c.l.b16 %v798
  %v831 = vunpack.c.l.b16 %v799
  %v832 = vunpack.c.l.b16 %v800
  %v833 = vunpack.c.l.b16 %v801
  %v834 = vunpack.c.l.b16 %v802
  %v835 = vunpack.c.l.b16 %v803
  %v836 = vunpack.c.l.b16 %v804
  %v837 = vunpack.c.l.b16 %v805
  %v838 = vunpack.c.l.b16 %v806
  %v839 = vpack.c.b16 %v824, %v823
  %v840 = vpack.c.b16 %v826, %v825
  %v841 = vpack.c.b16 %v828, %v827
  %v842 = vpack.c.b16 %v830, %v829
  %v843 = vpack.c.b16 %v832, %v831
  %v844 = vpack.c.b16 %v834, %v833
  %v845 = vpack.c.b16 %v836, %v835
  %v846 = vpack.c.b16 %v838, %v837
  %855 = vmatprep.subr.bf16.mxu0 0
  %856 = vmatpush1.bf16.msra.mxu0 %v839
  %857 = vmatprep.subr.bf16.mxu0 0
  %858 = vmatpush1.bf16.msra.mxu0 %v840
  %859 = vmatprep.subr.bf16.mxu0 0
  %860 = vmatpush1.bf16.msra.mxu0 %v841
  %861 = vmatprep.subr.bf16.mxu0 0
  %862 = vmatpush1.bf16.msra.mxu0 %v842
  %863 = vmatprep.subr.bf16.mxu0 0
  %864 = vmatpush1.bf16.msra.mxu0 %v843
  %865 = vmatprep.subr.bf16.mxu0 0
  %866 = vmatpush1.bf16.msra.mxu0 %v844
  %867 = vmatprep.subr.bf16.mxu0 0
  %868 = vmatpush1.bf16.msra.mxu0 %v845
  %869 = vmatprep.subr.bf16.mxu0 0
  %870 = vmatpush1.bf16.msra.mxu0 %v846
  %871 = vmatprep.subr.bf16.mxu0 0
  %872 = vmatpush1.bf16.msra.mxu0 0
  %873 = vmatprep.subr.bf16.mxu0 0
  %874 = vmatpush1.bf16.msra.mxu0 0
  %875 = vmatprep.subr.bf16.mxu0 0
  %876 = vmatpush1.bf16.msra.mxu0 0
  %877 = vmatprep.subr.bf16.mxu0 0
  %878 = vmatpush1.bf16.msra.mxu0 0
  %879 = vmatprep.subr.bf16.mxu0 0
  %880 = vmatpush1.bf16.msra.mxu0 0
  %881 = vmatprep.subr.bf16.mxu0 0
  %882 = vmatpush1.bf16.msra.mxu0 0
  %883 = vmatprep.subr.bf16.mxu0 0
  %884 = vmatpush1.bf16.msra.mxu0 0
  %885 = vmatprep.subr.bf16.mxu0 0
  %886 = vmatpush1.bf16.msra.mxu0 0
  %887 = vmatprep.mubr.bf16.mxu0 0
  %888 = vmatmul.mubr.bf16.gmra.mrb[0].mxu0 %v782
  %v889 = vpop.f32.mrb[0].mxu0
  %v890 = vadd.f32 0.0, %v889
  %v891 = vpop.f32.mrb[0].mxu0
  %v892 = vpop.f32.mrb[0].mxu0
  %v893 = vadd.f32 0.0, %v892
  %v894 = vpop.f32.mrb[0].mxu0
  %895 = vmatprep.mubr.bf16.mxu0 0
  %896 = vmatmul.mubr.bf16.gmra.mrb[0].mxu0 %v783
  %v897 = vpop.f32.mrb[0].mxu0
  %v898 = vadd.f32 0.0, %v897
  %v899 = vpop.f32.mrb[0].mxu0
  %v900 = vpop.f32.mrb[0].mxu0
  %v901 = vadd.f32 0.0, %v900
  %v902 = vpop.f32.mrb[0].mxu0
  %903 = vmatprep.mubr.bf16.mxu0 0
  %904 = vmatmul.mubr.bf16.gmra.mrb[0].mxu0 %v784
  %v905 = vpop.f32.mrb[0].mxu0
  %v906 = vadd.f32 0.0, %v905
  %v907 = vpop.f32.mrb[0].mxu0
  %v908 = vpop.f32.mrb[0].mxu0
  %v909 = vadd.f32 0.0, %v908
  %v910 = vpop.f32.mrb[0].mxu0
  %911 = vmatprep.mubr.bf16.mxu0 0
  %912 = vmatmul.mubr.bf16.gmra.mrb[0].mxu0 %v785
  %v913 = vpop.f32.mrb[0].mxu0
  %v914 = vadd.f32 0.0, %v913
  %v915 = vpop.f32.mrb[0].mxu0
  %v916 = vpop.f32.mrb[0].mxu0
  %v917 = vadd.f32 0.0, %v916
  %v918 = vpop.f32.mrb[0].mxu0
  %919 = vmatprep.mubr.bf16.mxu0 0
  %920 = vmatmul.mubr.bf16.gmra.mrb[0].mxu0 %v786
  %v921 = vpop.f32.mrb[0].mxu0
  %v922 = vadd.f32 0.0, %v921
  %v923 = vpop.f32.mrb[0].mxu0
  %v924 = vpop.f32.mrb[0].mxu0
  %v925 = vadd.f32 0.0, %v924
  %v926 = vpop.f32.mrb[0].mxu0
  %927 = vmatprep.mubr.bf16.mxu0 0
  %928 = vmatmul.mubr.bf16.gmra.mrb[0].mxu0 %v787
  %v929 = vpop.f32.mrb[0].mxu0
  %v930 = vadd.f32 0.0, %v929
  %v931 = vpop.f32.mrb[0].mxu0
  %v932 = vpop.f32.mrb[0].mxu0
  %v933 = vadd.f32 0.0, %v932
  %v934 = vpop.f32.mrb[0].mxu0
  %935 = vmatprep.mubr.bf16.mxu0 0
  %936 = vmatmul.mubr.bf16.gmra.mrb[0].mxu0 %v788
  %v937 = vpop.f32.mrb[0].mxu0
  %v938 = vadd.f32 0.0, %v937
  %v939 = vpop.f32.mrb[0].mxu0
  %v940 = vpop.f32.mrb[0].mxu0
  %v941 = vadd.f32 0.0, %v940
  %v942 = vpop.f32.mrb[0].mxu0
  %943 = vmatprep.mubr.bf16.mxu0 0
  %944 = vmatmul.mubr.bf16.gmra.mrb[0].mxu0 %v789
  %v945 = vpop.f32.mrb[0].mxu0
  %v946 = vadd.f32 0.0, %v945
  %v947 = vpop.f32.mrb[0].mxu0
  %v948 = vpop.f32.mrb[0].mxu0
  %v949 = vadd.f32 0.0, %v948
  %v950 = vpop.f32.mrb[0].mxu0
  %951 = vmatprep.mubr.bf16.mxu0 0
  %952 = vmatmul.mubr.bf16.gmra.mrb[0].mxu0 %v790
  %v953 = vpop.f32.mrb[0].mxu0
  %v954 = vadd.f32 0.0, %v953
  %v955 = vpop.f32.mrb[0].mxu0
  %v956 = vpop.f32.mrb[0].mxu0
  %v957 = vadd.f32 0.0, %v956
  %v958 = vpop.f32.mrb[0].mxu0
  %959 = vdwg.mxu0
  %s960 = scalar_lea.vmem %s2, 64
  %v961 = vld [vmem:[%s960] sm:$0xf]
  %v962 = vld [vmem:[%s960 + $0x4] sm:$0xf]
  %v963 = vld [vmem:[%s960 + $0x8] sm:$0xf]
  %v964 = vld [vmem:[%s960 + $0xc] sm:$0xf]
  %v965 = vld [vmem:[%s960 + $0x10] sm:$0xf]
  %v966 = vld [vmem:[%s960 + $0x14] sm:$0xf]
  %v967 = vld [vmem:[%s960 + $0x18] sm:$0xf]
  %v968 = vld [vmem:[%s960 + $0x1c] sm:$0xf]
  %v969 = vld [vmem:[%s960 + $0x20] sm:$0xf]
  %v970 = vld [vmem:[%s960 + $0x24] sm:$0xf]
  %v971 = vld [vmem:[%s960 + $0x28] sm:$0xf]
  %v972 = vld [vmem:[%s960 + $0x2c] sm:$0xf]
  %v973 = vld [vmem:[%s960 + $0x30] sm:$0xf]
  %v974 = vld [vmem:[%s960 + $0x34] sm:$0xf]
  %v975 = vld [vmem:[%s960 + $0x38] sm:$0xf]
  %v976 = vld [vmem:[%s960 + $0x3c] sm:$0xf]
  %v993 = vunpack.c.l.b16 %v961
  %v994 = vunpack.c.l.b16 %v962
  %v995 = vunpack.c.l.b16 %v963
  %v996 = vunpack.c.l.b16 %v964
  %v997 = vunpack.c.l.b16 %v965
  %v998 = vunpack.c.l.b16 %v966
  %v999 = vunpack.c.l.b16 %v967
  %v1000 = vunpack.c.l.b16 %v968
  %v1001 = vunpack.c.l.b16 %v969
  %v1002 = vunpack.c.l.b16 %v970
  %v1003 = vunpack.c.l.b16 %v971
  %v1004 = vunpack.c.l.b16 %v972
  %v1005 = vunpack.c.l.b16 %v973
  %v1006 = vunpack.c.l.b16 %v974
  %v1007 = vunpack.c.l.b16 %v975
  %v1008 = vunpack.c.l.b16 %v976
  %v1009 = vpack.c.b16 %v994, %v993
  %v1010 = vpack.c.b16 %v996, %v995
  %v1011 = vpack.c.b16 %v998, %v997
  %v1012 = vpack.c.b16 %v1000, %v999
  %v1013 = vpack.c.b16 %v1002, %v1001
  %v1014 = vpack.c.b16 %v1004, %v1003
  %v1015 = vpack.c.b16 %v1006, %v1005
  %v1016 = vpack.c.b16 %v1008, %v1007
  %1025 = vmatprep.subr.bf16.mxu0 0
  %1026 = vmatpush1.bf16.msra.mxu0 %v1009
  %1027 = vmatprep.subr.bf16.mxu0 0
  %1028 = vmatpush1.bf16.msra.mxu0 %v1010
  %1029 = vmatprep.subr.bf16.mxu0 0
  %1030 = vmatpush1.bf16.msra.mxu0 %v1011
  %1031 = vmatprep.subr.bf16.mxu0 0
  %1032 = vmatpush1.bf16.msra.mxu0 %v1012
  %1033 = vmatprep.subr.bf16.mxu0 0
  %1034 = vmatpush1.bf16.msra.mxu0 %v1013
  %1035 = vmatprep.subr.bf16.mxu0 0
  %1036 = vmatpush1.bf16.msra.mxu0 %v1014
  %1037 = vmatprep.subr.bf16.mxu0 0
  %1038 = vmatpush1.bf16.msra.mxu0 %v1015
  %1039 = vmatprep.subr.bf16.mxu0 0
  %1040 = vmatpush1.bf16.msra.mxu0 %v1016
  %1041 = vmatprep.subr.bf16.mxu0 0
  %1042 = vmatpush1.bf16.msra.mxu0 0
  %1043 = vmatprep.subr.bf16.mxu0 0
  %1044 = vmatpush1.bf16.msra.mxu0 0
  %1045 = vmatprep.subr.bf16.mxu0 0
  %1046 = vmatpush1.bf16.msra.mxu0 0
  %1047 = vmatprep.subr.bf16.mxu0 0
  %1048 = vmatpush1.bf16.msra.mxu0 0
  %1049 = vmatprep.subr.bf16.mxu0 0
  %1050 = vmatpush1.bf16.msra.mxu0 0
  %1051 = vmatprep.subr.bf16.mxu0 0
  %1052 = vmatpush1.bf16.msra.mxu0 0
  %1053 = vmatprep.subr.bf16.mxu0 0
  %1054 = vmatpush1.bf16.msra.mxu0 0
  %1055 = vmatprep.subr.bf16.mxu0 0
  %1056 = vmatpush1.bf16.msra.mxu0 0
  %1057 = vmatprep.mubr.bf16.mxu0 0
  %1058 = vmatmul.mubr.bf16.gmra.mrb[0].mxu0 %v782
  %v1059 = vpop.f32.mrb[0].mxu0
  %v1060 = vadd.f32 0.0, %v1059
  %v1061 = vpop.f32.mrb[0].mxu0
  %v1062 = vpop.f32.mrb[0].mxu0
  %v1063 = vadd.f32 0.0, %v1062
  %v1064 = vpop.f32.mrb[0].mxu0
  %1065 = vmatprep.mubr.bf16.mxu0 0
  %1066 = vmatmul.mubr.bf16.gmra.mrb[0].mxu0 %v783
  %v1067 = vpop.f32.mrb[0].mxu0
  %v1068 = vadd.f32 0.0, %v1067
  %v1069 = vpop.f32.mrb[0].mxu0
  %v1070 = vpop.f32.mrb[0].mxu0
  %v1071 = vadd.f32 0.0, %v1070
  %v1072 = vpop.f32.mrb[0].mxu0
  %1073 = vmatprep.mubr.bf16.mxu0 0
  %1074 = vmatmul.mubr.bf16.gmra.mrb[0].mxu0 %v784
  %v1075 = vpop.f32.mrb[0].mxu0
  %v1076 = vadd.f32 0.0, %v1075
  %v1077 = vpop.f32.mrb[0].mxu0
  %v1078 = vpop.f32.mrb[0].mxu0
  %v1079 = vadd.f32 0.0, %v1078
  %v1080 = vpop.f32.mrb[0].mxu0
  %1081 = vmatprep.mubr.bf16.mxu0 0
  %1082 = vmatmul.mubr.bf16.gmra.mrb[0].mxu0 %v785
  %v1083 = vpop.f32.mrb[0].mxu0
  %v1084 = vadd.f32 0.0, %v1083
  %v1085 = vpop.f32.mrb[0].mxu0
  %v1086 = vpop.f32.mrb[0].mxu0
  %v1087 = vadd.f32 0.0, %v1086
  %v1088 = vpop.f32.mrb[0].mxu0
  %1089 = vmatprep.mubr.bf16.mxu0 0
  %1090 = vmatmul.mubr.bf16.gmra.mrb[0].mxu0 %v786
  %v1091 = vpop.f32.mrb[0].mxu0
  %v1092 = vadd.f32 0.0, %v1091
  %v1093 = vpop.f32.mrb[0].mxu0
  %v1094 = vpop.f32.mrb[0].mxu0
  %v1095 = vadd.f32 0.0, %v1094
  %v1096 = vpop.f32.mrb[0].mxu0
  %1097 = vmatprep.mubr.bf16.mxu0 0
  %1098 = vmatmul.mubr.bf16.gmra.mrb[0].mxu0 %v787
  %v1099 = vpop.f32.mrb[0].mxu0
  %v1100 = vadd.f32 0.0, %v1099
  %v1101 = vpop.f32.mrb[0].mxu0
  %v1102 = vpop.f32.mrb[0].mxu0
  %v1103 = vadd.f32 0.0, %v1102
  %v1104 = vpop.f32.mrb[0].mxu0
  %1105 = vmatprep.mubr.bf16.mxu0 0
  %1106 = vmatmul.mubr.bf16.gmra.mrb[0].mxu0 %v788
  %v1107 = vpop.f32.mrb[0].mxu0
  %v1108 = vadd.f32 0.0, %v1107
  %v1109 = vpop.f32.mrb[0].mxu0
  %v1110 = vpop.f32.mrb[0].mxu0
  %v1111 = vadd.f32 0.0, %v1110
  %v1112 = vpop.f32.mrb[0].mxu0
  %1113 = vmatprep.mubr.bf16.mxu0 0
  %1114 = vmatmul.mubr.bf16.gmra.mrb[0].mxu0 %v789
  %v1115 = vpop.f32.mrb[0].mxu0
  %v1116 = vadd.f32 0.0, %v1115
  %v1117 = vpop.f32.mrb[0].mxu0
  %v1118 = vpop.f32.mrb[0].mxu0
  %v1119 = vadd.f32 0.0, %v1118
  %v1120 = vpop.f32.mrb[0].mxu0
  %1121 = vmatprep.mubr.bf16.mxu0 0
  %1122 = vmatmul.mubr.bf16.gmra.mrb[0].mxu0 %v790
  %v1123 = vpop.f32.mrb[0].mxu0
  %v1124 = vadd.f32 0.0, %v1123
  %v1125 = vpop.f32.mrb[0].mxu0
  %v1126 = vpop.f32.mrb[0].mxu0
  %v1127 = vadd.f32 0.0, %v1126
  %v1128 = vpop.f32.mrb[0].mxu0
  %1129 = vdwg.mxu0
  %v1130 = vmax.f32 %v890, %v1060
  %v1131 = vmax.f32 %v893, %v1063
  %v1132 = vmax.f32 %v898, %v1068
  %v1133 = vmax.f32 %v901, %v1071
  %v1134 = vmax.f32 %v906, %v1076
  %v1135 = vmax.f32 %v909, %v1079
  %v1136 = vmax.f32 %v914, %v1084
  %v1137 = vmax.f32 %v917, %v1087
  %v1138 = vmax.f32 %v922, %v1092
  %v1139 = vmax.f32 %v925, %v1095
  %v1140 = vmax.f32 %v930, %v1100
  %v1141 = vmax.f32 %v933, %v1103
  %v1142 = vmax.f32 %v938, %v1108
  %v1143 = vmax.f32 %v941, %v1111
  %v1144 = vmax.f32 %v946, %v1116
  %v1145 = vmax.f32 %v949, %v1119
  %v1146 = vmax.f32 %v954, %v1124
  %v1147 = vmax.f32 %v957, %v1127
  %v1148 = vpack.c.bf16 %v1131, %v1130
  %v1149 = vpack.c.bf16 %v1133, %v1132
  %v1150 = vpack.c.bf16 %v1135, %v1134
  %v1151 = vpack.c.bf16 %v1137, %v1136
  %v1152 = vpack.c.bf16 %v1139, %v1138
  %v1153 = vpack.c.bf16 %v1141, %v1140
  %v1154 = vpack.c.bf16 %v1143, %v1142
  %v1155 = vpack.c.bf16 %v1145, %v1144
  %v1156 = vpack.c.bf16 %v1147, %v1146
  %v1157 = vld [vmem:[%s3] sm:$0xff]
  %v1158 = vld [vmem:[%s3 + $0x8] sm:$0xff]
  %v1159 = vld [vmem:[%s3 + $0x10] sm:$0xff]
  %v1160 = vld [vmem:[%s3 + $0x18] sm:$0xff]
  %v1161 = vld [vmem:[%s3 + $0x20] sm:$0xff]
  %v1162 = vld [vmem:[%s3 + $0x28] sm:$0xff]
  %v1163 = vld [vmem:[%s3 + $0x30] sm:$0xff]
  %v1164 = vld [vmem:[%s3 + $0x38] sm:$0xff]
  %v1165 = vld [vmem:[%s3 + $0x40] sm:$0xff]
  %v1166 = vld [vmem:[%s3 + $0x48] sm:$0xff]
  %v1177 = vunpack.c.l.b16 %v1157
  %v1178 = vunpack.c.h.b16 %v1157
  %v1179 = vunpack.c.l.b16 %v1158
  %v1180 = vunpack.c.h.b16 %v1158
  %v1181 = vunpack.c.l.b16 %v1159
  %v1182 = vunpack.c.h.b16 %v1159
  %v1183 = vunpack.c.l.b16 %v1160
  %v1184 = vunpack.c.h.b16 %v1160
  %v1185 = vunpack.c.l.b16 %v1161
  %v1186 = vunpack.c.h.b16 %v1161
  %v1187 = vunpack.c.l.b16 %v1162
  %v1188 = vunpack.c.h.b16 %v1162
  %v1189 = vunpack.c.l.b16 %v1163
  %v1190 = vunpack.c.h.b16 %v1163
  %v1191 = vunpack.c.l.b16 %v1164
  %v1192 = vunpack.c.h.b16 %v1164
  %v1193 = vunpack.c.l.b16 %v1165
  %v1194 = vunpack.c.h.b16 %v1165
  %v1195 = vunpack.c.l.b16 %v1166
  %v1196 = vunpack.c.h.b16 %v1166
  %v1197 = vpack.c.b16 %v1179, %v1177
  %v1198 = vpack.c.b16 %v1180, %v1178
  %v1199 = vpack.c.b16 %v1183, %v1181
  %v1200 = vpack.c.b16 %v1184, %v1182
  %v1201 = vpack.c.b16 %v1187, %v1185
  %v1202 = vpack.c.b16 %v1188, %v1186
  %v1203 = vpack.c.b16 %v1191, %v1189
  %v1204 = vpack.c.b16 %v1192, %v1190
  %v1205 = vpack.c.b16 %v1195, %v1193
  %v1206 = vpack.c.b16 %v1196, %v1194
  %vm1212 = vcmask 113664
  %v1214 = vsel %vm1212, %v1198, 0
  %v1217 = vsel %vm1212, %v1200, 0
  %v1220 = vsel %vm1212, %v1202, 0
  %v1223 = vsel %vm1212, %v1204, 0
  %v1226 = vsel %vm1212, %v1206, 0
  %vm1228 = vcmask 1046528
  %v1230 = vsel %vm1228, %v1156, 0
  %1232 = vmatprep.subr.bf16.mxu0 0
  %1233 = vmatpush1.bf16.msra.mxu0 %v1148
  %1234 = vmatprep.subr.bf16.mxu0 0
  %1235 = vmatpush1.bf16.msra.mxu0 %v1149
  %1236 = vmatprep.subr.bf16.mxu0 0
  %1237 = vmatpush1.bf16.msra.mxu0 %v1150
  %1238 = vmatprep.subr.bf16.mxu0 0
  %1239 = vmatpush1.bf16.msra.mxu0 %v1151
  %1240 = vmatprep.subr.bf16.mxu0 0
  %1241 = vmatpush1.bf16.msra.mxu0 %v1152
  %1242 = vmatprep.subr.bf16.mxu0 0
  %1243 = vmatpush1.bf16.msra.mxu0 %v1153
  %1244 = vmatprep.subr.bf16.mxu0 0
  %1245 = vmatpush1.bf16.msra.mxu0 %v1154
  %1246 = vmatprep.subr.bf16.mxu0 0
  %1247 = vmatpush1.bf16.msra.mxu0 %v1155
  %1248 = vmatprep.subr.bf16.mxu0 0
  %1249 = vmatpush1.bf16.msra.mxu0 %v1230
  %1250 = vmatprep.subr.bf16.mxu0 0
  %1251 = vmatpush1.bf16.msra.mxu0 0
  %1252 = vmatprep.subr.bf16.mxu0 0
  %1253 = vmatpush1.bf16.msra.mxu0 0
  %1254 = vmatprep.subr.bf16.mxu0 0
  %1255 = vmatpush1.bf16.msra.mxu0 0
  %1256 = vmatprep.subr.bf16.mxu0 0
  %1257 = vmatpush1.bf16.msra.mxu0 0
  %1258 = vmatprep.subr.bf16.mxu0 0
  %1259 = vmatpush1.bf16.msra.mxu0 0
  %1260 = vmatprep.subr.bf16.mxu0 0
  %1261 = vmatpush1.bf16.msra.mxu0 0
  %1262 = vmatprep.subr.bf16.mxu0 0
  %1263 = vmatpush1.bf16.msra.mxu0 0
  %1264 = vmatprep.mubr.bf16.mxu0 %v1214
  %1265 = vmatmul.mubr.bf16.gmra.mrb[0].mxu0 %v1197
  %v1266 = vpop.f32.mrb[0].mxu0
  %v1267 = vadd.f32 0.0, %v1266
  %v1268 = vpop.f32.mrb[0].mxu0
  %v1269 = vpop.f32.mrb[0].mxu0
  %v1270 = vadd.f32 0.0, %v1269
  %v1271 = vpop.f32.mrb[0].mxu0
  %1272 = vmatprep.mubr.bf16.mxu0 %v1217
  %1273 = vmatmul.mubr.bf16.gmra.mrb[0].mxu0 %v1199
  %v1274 = vpop.f32.mrb[0].mxu0
  %v1275 = vadd.f32 0.0, %v1274
  %v1276 = vpop.f32.mrb[0].mxu0
  %v1277 = vpop.f32.mrb[0].mxu0
  %v1278 = vadd.f32 0.0, %v1277
  %v1279 = vpop.f32.mrb[0].mxu0
  %1280 = vmatprep.mubr.bf16.mxu0 %v1220
  %1281 = vmatmul.mubr.bf16.gmra.mrb[0].mxu0 %v1201
  %v1282 = vpop.f32.mrb[0].mxu0
  %v1283 = vadd.f32 0.0, %v1282
  %v1284 = vpop.f32.mrb[0].mxu0
  %v1285 = vpop.f32.mrb[0].mxu0
  %v1286 = vadd.f32 0.0, %v1285
  %v1287 = vpop.f32.mrb[0].mxu0
  %1288 = vmatprep.mubr.bf16.mxu0 %v1223
  %1289 = vmatmul.mubr.bf16.gmra.mrb[0].mxu0 %v1203
  %v1290 = vpop.f32.mrb[0].mxu0
  %v1291 = vadd.f32 0.0, %v1290
  %v1292 = vpop.f32.mrb[0].mxu0
  %v1293 = vpop.f32.mrb[0].mxu0
  %v1294 = vadd.f32 0.0, %v1293
  %v1295 = vpop.f32.mrb[0].mxu0
  %1296 = vmatprep.mubr.bf16.mxu0 %v1226
  %1297 = vmatmul.mubr.bf16.gmra.mrb[0].mxu0 %v1205
  %v1298 = vpop.f32.mrb[0].mxu0
  %v1299 = vadd.f32 0.0, %v1298
  %v1300 = vpop.f32.mrb[0].mxu0
  %v1301 = vpop.f32.mrb[0].mxu0
  %v1302 = vadd.f32 0.0, %v1301
  %v1303 = vpop.f32.mrb[0].mxu0
  %1304 = vdwg.mxu0
  %s1305 = scalar_lea.vmem %s3, 80
  %v1306 = vld [vmem:[%s1305] sm:$0xff]
  %v1307 = vld [vmem:[%s1305 + $0x8] sm:$0xff]
  %v1308 = vld [vmem:[%s1305 + $0x10] sm:$0xff]
  %v1309 = vld [vmem:[%s1305 + $0x18] sm:$0xff]
  %v1310 = vld [vmem:[%s1305 + $0x20] sm:$0xff]
  %v1311 = vld [vmem:[%s1305 + $0x28] sm:$0xff]
  %v1312 = vld [vmem:[%s1305 + $0x30] sm:$0xff]
  %v1313 = vld [vmem:[%s1305 + $0x38] sm:$0xff]
  %v1314 = vld [vmem:[%s1305 + $0x40] sm:$0xff]
  %v1315 = vld [vmem:[%s1305 + $0x48] sm:$0xff]
  %v1326 = vunpack.c.l.b16 %v1306
  %v1327 = vunpack.c.h.b16 %v1306
  %v1328 = vunpack.c.l.b16 %v1307
  %v1329 = vunpack.c.h.b16 %v1307
  %v1330 = vunpack.c.l.b16 %v1308
  %v1331 = vunpack.c.h.b16 %v1308
  %v1332 = vunpack.c.l.b16 %v1309
  %v1333 = vunpack.c.h.b16 %v1309
  %v1334 = vunpack.c.l.b16 %v1310
  %v1335 = vunpack.c.h.b16 %v1310
  %v1336 = vunpack.c.l.b16 %v1311
  %v1337 = vunpack.c.h.b16 %v1311
  %v1338 = vunpack.c.l.b16 %v1312
  %v1339 = vunpack.c.h.b16 %v1312
  %v1340 = vunpack.c.l.b16 %v1313
  %v1341 = vunpack.c.h.b16 %v1313
  %v1342 = vunpack.c.l.b16 %v1314
  %v1343 = vunpack.c.h.b16 %v1314
  %v1344 = vunpack.c.l.b16 %v1315
  %v1345 = vunpack.c.h.b16 %v1315
  %v1346 = vpack.c.b16 %v1328, %v1326
  %v1347 = vpack.c.b16 %v1329, %v1327
  %v1348 = vpack.c.b16 %v1332, %v1330
  %v1349 = vpack.c.b16 %v1333, %v1331
  %v1350 = vpack.c.b16 %v1336, %v1334
  %v1351 = vpack.c.b16 %v1337, %v1335
  %v1352 = vpack.c.b16 %v1340, %v1338
  %v1353 = vpack.c.b16 %v1341, %v1339
  %v1354 = vpack.c.b16 %v1344, %v1342
  %v1355 = vpack.c.b16 %v1345, %v1343
  %v1362 = vsel %vm1212, %v1347, 0
  %v1365 = vsel %vm1212, %v1349, 0
  %v1368 = vsel %vm1212, %v1351, 0
  %v1371 = vsel %vm1212, %v1353, 0
  %v1374 = vsel %vm1212, %v1355, 0
  %1376 = vmatprep.subr.bf16.mxu0 0
  %1377 = vmatpush1.bf16.msra.mxu0 %v1148
  %1378 = vmatprep.subr.bf16.mxu0 0
  %1379 = vmatpush1.bf16.msra.mxu0 %v1149
  %1380 = vmatprep.subr.bf16.mxu0 0
  %1381 = vmatpush1.bf16.msra.mxu0 %v1150
  %1382 = vmatprep.subr.bf16.mxu0 0
  %1383 = vmatpush1.bf16.msra.mxu0 %v1151
  %1384 = vmatprep.subr.bf16.mxu0 0
  %1385 = vmatpush1.bf16.msra.mxu0 %v1152
  %1386 = vmatprep.subr.bf16.mxu0 0
  %1387 = vmatpush1.bf16.msra.mxu0 %v1153
  %1388 = vmatprep.subr.bf16.mxu0 0
  %1389 = vmatpush1.bf16.msra.mxu0 %v1154
  %1390 = vmatprep.subr.bf16.mxu0 0
  %1391 = vmatpush1.bf16.msra.mxu0 %v1155
  %1392 = vmatprep.subr.bf16.mxu0 0
  %1393 = vmatpush1.bf16.msra.mxu0 %v1230
  %1394 = vmatprep.subr.bf16.mxu0 0
  %1395 = vmatpush1.bf16.msra.mxu0 0
  %1396 = vmatprep.subr.bf16.mxu0 0
  %1397 = vmatpush1.bf16.msra.mxu0 0
  %1398 = vmatprep.subr.bf16.mxu0 0
  %1399 = vmatpush1.bf16.msra.mxu0 0
  %1400 = vmatprep.subr.bf16.mxu0 0
  %1401 = vmatpush1.bf16.msra.mxu0 0
  %1402 = vmatprep.subr.bf16.mxu0 0
  %1403 = vmatpush1.bf16.msra.mxu0 0
  %1404 = vmatprep.subr.bf16.mxu0 0
  %1405 = vmatpush1.bf16.msra.mxu0 0
  %1406 = vmatprep.subr.bf16.mxu0 0
  %1407 = vmatpush1.bf16.msra.mxu0 0
  %1408 = vmatprep.mubr.bf16.mxu0 %v1362
  %1409 = vmatmul.mubr.bf16.gmra.mrb[0].mxu0 %v1346
  %v1410 = vpop.f32.mrb[0].mxu0
  %v1411 = vadd.f32 0.0, %v1410
  %v1412 = vpop.f32.mrb[0].mxu0
  %v1413 = vpop.f32.mrb[0].mxu0
  %v1414 = vadd.f32 0.0, %v1413
  %v1415 = vpop.f32.mrb[0].mxu0
  %1416 = vmatprep.mubr.bf16.mxu0 %v1365
  %1417 = vmatmul.mubr.bf16.gmra.mrb[0].mxu0 %v1348
  %v1418 = vpop.f32.mrb[0].mxu0
  %v1419 = vadd.f32 0.0, %v1418
  %v1420 = vpop.f32.mrb[0].mxu0
  %v1421 = vpop.f32.mrb[0].mxu0
  %v1422 = vadd.f32 0.0, %v1421
  %v1423 = vpop.f32.mrb[0].mxu0
  %1424 = vmatprep.mubr.bf16.mxu0 %v1368
  %1425 = vmatmul.mubr.bf16.gmra.mrb[0].mxu0 %v1350
  %v1426 = vpop.f32.mrb[0].mxu0
  %v1427 = vadd.f32 0.0, %v1426
  %v1428 = vpop.f32.mrb[0].mxu0
  %v1429 = vpop.f32.mrb[0].mxu0
  %v1430 = vadd.f32 0.0, %v1429
  %v1431 = vpop.f32.mrb[0].mxu0
  %1432 = vmatprep.mubr.bf16.mxu0 %v1371
  %1433 = vmatmul.mubr.bf16.gmra.mrb[0].mxu0 %v1352
  %v1434 = vpop.f32.mrb[0].mxu0
  %v1435 = vadd.f32 0.0, %v1434
  %v1436 = vpop.f32.mrb[0].mxu0
  %v1437 = vpop.f32.mrb[0].mxu0
  %v1438 = vadd.f32 0.0, %v1437
  %v1439 = vpop.f32.mrb[0].mxu0
  %1440 = vmatprep.mubr.bf16.mxu0 %v1374
  %1441 = vmatmul.mubr.bf16.gmra.mrb[0].mxu0 %v1354
  %v1442 = vpop.f32.mrb[0].mxu0
  %v1443 = vadd.f32 0.0, %v1442
  %v1444 = vpop.f32.mrb[0].mxu0
  %v1445 = vpop.f32.mrb[0].mxu0
  %v1446 = vadd.f32 0.0, %v1445
  %v1447 = vpop.f32.mrb[0].mxu0
  %1448 = vdwg.mxu0
  %v1449 = vmax.f32 %v1267, %v1411
  %v1450 = vmax.f32 %v1270, %v1414
  %v1451 = vmax.f32 %v1275, %v1419
  %v1452 = vmax.f32 %v1278, %v1422
  %v1453 = vmax.f32 %v1283, %v1427
  %v1454 = vmax.f32 %v1286, %v1430
  %v1455 = vmax.f32 %v1291, %v1435
  %v1456 = vmax.f32 %v1294, %v1438
  %v1457 = vmax.f32 %v1299, %v1443
  %v1458 = vmax.f32 %v1302, %v1446
  %v1459 = vpack.c.bf16 %v1450, %v1449
  %v1460 = vpack.c.bf16 %v1452, %v1451
  %v1461 = vpack.c.bf16 %v1454, %v1453
  %v1462 = vpack.c.bf16 %v1456, %v1455
  %v1463 = vpack.c.bf16 %v1458, %v1457
  %vm1464 = vcmask 654336
  %1465 = vst.msk [vmem:[#allocation2] sm:$0xff] %vm1464, %v1459
  %1466 = vst.msk [vmem:[#allocation2 + $0x8] sm:$0xff] %vm1464, %v1460
  %1467 = vst.msk [vmem:[#allocation2 + $0x10] sm:$0xff] %vm1464, %v1461
  %1468 = vst.msk [vmem:[#allocation2 + $0x18] sm:$0xff] %vm1464, %v1462
  %1469 = vst.msk [vmem:[#allocation2 + $0x20] sm:$0xff] %vm1464, %v1463
  %v1470 = vld [vmem:[#allocation2] sm:$0xff]
  %v1471 = vld [vmem:[#allocation2 + $0x8] sm:$0xff]
  %v1472 = vld [vmem:[#allocation2 + $0x10] sm:$0xff]
  %v1473 = vld [vmem:[#allocation2 + $0x18] sm:$0xff]
  %v1474 = vld [vmem:[#allocation2 + $0x20] sm:$0x7f]
  %v1475 = vld [vmem:[%s5] sm:$0xf]
  %v1476 = vld [vmem:[%s5 + $0x4] sm:$0xf]
  %v1477 = vld [vmem:[%s5 + $0x8] sm:$0xf]
  %v1478 = vld [vmem:[%s5 + $0xc] sm:$0xf]
  %v1479 = vld [vmem:[%s5 + $0x10] sm:$0xf]
  %v1480 = vld [vmem:[%s5 + $0x14] sm:$0xf]
  %v1481 = vld [vmem:[%s5 + $0x18] sm:$0xf]
  %v1482 = vld [vmem:[%s5 + $0x1c] sm:$0xf]
  %v1483 = vld [vmem:[%s5 + $0x20] sm:$0xf]
  %v1484 = vld [vmem:[%s5 + $0x24] sm:$0xf]
  %v1485 = vld [vmem:[#allocation2 + $0x20] sm:$0xff]
  %s1486 = scalar_lea.vmem %s5, 40
  %v1487 = vld [vmem:[%s1486] sm:$0xf]
  %v1488 = vld [vmem:[%s1486 + $0x4] sm:$0xf]
  %v1489 = vld [vmem:[%s1486 + $0x8] sm:$0xf]
  %v1490 = vld [vmem:[%s1486 + $0xc] sm:$0xf]
  %v1491 = vld [vmem:[%s1486 + $0x10] sm:$0xf]
  %v1492 = vld [vmem:[%s1486 + $0x14] sm:$0xf]
  %v1493 = vld [vmem:[%s1486 + $0x18] sm:$0xf]
  %v1494 = vld [vmem:[%s1486 + $0x1c] sm:$0xf]
  %v1495 = vld [vmem:[%s1486 + $0x20] sm:$0xf]
  %v1496 = vld [vmem:[%s1486 + $0x24] sm:$0xf]
  %v1498 = vshrl.u32 %v1470, 16
  %v1500 = vshll.u32 %v1470, 16
  %v1502 = vrot.slane %v1500, 1
  %v1503 = vor.u32 %v1498, %v1502
  %v1505 = vshll.u32 %v1471, 16
  %v1507 = vrot.slane %v1505, 1
  %v1508 = vsel %vm134, %v1503, %v1507
  %v1509 = vshrl.u32 %v1471, 16
  %v1511 = vor.u32 %v1509, %v1507
  %v1513 = vshll.u32 %v1472, 16
  %v1515 = vrot.slane %v1513, 1
  %v1516 = vsel %vm134, %v1511, %v1515
  %v1517 = vshrl.u32 %v1472, 16
  %v1519 = vor.u32 %v1517, %v1515
  %v1521 = vshll.u32 %v1473, 16
  %v1523 = vrot.slane %v1521, 1
  %v1524 = vsel %vm134, %v1519, %v1523
  %v1525 = vshrl.u32 %v1473, 16
  %v1527 = vor.u32 %v1525, %v1523
  %v1529 = vshll.u32 %v1485, 16
  %v1531 = vrot.slane %v1529, 1
  %v1532 = vsel %vm134, %v1527, %v1531
  %v1533 = vshrl.u32 %v1485, 16
  %v1535 = vor.u32 %v1533, %v1531
  %v1546 = vunpack.c.l.b16 %v1487
  %v1547 = vunpack.c.l.b16 %v1488
  %v1548 = vunpack.c.l.b16 %v1489
  %v1549 = vunpack.c.l.b16 %v1490
  %v1550 = vunpack.c.l.b16 %v1491
  %v1551 = vunpack.c.l.b16 %v1492
  %v1552 = vunpack.c.l.b16 %v1493
  %v1553 = vunpack.c.l.b16 %v1494
  %v1554 = vunpack.c.l.b16 %v1495
  %v1555 = vunpack.c.l.b16 %v1496
  %v1556 = vpack.c.b16 %v1547, %v1546
  %v1557 = vpack.c.b16 %v1549, %v1548
  %v1558 = vpack.c.b16 %v1551, %v1550
  %v1559 = vpack.c.b16 %v1553, %v1552
  %v1560 = vpack.c.b16 %v1555, %v1554
  %v1567 = vsel %vm1464, %v1508, 0
  %v1570 = vsel %vm1464, %v1516, 0
  %v1573 = vsel %vm1464, %v1524, 0
  %v1576 = vsel %vm1464, %v1532, 0
  %v1579 = vsel %vm1464, %v1535, 0
  %1581 = vmatprep.subr.bf16.mxu0 0
  %1582 = vmatpush1.bf16.msra.mxu0 %v1556
  %1583 = vmatprep.subr.bf16.mxu0 0
  %1584 = vmatpush1.bf16.msra.mxu0 %v1557
  %1585 = vmatprep.subr.bf16.mxu0 0
  %1586 = vmatpush1.bf16.msra.mxu0 %v1558
  %1587 = vmatprep.subr.bf16.mxu0 0
  %1588 = vmatpush1.bf16.msra.mxu0 %v1559
  %1589 = vmatprep.subr.bf16.mxu0 0
  %1590 = vmatpush1.bf16.msra.mxu0 %v1560
  %1591 = vmatprep.subr.bf16.mxu0 0
  %1592 = vmatpush1.bf16.msra.mxu0 0
  %1593 = vmatprep.subr.bf16.mxu0 0
  %1594 = vmatpush1.bf16.msra.mxu0 0
  %1595 = vmatprep.subr.bf16.mxu0 0
  %1596 = vmatpush1.bf16.msra.mxu0 0
  %1597 = vmatprep.subr.bf16.mxu0 0
  %1598 = vmatpush1.bf16.msra.mxu0 0
  %1599 = vmatprep.subr.bf16.mxu0 0
  %1600 = vmatpush1.bf16.msra.mxu0 0
  %1601 = vmatprep.subr.bf16.mxu0 0
  %1602 = vmatpush1.bf16.msra.mxu0 0
  %1603 = vmatprep.subr.bf16.mxu0 0
  %1604 = vmatpush1.bf16.msra.mxu0 0
  %1605 = vmatprep.subr.bf16.mxu0 0
  %1606 = vmatpush1.bf16.msra.mxu0 0
  %1607 = vmatprep.subr.bf16.mxu0 0
  %1608 = vmatpush1.bf16.msra.mxu0 0
  %1609 = vmatprep.subr.bf16.mxu0 0
  %1610 = vmatpush1.bf16.msra.mxu0 0
  %1611 = vmatprep.subr.bf16.mxu0 0
  %1612 = vmatpush1.bf16.msra.mxu0 0
  %1613 = vmatprep.mubr.bf16.mxu0 0
  %1614 = vmatmul.mubr.bf16.gmra.mrb[0].mxu0 %v1567
  %v1615 = vpop.f32.mrb[0].mxu0
  %v1616 = vadd.f32 0.0, %v1615
  %v1617 = vpop.f32.mrb[0].mxu0
  %v1618 = vpop.f32.mrb[0].mxu0
  %v1619 = vadd.f32 0.0, %v1618
  %v1620 = vpop.f32.mrb[0].mxu0
  %1621 = vmatprep.mubr.bf16.mxu0 0
  %1622 = vmatmul.mubr.bf16.gmra.mrb[0].mxu0 %v1570
  %v1623 = vpop.f32.mrb[0].mxu0
  %v1624 = vadd.f32 0.0, %v1623
  %v1625 = vpop.f32.mrb[0].mxu0
  %v1626 = vpop.f32.mrb[0].mxu0
  %v1627 = vadd.f32 0.0, %v1626
  %v1628 = vpop.f32.mrb[0].mxu0
  %1629 = vmatprep.mubr.bf16.mxu0 0
  %1630 = vmatmul.mubr.bf16.gmra.mrb[0].mxu0 %v1573
  %v1631 = vpop.f32.mrb[0].mxu0
  %v1632 = vadd.f32 0.0, %v1631
  %v1633 = vpop.f32.mrb[0].mxu0
  %v1634 = vpop.f32.mrb[0].mxu0
  %v1635 = vadd.f32 0.0, %v1634
  %v1636 = vpop.f32.mrb[0].mxu0
  %1637 = vmatprep.mubr.bf16.mxu0 0
  %1638 = vmatmul.mubr.bf16.gmra.mrb[0].mxu0 %v1576
  %v1639 = vpop.f32.mrb[0].mxu0
  %v1640 = vadd.f32 0.0, %v1639
  %v1641 = vpop.f32.mrb[0].mxu0
  %v1642 = vpop.f32.mrb[0].mxu0
  %v1643 = vadd.f32 0.0, %v1642
  %v1644 = vpop.f32.mrb[0].mxu0
  %1645 = vmatprep.mubr.bf16.mxu0 0
  %1646 = vmatmul.mubr.bf16.gmra.mrb[0].mxu0 %v1579
  %v1647 = vpop.f32.mrb[0].mxu0
  %v1648 = vadd.f32 0.0, %v1647
  %v1649 = vpop.f32.mrb[0].mxu0
  %v1650 = vpop.f32.mrb[0].mxu0
  %v1651 = vadd.f32 0.0, %v1650
  %v1652 = vpop.f32.mrb[0].mxu0
  %1653 = vdwg.mxu0
  %v1664 = vunpack.c.l.b16 %v1475
  %v1665 = vunpack.c.l.b16 %v1476
  %v1666 = vunpack.c.l.b16 %v1477
  %v1667 = vunpack.c.l.b16 %v1478
  %v1668 = vunpack.c.l.b16 %v1479
  %v1669 = vunpack.c.l.b16 %v1480
  %v1670 = vunpack.c.l.b16 %v1481
  %v1671 = vunpack.c.l.b16 %v1482
  %v1672 = vunpack.c.l.b16 %v1483
  %v1673 = vunpack.c.l.b16 %v1484
  %v1674 = vpack.c.b16 %v1665, %v1664
  %v1675 = vpack.c.b16 %v1667, %v1666
  %v1676 = vpack.c.b16 %v1669, %v1668
  %v1677 = vpack.c.b16 %v1671, %v1670
  %v1678 = vpack.c.b16 %v1673, %v1672
  %v1684 = vsel %vm1464, %v1470, 0
  %v1686 = vsel %vm1464, %v1471, 0
  %v1688 = vsel %vm1464, %v1472, 0
  %v1690 = vsel %vm1464, %v1473, 0
  %v1693 = vsel %vm1464, %v1474, 0
  %1695 = vmatprep.subr.bf16.mxu0 0
  %1696 = vmatpush1.bf16.msra.mxu0 %v1674
  %1697 = vmatprep.subr.bf16.mxu0 0
  %1698 = vmatpush1.bf16.msra.mxu0 %v1675
  %1699 = vmatprep.subr.bf16.mxu0 0
  %1700 = vmatpush1.bf16.msra.mxu0 %v1676
  %1701 = vmatprep.subr.bf16.mxu0 0
  %1702 = vmatpush1.bf16.msra.mxu0 %v1677
  %1703 = vmatprep.subr.bf16.mxu0 0
  %1704 = vmatpush1.bf16.msra.mxu0 %v1678
  %1705 = vmatprep.subr.bf16.mxu0 0
  %1706 = vmatpush1.bf16.msra.mxu0 0
  %1707 = vmatprep.subr.bf16.mxu0 0
  %1708 = vmatpush1.bf16.msra.mxu0 0
  %1709 = vmatprep.subr.bf16.mxu0 0
  %1710 = vmatpush1.bf16.msra.mxu0 0
  %1711 = vmatprep.subr.bf16.mxu0 0
  %1712 = vmatpush1.bf16.msra.mxu0 0
  %1713 = vmatprep.subr.bf16.mxu0 0
  %1714 = vmatpush1.bf16.msra.mxu0 0
  %1715 = vmatprep.subr.bf16.mxu0 0
  %1716 = vmatpush1.bf16.msra.mxu0 0
  %1717 = vmatprep.subr.bf16.mxu0 0
  %1718 = vmatpush1.bf16.msra.mxu0 0
  %1719 = vmatprep.subr.bf16.mxu0 0
  %1720 = vmatpush1.bf16.msra.mxu0 0
  %1721 = vmatprep.subr.bf16.mxu0 0
  %1722 = vmatpush1.bf16.msra.mxu0 0
  %1723 = vmatprep.subr.bf16.mxu0 0
  %1724 = vmatpush1.bf16.msra.mxu0 0
  %1725 = vmatprep.subr.bf16.mxu0 0
  %1726 = vmatpush1.bf16.msra.mxu0 0
  %1727 = vmatprep.mubr.bf16.mxu0 0
  %1728 = vmatmul.mubr.bf16.gmra.mrb[0].mxu0 %v1684
  %v1729 = vpop.f32.mrb[0].mxu0
  %v1730 = vadd.f32 %v1616, %v1729
  %v1731 = vpop.f32.mrb[0].mxu0
  %v1732 = vpop.f32.mrb[0].mxu0
  %v1733 = vadd.f32 %v1619, %v1732
  %v1734 = vpop.f32.mrb[0].mxu0
  %1735 = vmatprep.mubr.bf16.mxu0 0
  %1736 = vmatmul.mubr.bf16.gmra.mrb[0].mxu0 %v1686
  %v1737 = vpop.f32.mrb[0].mxu0
  %v1738 = vadd.f32 %v1624, %v1737
  %v1739 = vpop.f32.mrb[0].mxu0
  %v1740 = vpop.f32.mrb[0].mxu0
  %v1741 = vadd.f32 %v1627, %v1740
  %v1742 = vpop.f32.mrb[0].mxu0
  %1743 = vmatprep.mubr.bf16.mxu0 0
  %1744 = vmatmul.mubr.bf16.gmra.mrb[0].mxu0 %v1688
  %v1745 = vpop.f32.mrb[0].mxu0
  %v1746 = vadd.f32 %v1632, %v1745
  %v1747 = vpop.f32.mrb[0].mxu0
  %v1748 = vpop.f32.mrb[0].mxu0
  %v1749 = vadd.f32 %v1635, %v1748
  %v1750 = vpop.f32.mrb[0].mxu0
  %1751 = vmatprep.mubr.bf16.mxu0 0
  %1752 = vmatmul.mubr.bf16.gmra.mrb[0].mxu0 %v1690
  %v1753 = vpop.f32.mrb[0].mxu0
  %v1754 = vadd.f32 %v1640, %v1753
  %v1755 = vpop.f32.mrb[0].mxu0
  %v1756 = vpop.f32.mrb[0].mxu0
  %v1757 = vadd.f32 %v1643, %v1756
  %v1758 = vpop.f32.mrb[0].mxu0
  %1759 = vmatprep.mubr.bf16.mxu0 0
  %1760 = vmatmul.mubr.bf16.gmra.mrb[0].mxu0 %v1693
  %v1761 = vpop.f32.mrb[0].mxu0
  %v1762 = vadd.f32 %v1648, %v1761
  %v1763 = vpop.f32.mrb[0].mxu0
  %v1764 = vpop.f32.mrb[0].mxu0
  %v1765 = vadd.f32 %v1651, %v1764
  %v1766 = vpop.f32.mrb[0].mxu0
  %1767 = vdwg.mxu0
  %v1768 = vld [vmem:[#allocation2] sm:$0xfe]
  %s1769 = scalar_lea.vmem %s5, 80
  %v1770 = vld [vmem:[%s1769] sm:$0xf]
  %v1771 = vld [vmem:[%s1769 + $0x4] sm:$0xf]
  %v1772 = vld [vmem:[%s1769 + $0x8] sm:$0xf]
  %v1773 = vld [vmem:[%s1769 + $0xc] sm:$0xf]
  %v1774 = vld [vmem:[%s1769 + $0x10] sm:$0xf]
  %v1775 = vld [vmem:[%s1769 + $0x14] sm:$0xf]
  %v1776 = vld [vmem:[%s1769 + $0x18] sm:$0xf]
  %v1777 = vld [vmem:[%s1769 + $0x1c] sm:$0xf]
  %v1778 = vld [vmem:[%s1769 + $0x20] sm:$0xf]
  %v1779 = vld [vmem:[%s1769 + $0x24] sm:$0xf]
  %v1785 = vrot.slane %v1768, 1
  %v1786 = vrot.slane %v1471, 1
  %v1787 = vsel %vm541, %v1785, %v1786
  %v1788 = vrot.slane %v1472, 1
  %v1789 = vsel %vm541, %v1786, %v1788
  %v1790 = vrot.slane %v1473, 1
  %v1791 = vsel %vm541, %v1788, %v1790
  %v1792 = vrot.slane %v1485, 1
  %v1793 = vsel %vm541, %v1790, %v1792
  %v1804 = vunpack.c.l.b16 %v1770
  %v1805 = vunpack.c.l.b16 %v1771
  %v1806 = vunpack.c.l.b16 %v1772
  %v1807 = vunpack.c.l.b16 %v1773
  %v1808 = vunpack.c.l.b16 %v1774
  %v1809 = vunpack.c.l.b16 %v1775
  %v1810 = vunpack.c.l.b16 %v1776
  %v1811 = vunpack.c.l.b16 %v1777
  %v1812 = vunpack.c.l.b16 %v1778
  %v1813 = vunpack.c.l.b16 %v1779
  %v1814 = vpack.c.b16 %v1805, %v1804
  %v1815 = vpack.c.b16 %v1807, %v1806
  %v1816 = vpack.c.b16 %v1809, %v1808
  %v1817 = vpack.c.b16 %v1811, %v1810
  %v1818 = vpack.c.b16 %v1813, %v1812
  %v1825 = vsel %vm1464, %v1787, 0
  %v1828 = vsel %vm1464, %v1789, 0
  %v1831 = vsel %vm1464, %v1791, 0
  %v1834 = vsel %vm1464, %v1793, 0
  %v1837 = vsel %vm1464, %v1792, 0
  %1839 = vmatprep.subr.bf16.mxu0 0
  %1840 = vmatpush1.bf16.msra.mxu0 %v1814
  %1841 = vmatprep.subr.bf16.mxu0 0
  %1842 = vmatpush1.bf16.msra.mxu0 %v1815
  %1843 = vmatprep.subr.bf16.mxu0 0
  %1844 = vmatpush1.bf16.msra.mxu0 %v1816
  %1845 = vmatprep.subr.bf16.mxu0 0
  %1846 = vmatpush1.bf16.msra.mxu0 %v1817
  %1847 = vmatprep.subr.bf16.mxu0 0
  %1848 = vmatpush1.bf16.msra.mxu0 %v1818
  %1849 = vmatprep.subr.bf16.mxu0 0
  %1850 = vmatpush1.bf16.msra.mxu0 0
  %1851 = vmatprep.subr.bf16.mxu0 0
  %1852 = vmatpush1.bf16.msra.mxu0 0
  %1853 = vmatprep.subr.bf16.mxu0 0
  %1854 = vmatpush1.bf16.msra.mxu0 0
  %1855 = vmatprep.subr.bf16.mxu0 0
  %1856 = vmatpush1.bf16.msra.mxu0 0
  %1857 = vmatprep.subr.bf16.mxu0 0
  %1858 = vmatpush1.bf16.msra.mxu0 0
  %1859 = vmatprep.subr.bf16.mxu0 0
  %1860 = vmatpush1.bf16.msra.mxu0 0
  %1861 = vmatprep.subr.bf16.mxu0 0
  %1862 = vmatpush1.bf16.msra.mxu0 0
  %1863 = vmatprep.subr.bf16.mxu0 0
  %1864 = vmatpush1.bf16.msra.mxu0 0
  %1865 = vmatprep.subr.bf16.mxu0 0
  %1866 = vmatpush1.bf16.msra.mxu0 0
  %1867 = vmatprep.subr.bf16.mxu0 0
  %1868 = vmatpush1.bf16.msra.mxu0 0
  %1869 = vmatprep.subr.bf16.mxu0 0
  %1870 = vmatpush1.bf16.msra.mxu0 0
  %1871 = vmatprep.mubr.bf16.mxu0 0
  %1872 = vmatmul.mubr.bf16.gmra.mrb[0].mxu0 %v1825
  %v1873 = vpop.f32.mrb[0].mxu0
  %v1874 = vadd.f32 0.0, %v1873
  %v1875 = vpop.f32.mrb[0].mxu0
  %v1876 = vpop.f32.mrb[0].mxu0
  %v1877 = vadd.f32 0.0, %v1876
  %v1878 = vpop.f32.mrb[0].mxu0
  %1879 = vmatprep.mubr.bf16.mxu0 0
  %1880 = vmatmul.mubr.bf16.gmra.mrb[0].mxu0 %v1828
  %v1881 = vpop.f32.mrb[0].mxu0
  %v1882 = vadd.f32 0.0, %v1881
  %v1883 = vpop.f32.mrb[0].mxu0
  %v1884 = vpop.f32.mrb[0].mxu0
  %v1885 = vadd.f32 0.0, %v1884
  %v1886 = vpop.f32.mrb[0].mxu0
  %1887 = vmatprep.mubr.bf16.mxu0 0
  %1888 = vmatmul.mubr.bf16.gmra.mrb[0].mxu0 %v1831
  %v1889 = vpop.f32.mrb[0].mxu0
  %v1890 = vadd.f32 0.0, %v1889
  %v1891 = vpop.f32.mrb[0].mxu0
  %v1892 = vpop.f32.mrb[0].mxu0
  %v1893 = vadd.f32 0.0, %v1892
  %v1894 = vpop.f32.mrb[0].mxu0
  %1895 = vmatprep.mubr.bf16.mxu0 0
  %1896 = vmatmul.mubr.bf16.gmra.mrb[0].mxu0 %v1834
  %v1897 = vpop.f32.mrb[0].mxu0
  %v1898 = vadd.f32 0.0, %v1897
  %v1899 = vpop.f32.mrb[0].mxu0
  %v1900 = vpop.f32.mrb[0].mxu0
  %v1901 = vadd.f32 0.0, %v1900
  %v1902 = vpop.f32.mrb[0].mxu0
  %1903 = vmatprep.mubr.bf16.mxu0 0
  %1904 = vmatmul.mubr.bf16.gmra.mrb[0].mxu0 %v1837
  %v1905 = vpop.f32.mrb[0].mxu0
  %v1906 = vadd.f32 0.0, %v1905
  %v1907 = vpop.f32.mrb[0].mxu0
  %v1908 = vpop.f32.mrb[0].mxu0
  %v1909 = vadd.f32 0.0, %v1908
  %v1910 = vpop.f32.mrb[0].mxu0
  %1911 = vdwg.mxu0
  %v1912 = vadd.f32 %v1730, %v1874
  %v1913 = vadd.f32 %v1733, %v1877
  %v1914 = vadd.f32 %v1738, %v1882
  %v1915 = vadd.f32 %v1741, %v1885
  %v1916 = vadd.f32 %v1746, %v1890
  %v1917 = vadd.f32 %v1749, %v1893
  %v1918 = vadd.f32 %v1754, %v1898
  %v1919 = vadd.f32 %v1757, %v1901
  %v1920 = vadd.f32 %v1762, %v1906
  %v1921 = vadd.f32 %v1765, %v1909
  %v1922 = vld [vmem:[%s8] sm:$0x1]
  %v1924 = vlaneseq
  %v1925 = vshrl.u32 %v1924, 7
  %v1926 = vsub.s32 0, %v1925
  %v1927 = vrot.slane %v1922, %v1926
  %v1929 = vadd.f32 %v1912, %v1927
  %v1930 = vadd.f32 %v1913, %v1927
  %v1931 = vadd.f32 %v1914, %v1927
  %v1932 = vadd.f32 %v1915, %v1927
  %v1933 = vadd.f32 %v1916, %v1927
  %v1934 = vadd.f32 %v1917, %v1927
  %v1935 = vadd.f32 %v1918, %v1927
  %v1936 = vadd.f32 %v1919, %v1927
  %v1937 = vadd.f32 %v1920, %v1927
  %v1938 = vadd.f32 %v1921, %v1927
  %v1939 = vmax.f32 %v1929, 0.0
  %v1940 = vmax.f32 %v1930, 0.0
  %v1941 = vmax.f32 %v1931, 0.0
  %v1942 = vmax.f32 %v1932, 0.0
  %v1943 = vmax.f32 %v1933, 0.0
  %v1944 = vmax.f32 %v1934, 0.0
  %v1945 = vmax.f32 %v1935, 0.0
  %v1946 = vmax.f32 %v1936, 0.0
  %v1947 = vmax.f32 %v1937, 0.0
  %v1948 = vmax.f32 %v1938, 0.0
  %v1949 = vpack.c.bf16 %v1940, %v1939
  %v1950 = vpack.c.bf16 %v1942, %v1941
  %v1951 = vpack.c.bf16 %v1944, %v1943
  %v1952 = vpack.c.bf16 %v1946, %v1945
  %v1953 = vpack.c.bf16 %v1948, %v1947
  %v1954 = vld [vmem:[%s6] sm:$0xf]
  %v1955 = vld [vmem:[%s6 + $0x4] sm:$0xf]
  %v1956 = vld [vmem:[%s6 + $0x8] sm:$0xf]
  %v1957 = vld [vmem:[%s6 + $0xc] sm:$0xf]
  %v1958 = vld [vmem:[%s6 + $0x10] sm:$0xf]
  %v1959 = vld [vmem:[%s6 + $0x14] sm:$0xf]
  %v1960 = vld [vmem:[%s6 + $0x18] sm:$0xf]
  %v1961 = vld [vmem:[%s6 + $0x1c] sm:$0xf]
  %v1962 = vld [vmem:[%s6 + $0x20] sm:$0xf]
  %v1963 = vld [vmem:[%s6 + $0x24] sm:$0xf]
  %v1964 = vld [vmem:[%s6 + $0x28] sm:$0xf]
  %v1965 = vld [vmem:[%s6 + $0x2c] sm:$0xf]
  %v1966 = vld [vmem:[%s6 + $0x30] sm:$0xf]
  %v1967 = vld [vmem:[%s6 + $0x34] sm:$0xf]
  %v1968 = vld [vmem:[%s6 + $0x38] sm:$0xf]
  %v1969 = vld [vmem:[%s6 + $0x3c] sm:$0xf]
  %v1986 = vunpack.c.l.b16 %v1954
  %v1987 = vunpack.c.l.b16 %v1955
  %v1988 = vunpack.c.l.b16 %v1956
  %v1989 = vunpack.c.l.b16 %v1957
  %v1990 = vunpack.c.l.b16 %v1958
  %v1991 = vunpack.c.l.b16 %v1959
  %v1992 = vunpack.c.l.b16 %v1960
  %v1993 = vunpack.c.l.b16 %v1961
  %v1994 = vunpack.c.l.b16 %v1962
  %v1995 = vunpack.c.l.b16 %v1963
  %v1996 = vunpack.c.l.b16 %v1964
  %v1997 = vunpack.c.l.b16 %v1965
  %v1998 = vunpack.c.l.b16 %v1966
  %v1999 = vunpack.c.l.b16 %v1967
  %v2000 = vunpack.c.l.b16 %v1968
  %v2001 = vunpack.c.l.b16 %v1969
  %v2002 = vpack.c.b16 %v1987, %v1986
  %v2003 = vpack.c.b16 %v1989, %v1988
  %v2004 = vpack.c.b16 %v1991, %v1990
  %v2005 = vpack.c.b16 %v1993, %v1992
  %v2006 = vpack.c.b16 %v1995, %v1994
  %v2007 = vpack.c.b16 %v1997, %v1996
  %v2008 = vpack.c.b16 %v1999, %v1998
  %v2009 = vpack.c.b16 %v2001, %v2000
  %2018 = vmatprep.subr.bf16.mxu0 0
  %2019 = vmatpush1.bf16.msra.mxu0 %v2002
  %2020 = vmatprep.subr.bf16.mxu0 0
  %2021 = vmatpush1.bf16.msra.mxu0 %v2003
  %2022 = vmatprep.subr.bf16.mxu0 0
  %2023 = vmatpush1.bf16.msra.mxu0 %v2004
  %2024 = vmatprep.subr.bf16.mxu0 0
  %2025 = vmatpush1.bf16.msra.mxu0 %v2005
  %2026 = vmatprep.subr.bf16.mxu0 0
  %2027 = vmatpush1.bf16.msra.mxu0 %v2006
  %2028 = vmatprep.subr.bf16.mxu0 0
  %2029 = vmatpush1.bf16.msra.mxu0 %v2007
  %2030 = vmatprep.subr.bf16.mxu0 0
  %2031 = vmatpush1.bf16.msra.mxu0 %v2008
  %2032 = vmatprep.subr.bf16.mxu0 0
  %2033 = vmatpush1.bf16.msra.mxu0 %v2009
  %2034 = vmatprep.subr.bf16.mxu0 0
  %2035 = vmatpush1.bf16.msra.mxu0 0
  %2036 = vmatprep.subr.bf16.mxu0 0
  %2037 = vmatpush1.bf16.msra.mxu0 0
  %2038 = vmatprep.subr.bf16.mxu0 0
  %2039 = vmatpush1.bf16.msra.mxu0 0
  %2040 = vmatprep.subr.bf16.mxu0 0
  %2041 = vmatpush1.bf16.msra.mxu0 0
  %2042 = vmatprep.subr.bf16.mxu0 0
  %2043 = vmatpush1.bf16.msra.mxu0 0
  %2044 = vmatprep.subr.bf16.mxu0 0
  %2045 = vmatpush1.bf16.msra.mxu0 0
  %2046 = vmatprep.subr.bf16.mxu0 0
  %2047 = vmatpush1.bf16.msra.mxu0 0
  %2048 = vmatprep.subr.bf16.mxu0 0
  %2049 = vmatpush1.bf16.msra.mxu0 0
  %2050 = vmatprep.mubr.bf16.mxu0 0
  %2051 = vmatmul.mubr.bf16.gmra.mrb[0].mxu0 %v1949
  %v2052 = vpop.f32.mrb[0].mxu0
  %v2053 = vadd.f32 0.0, %v2052
  %v2054 = vpop.f32.mrb[0].mxu0
  %v2055 = vpop.f32.mrb[0].mxu0
  %v2056 = vadd.f32 0.0, %v2055
  %v2057 = vpop.f32.mrb[0].mxu0
  %2058 = vmatprep.mubr.bf16.mxu0 0
  %2059 = vmatmul.mubr.bf16.gmra.mrb[0].mxu0 %v1950
  %v2060 = vpop.f32.mrb[0].mxu0
  %v2061 = vadd.f32 0.0, %v2060
  %v2062 = vpop.f32.mrb[0].mxu0
  %v2063 = vpop.f32.mrb[0].mxu0
  %v2064 = vadd.f32 0.0, %v2063
  %v2065 = vpop.f32.mrb[0].mxu0
  %2066 = vmatprep.mubr.bf16.mxu0 0
  %2067 = vmatmul.mubr.bf16.gmra.mrb[0].mxu0 %v1951
  %v2068 = vpop.f32.mrb[0].mxu0
  %v2069 = vadd.f32 0.0, %v2068
  %v2070 = vpop.f32.mrb[0].mxu0
  %v2071 = vpop.f32.mrb[0].mxu0
  %v2072 = vadd.f32 0.0, %v2071
  %v2073 = vpop.f32.mrb[0].mxu0
  %2074 = vmatprep.mubr.bf16.mxu0 0
  %2075 = vmatmul.mubr.bf16.gmra.mrb[0].mxu0 %v1952
  %v2076 = vpop.f32.mrb[0].mxu0
  %v2077 = vadd.f32 0.0, %v2076
  %v2078 = vpop.f32.mrb[0].mxu0
  %v2079 = vpop.f32.mrb[0].mxu0
  %v2080 = vadd.f32 0.0, %v2079
  %v2081 = vpop.f32.mrb[0].mxu0
  %2082 = vmatprep.mubr.bf16.mxu0 0
  %2083 = vmatmul.mubr.bf16.gmra.mrb[0].mxu0 %v1953
  %v2084 = vpop.f32.mrb[0].mxu0
  %v2085 = vadd.f32 0.0, %v2084
  %v2086 = vpop.f32.mrb[0].mxu0
  %v2087 = vpop.f32.mrb[0].mxu0
  %v2088 = vadd.f32 0.0, %v2087
  %v2089 = vpop.f32.mrb[0].mxu0
  %2090 = vdwg.mxu0
  %s2091 = scalar_lea.vmem %s6, 64
  %v2092 = vld [vmem:[%s2091] sm:$0xf]
  %v2093 = vld [vmem:[%s2091 + $0x4] sm:$0xf]
  %v2094 = vld [vmem:[%s2091 + $0x8] sm:$0xf]
  %v2095 = vld [vmem:[%s2091 + $0xc] sm:$0xf]
  %v2096 = vld [vmem:[%s2091 + $0x10] sm:$0xf]
  %v2097 = vld [vmem:[%s2091 + $0x14] sm:$0xf]
  %v2098 = vld [vmem:[%s2091 + $0x18] sm:$0xf]
  %v2099 = vld [vmem:[%s2091 + $0x1c] sm:$0xf]
  %v2100 = vld [vmem:[%s2091 + $0x20] sm:$0xf]
  %v2101 = vld [vmem:[%s2091 + $0x24] sm:$0xf]
  %v2102 = vld [vmem:[%s2091 + $0x28] sm:$0xf]
  %v2103 = vld [vmem:[%s2091 + $0x2c] sm:$0xf]
  %v2104 = vld [vmem:[%s2091 + $0x30] sm:$0xf]
  %v2105 = vld [vmem:[%s2091 + $0x34] sm:$0xf]
  %v2106 = vld [vmem:[%s2091 + $0x38] sm:$0xf]
  %v2107 = vld [vmem:[%s2091 + $0x3c] sm:$0xf]
  %v2124 = vunpack.c.l.b16 %v2092
  %v2125 = vunpack.c.l.b16 %v2093
  %v2126 = vunpack.c.l.b16 %v2094
  %v2127 = vunpack.c.l.b16 %v2095
  %v2128 = vunpack.c.l.b16 %v2096
  %v2129 = vunpack.c.l.b16 %v2097
  %v2130 = vunpack.c.l.b16 %v2098
  %v2131 = vunpack.c.l.b16 %v2099
  %v2132 = vunpack.c.l.b16 %v2100
  %v2133 = vunpack.c.l.b16 %v2101
  %v2134 = vunpack.c.l.b16 %v2102
  %v2135 = vunpack.c.l.b16 %v2103
  %v2136 = vunpack.c.l.b16 %v2104
  %v2137 = vunpack.c.l.b16 %v2105
  %v2138 = vunpack.c.l.b16 %v2106
  %v2139 = vunpack.c.l.b16 %v2107
  %v2140 = vpack.c.b16 %v2125, %v2124
  %v2141 = vpack.c.b16 %v2127, %v2126
  %v2142 = vpack.c.b16 %v2129, %v2128
  %v2143 = vpack.c.b16 %v2131, %v2130
  %v2144 = vpack.c.b16 %v2133, %v2132
  %v2145 = vpack.c.b16 %v2135, %v2134
  %v2146 = vpack.c.b16 %v2137, %v2136
  %v2147 = vpack.c.b16 %v2139, %v2138
  %2156 = vmatprep.subr.bf16.mxu0 0
  %2157 = vmatpush1.bf16.msra.mxu0 %v2140
  %2158 = vmatprep.subr.bf16.mxu0 0
  %2159 = vmatpush1.bf16.msra.mxu0 %v2141
  %2160 = vmatprep.subr.bf16.mxu0 0
  %2161 = vmatpush1.bf16.msra.mxu0 %v2142
  %2162 = vmatprep.subr.bf16.mxu0 0
  %2163 = vmatpush1.bf16.msra.mxu0 %v2143
  %2164 = vmatprep.subr.bf16.mxu0 0
  %2165 = vmatpush1.bf16.msra.mxu0 %v2144
  %2166 = vmatprep.subr.bf16.mxu0 0
  %2167 = vmatpush1.bf16.msra.mxu0 %v2145
  %2168 = vmatprep.subr.bf16.mxu0 0
  %2169 = vmatpush1.bf16.msra.mxu0 %v2146
  %2170 = vmatprep.subr.bf16.mxu0 0
  %2171 = vmatpush1.bf16.msra.mxu0 %v2147
  %2172 = vmatprep.subr.bf16.mxu0 0
  %2173 = vmatpush1.bf16.msra.mxu0 0
  %2174 = vmatprep.subr.bf16.mxu0 0
  %2175 = vmatpush1.bf16.msra.mxu0 0
  %2176 = vmatprep.subr.bf16.mxu0 0
  %2177 = vmatpush1.bf16.msra.mxu0 0
  %2178 = vmatprep.subr.bf16.mxu0 0
  %2179 = vmatpush1.bf16.msra.mxu0 0
  %2180 = vmatprep.subr.bf16.mxu0 0
  %2181 = vmatpush1.bf16.msra.mxu0 0
  %2182 = vmatprep.subr.bf16.mxu0 0
  %2183 = vmatpush1.bf16.msra.mxu0 0
  %2184 = vmatprep.subr.bf16.mxu0 0
  %2185 = vmatpush1.bf16.msra.mxu0 0
  %2186 = vmatprep.subr.bf16.mxu0 0
  %2187 = vmatpush1.bf16.msra.mxu0 0
  %2188 = vmatprep.mubr.bf16.mxu0 0
  %2189 = vmatmul.mubr.bf16.gmra.mrb[0].mxu0 %v1949
  %v2190 = vpop.f32.mrb[0].mxu0
  %v2191 = vadd.f32 0.0, %v2190
  %v2192 = vpop.f32.mrb[0].mxu0
  %v2193 = vpop.f32.mrb[0].mxu0
  %v2194 = vadd.f32 0.0, %v2193
  %v2195 = vpop.f32.mrb[0].mxu0
  %2196 = vmatprep.mubr.bf16.mxu0 0
  %2197 = vmatmul.mubr.bf16.gmra.mrb[0].mxu0 %v1950
  %v2198 = vpop.f32.mrb[0].mxu0
  %v2199 = vadd.f32 0.0, %v2198
  %v2200 = vpop.f32.mrb[0].mxu0
  %v2201 = vpop.f32.mrb[0].mxu0
  %v2202 = vadd.f32 0.0, %v2201
  %v2203 = vpop.f32.mrb[0].mxu0
  %2204 = vmatprep.mubr.bf16.mxu0 0
  %2205 = vmatmul.mubr.bf16.gmra.mrb[0].mxu0 %v1951
  %v2206 = vpop.f32.mrb[0].mxu0
  %v2207 = vadd.f32 0.0, %v2206
  %v2208 = vpop.f32.mrb[0].mxu0
  %v2209 = vpop.f32.mrb[0].mxu0
  %v2210 = vadd.f32 0.0, %v2209
  %v2211 = vpop.f32.mrb[0].mxu0
  %2212 = vmatprep.mubr.bf16.mxu0 0
  %2213 = vmatmul.mubr.bf16.gmra.mrb[0].mxu0 %v1952
  %v2214 = vpop.f32.mrb[0].mxu0
  %v2215 = vadd.f32 0.0, %v2214
  %v2216 = vpop.f32.mrb[0].mxu0
  %v2217 = vpop.f32.mrb[0].mxu0
  %v2218 = vadd.f32 0.0, %v2217
  %v2219 = vpop.f32.mrb[0].mxu0
  %2220 = vmatprep.mubr.bf16.mxu0 0
  %2221 = vmatmul.mubr.bf16.gmra.mrb[0].mxu0 %v1953
  %v2222 = vpop.f32.mrb[0].mxu0
  %v2223 = vadd.f32 0.0, %v2222
  %v2224 = vpop.f32.mrb[0].mxu0
  %v2225 = vpop.f32.mrb[0].mxu0
  %v2226 = vadd.f32 0.0, %v2225
  %v2227 = vpop.f32.mrb[0].mxu0
  %2228 = vdwg.mxu0
  %v2229 = vmax.f32 %v2053, %v2191
  %v2230 = vmax.f32 %v2056, %v2194
  %v2231 = vmax.f32 %v2061, %v2199
  %v2232 = vmax.f32 %v2064, %v2202
  %v2233 = vmax.f32 %v2069, %v2207
  %v2234 = vmax.f32 %v2072, %v2210
  %v2235 = vmax.f32 %v2077, %v2215
  %v2236 = vmax.f32 %v2080, %v2218
  %v2237 = vmax.f32 %v2085, %v2223
  %v2238 = vmax.f32 %v2088, %v2226
  %v2239 = vpack.c.bf16 %v2230, %v2229
  %v2240 = vpack.c.bf16 %v2232, %v2231
  %v2241 = vpack.c.bf16 %v2234, %v2233
  %v2242 = vpack.c.bf16 %v2236, %v2235
  %v2243 = vpack.c.bf16 %v2238, %v2237
  %v2244 = vld [vmem:[%s7] sm:$0xf]
  %v2245 = vld [vmem:[%s7 + $0x4] sm:$0xf]
  %v2246 = vld [vmem:[%s7 + $0x8] sm:$0xf]
  %v2247 = vld [vmem:[%s7 + $0xc] sm:$0xf]
  %v2248 = vld [vmem:[%s7 + $0x10] sm:$0xf]
  %v2249 = vld [vmem:[%s7 + $0x14] sm:$0xf]
  %v2256 = vunpack.c.l.b16 %v2244
  %v2257 = vunpack.c.l.b16 %v2245
  %v2258 = vunpack.c.l.b16 %v2246
  %v2259 = vunpack.c.l.b16 %v2247
  %v2260 = vunpack.c.l.b16 %v2248
  %v2261 = vunpack.c.l.b16 %v2249
  %v2262 = vpack.c.b16 %v2257, %v2256
  %v2263 = vpack.c.b16 %v2259, %v2258
  %v2264 = vpack.c.b16 %v2261, %v2260
  %vm2265 = vcmask 637952
  %v2267 = vsel %vm2265, %v2262, 0
  %v2270 = vsel %vm2265, %v2263, 0
  %v2273 = vsel %vm2265, %v2264, 0
  %v2276 = vsel %vm1228, %v2243, 0
  %2278 = vmatprep.subr.bf16.mxu0 0
  %2279 = vmatpush1.bf16.msra.mxu0 %v2239
  %2280 = vmatprep.subr.bf16.mxu0 0
  %2281 = vmatpush1.bf16.msra.mxu0 %v2240
  %2282 = vmatprep.subr.bf16.mxu0 0
  %2283 = vmatpush1.bf16.msra.mxu0 %v2241
  %2284 = vmatprep.subr.bf16.mxu0 0
  %2285 = vmatpush1.bf16.msra.mxu0 %v2242
  %2286 = vmatprep.subr.bf16.mxu0 0
  %2287 = vmatpush1.bf16.msra.mxu0 %v2276
  %2288 = vmatprep.subr.bf16.mxu0 0
  %2289 = vmatpush1.bf16.msra.mxu0 0
  %2290 = vmatprep.subr.bf16.mxu0 0
  %2291 = vmatpush1.bf16.msra.mxu0 0
  %2292 = vmatprep.subr.bf16.mxu0 0
  %2293 = vmatpush1.bf16.msra.mxu0 0
  %2294 = vmatprep.subr.bf16.mxu0 0
  %2295 = vmatpush1.bf16.msra.mxu0 0
  %2296 = vmatprep.subr.bf16.mxu0 0
  %2297 = vmatpush1.bf16.msra.mxu0 0
  %2298 = vmatprep.subr.bf16.mxu0 0
  %2299 = vmatpush1.bf16.msra.mxu0 0
  %2300 = vmatprep.subr.bf16.mxu0 0
  %2301 = vmatpush1.bf16.msra.mxu0 0
  %2302 = vmatprep.subr.bf16.mxu0 0
  %2303 = vmatpush1.bf16.msra.mxu0 0
  %2304 = vmatprep.subr.bf16.mxu0 0
  %2305 = vmatpush1.bf16.msra.mxu0 0
  %2306 = vmatprep.subr.bf16.mxu0 0
  %2307 = vmatpush1.bf16.msra.mxu0 0
  %2308 = vmatprep.subr.bf16.mxu0 0
  %2309 = vmatpush1.bf16.msra.mxu0 0
  %2310 = vmatprep.mubr.bf16.mxu0 0
  %2311 = vmatmul.mubr.bf16.gmra.mrb[0].mxu0 %v2267
  %v2312 = vpop.f32.mrb[0].mxu0
  %v2313 = vadd.f32 0.0, %v2312
  %v2314 = vpop.f32.mrb[0].mxu0
  %v2315 = vpop.f32.mrb[0].mxu0
  %v2316 = vadd.f32 0.0, %v2315
  %v2317 = vpop.f32.mrb[0].mxu0
  %2318 = vmatprep.mubr.bf16.mxu0 0
  %2319 = vmatmul.mubr.bf16.gmra.mrb[0].mxu0 %v2270
  %v2320 = vpop.f32.mrb[0].mxu0
  %v2321 = vadd.f32 0.0, %v2320
  %v2322 = vpop.f32.mrb[0].mxu0
  %v2323 = vpop.f32.mrb[0].mxu0
  %v2324 = vadd.f32 0.0, %v2323
  %v2325 = vpop.f32.mrb[0].mxu0
  %2326 = vmatprep.mubr.bf16.mxu0 0
  %2327 = vmatmul.mubr.bf16.gmra.mrb[0].mxu0 %v2273
  %v2328 = vpop.f32.mrb[0].mxu0
  %v2329 = vadd.f32 0.0, %v2328
  %v2330 = vpop.f32.mrb[0].mxu0
  %v2331 = vpop.f32.mrb[0].mxu0
  %v2332 = vadd.f32 0.0, %v2331
  %v2333 = vpop.f32.mrb[0].mxu0
  %2334 = vdwg.mxu0
  %s2335 = scalar_lea.vmem %s7, 24
  %v2336 = vld [vmem:[%s2335] sm:$0xf]
  %v2337 = vld [vmem:[%s2335 + $0x4] sm:$0xf]
  %v2338 = vld [vmem:[%s2335 + $0x8] sm:$0xf]
  %v2339 = vld [vmem:[%s2335 + $0xc] sm:$0xf]
  %v2340 = vld [vmem:[%s2335 + $0x10] sm:$0xf]
  %v2341 = vld [vmem:[%s2335 + $0x14] sm:$0xf]
  %v2348 = vunpack.c.l.b16 %v2336
  %v2349 = vunpack.c.l.b16 %v2337
  %v2350 = vunpack.c.l.b16 %v2338
  %v2351 = vunpack.c.l.b16 %v2339
  %v2352 = vunpack.c.l.b16 %v2340
  %v2353 = vunpack.c.l.b16 %v2341
  %v2354 = vpack.c.b16 %v2349, %v2348
  %v2355 = vpack.c.b16 %v2351, %v2350
  %v2356 = vpack.c.b16 %v2353, %v2352
  %v2358 = vsel %vm2265, %v2354, 0
  %v2361 = vsel %vm2265, %v2355, 0
  %v2364 = vsel %vm2265, %v2356, 0
  %2366 = vmatprep.subr.bf16.mxu0 0
  %2367 = vmatpush1.bf16.msra.mxu0 %v2239
  %2368 = vmatprep.subr.bf16.mxu0 0
  %2369 = vmatpush1.bf16.msra.mxu0 %v2240
  %2370 = vmatprep.subr.bf16.mxu0 0
  %2371 = vmatpush1.bf16.msra.mxu0 %v2241
  %2372 = vmatprep.subr.bf16.mxu0 0
  %2373 = vmatpush1.bf16.msra.mxu0 %v2242
  %2374 = vmatprep.subr.bf16.mxu0 0
  %2375 = vmatpush1.bf16.msra.mxu0 %v2276
  %2376 = vmatprep.subr.bf16.mxu0 0
  %2377 = vmatpush1.bf16.msra.mxu0 0
  %2378 = vmatprep.subr.bf16.mxu0 0
  %2379 = vmatpush1.bf16.msra.mxu0 0
  %2380 = vmatprep.subr.bf16.mxu0 0
  %2381 = vmatpush1.bf16.msra.mxu0 0
  %2382 = vmatprep.subr.bf16.mxu0 0
  %2383 = vmatpush1.bf16.msra.mxu0 0
  %2384 = vmatprep.subr.bf16.mxu0 0
  %2385 = vmatpush1.bf16.msra.mxu0 0
  %2386 = vmatprep.subr.bf16.mxu0 0
  %2387 = vmatpush1.bf16.msra.mxu0 0
  %2388 = vmatprep.subr.bf16.mxu0 0
  %2389 = vmatpush1.bf16.msra.mxu0 0
  %2390 = vmatprep.subr.bf16.mxu0 0
  %2391 = vmatpush1.bf16.msra.mxu0 0
  %2392 = vmatprep.subr.bf16.mxu0 0
  %2393 = vmatpush1.bf16.msra.mxu0 0
  %2394 = vmatprep.subr.bf16.mxu0 0
  %2395 = vmatpush1.bf16.msra.mxu0 0
  %2396 = vmatprep.subr.bf16.mxu0 0
  %2397 = vmatpush1.bf16.msra.mxu0 0
  %2398 = vmatprep.mubr.bf16.mxu0 0
  %2399 = vmatmul.mubr.bf16.gmra.mrb[0].mxu0 %v2358
  %v2400 = vpop.f32.mrb[0].mxu0
  %v2401 = vadd.f32 0.0, %v2400
  %v2402 = vpop.f32.mrb[0].mxu0
  %v2403 = vpop.f32.mrb[0].mxu0
  %v2404 = vadd.f32 0.0, %v2403
  %v2405 = vpop.f32.mrb[0].mxu0
  %2406 = vmatprep.mubr.bf16.mxu0 0
  %2407 = vmatmul.mubr.bf16.gmra.mrb[0].mxu0 %v2361
  %v2408 = vpop.f32.mrb[0].mxu0
  %v2409 = vadd.f32 0.0, %v2408
  %v2410 = vpop.f32.mrb[0].mxu0
  %v2411 = vpop.f32.mrb[0].mxu0
  %v2412 = vadd.f32 0.0, %v2411
  %v2413 = vpop.f32.mrb[0].mxu0
  %2414 = vmatprep.mubr.bf16.mxu0 0
  %2415 = vmatmul.mubr.bf16.gmra.mrb[0].mxu0 %v2364
  %v2416 = vpop.f32.mrb[0].mxu0
  %v2417 = vadd.f32 0.0, %v2416
  %v2418 = vpop.f32.mrb[0].mxu0
  %v2419 = vpop.f32.mrb[0].mxu0
  %v2420 = vadd.f32 0.0, %v2419
  %v2421 = vpop.f32.mrb[0].mxu0
  %2422 = vdwg.mxu0
  %v2423 = vmax.f32 %v2313, %v2401
  %v2424 = vmax.f32 %v2316, %v2404
  %v2425 = vmax.f32 %v2321, %v2409
  %v2426 = vmax.f32 %v2324, %v2412
  %v2427 = vmax.f32 %v2329, %v2417
  %v2428 = vmax.f32 %v2332, %v2420
  %v2429 = vpack.c.bf16 %v2424, %v2423
  %v2430 = vpack.c.bf16 %v2426, %v2425
  %v2431 = vpack.c.bf16 %v2428, %v2427
  %vm2432 = vcmask 785408
  %2433 = vst.msk [vmem:[#allocation3] sm:$0xff] %vm2432, %v2429
  %2434 = vst.msk [vmem:[#allocation3 + $0x8] sm:$0xff] %vm2432, %v2430
  %2435 = vst.msk [vmem:[#allocation3 + $0x10] sm:$0xff] %vm2432, %v2431
  %v2436 = vld [vmem:[#allocation3] sm:$0xff]
  %v2437 = vld [vmem:[#allocation3 + $0x8] sm:$0xff]
  %v2438 = vld [vmem:[#allocation3 + $0x10] sm:$0x7f]
  %v2439 = vld [vmem:[%s9] sm:$0xf]
  %v2440 = vld [vmem:[%s9 + $0x4] sm:$0xf]
  %v2441 = vld [vmem:[%s9 + $0x8] sm:$0xf]
  %v2442 = vld [vmem:[%s9 + $0xc] sm:$0xf]
  %v2443 = vld [vmem:[%s9 + $0x10] sm:$0xf]
  %v2444 = vld [vmem:[%s9 + $0x14] sm:$0xf]
  %v2445 = vld [vmem:[%s9 + $0x18] sm:$0xf]
  %v2446 = vld [vmem:[%s9 + $0x1c] sm:$0xf]
  %v2447 = vld [vmem:[%s9 + $0x20] sm:$0xf]
  %v2448 = vld [vmem:[%s9 + $0x24] sm:$0xf]
  %v2449 = vld [vmem:[%s9 + $0x28] sm:$0xf]
  %v2450 = vld [vmem:[%s9 + $0x2c] sm:$0xf]
  %v2451 = vld [vmem:[#allocation3 + $0x10] sm:$0xff]
  %s2452 = scalar_lea.vmem %s9, 48
  %v2453 = vld [vmem:[%s2452] sm:$0xf]
  %v2454 = vld [vmem:[%s2452 + $0x4] sm:$0xf]
  %v2455 = vld [vmem:[%s2452 + $0x8] sm:$0xf]
  %v2456 = vld [vmem:[%s2452 + $0xc] sm:$0xf]
  %v2457 = vld [vmem:[%s2452 + $0x10] sm:$0xf]
  %v2458 = vld [vmem:[%s2452 + $0x14] sm:$0xf]
  %v2459 = vld [vmem:[%s2452 + $0x18] sm:$0xf]
  %v2460 = vld [vmem:[%s2452 + $0x1c] sm:$0xf]
  %v2461 = vld [vmem:[%s2452 + $0x20] sm:$0xf]
  %v2462 = vld [vmem:[%s2452 + $0x24] sm:$0xf]
  %v2463 = vld [vmem:[%s2452 + $0x28] sm:$0xf]
  %v2464 = vld [vmem:[%s2452 + $0x2c] sm:$0xf]
  %v2466 = vshrl.u32 %v2436, 16
  %v2468 = vshll.u32 %v2436, 16
  %v2470 = vrot.slane %v2468, 1
  %v2471 = vor.u32 %v2466, %v2470
  %v2473 = vshll.u32 %v2437, 16
  %v2475 = vrot.slane %v2473, 1
  %v2476 = vsel %vm134, %v2471, %v2475
  %v2477 = vshrl.u32 %v2437, 16
  %v2479 = vor.u32 %v2477, %v2475
  %v2481 = vshll.u32 %v2451, 16
  %v2483 = vrot.slane %v2481, 1
  %v2484 = vsel %vm134, %v2479, %v2483
  %v2485 = vshrl.u32 %v2451, 16
  %v2487 = vor.u32 %v2485, %v2483
  %v2500 = vunpack.c.l.b16 %v2453
  %v2501 = vunpack.c.l.b16 %v2454
  %v2502 = vunpack.c.l.b16 %v2455
  %v2503 = vunpack.c.l.b16 %v2456
  %v2504 = vunpack.c.l.b16 %v2457
  %v2505 = vunpack.c.l.b16 %v2458
  %v2506 = vunpack.c.l.b16 %v2459
  %v2507 = vunpack.c.l.b16 %v2460
  %v2508 = vunpack.c.l.b16 %v2461
  %v2509 = vunpack.c.l.b16 %v2462
  %v2510 = vunpack.c.l.b16 %v2463
  %v2511 = vunpack.c.l.b16 %v2464
  %v2512 = vpack.c.b16 %v2501, %v2500
  %v2513 = vpack.c.b16 %v2503, %v2502
  %v2514 = vpack.c.b16 %v2505, %v2504
  %v2515 = vpack.c.b16 %v2507, %v2506
  %v2516 = vpack.c.b16 %v2509, %v2508
  %v2517 = vpack.c.b16 %v2511, %v2510
  %v2525 = vsel %vm2432, %v2476, 0
  %v2528 = vsel %vm2432, %v2484, 0
  %v2531 = vsel %vm2432, %v2487, 0
  %2533 = vmatprep.subr.bf16.mxu0 0
  %2534 = vmatpush1.bf16.msra.mxu0 %v2512
  %2535 = vmatprep.subr.bf16.mxu0 0
  %2536 = vmatpush1.bf16.msra.mxu0 %v2513
  %2537 = vmatprep.subr.bf16.mxu0 0
  %2538 = vmatpush1.bf16.msra.mxu0 %v2514
  %2539 = vmatprep.subr.bf16.mxu0 0
  %2540 = vmatpush1.bf16.msra.mxu0 %v2515
  %2541 = vmatprep.subr.bf16.mxu0 0
  %2542 = vmatpush1.bf16.msra.mxu0 %v2516
  %2543 = vmatprep.subr.bf16.mxu0 0
  %2544 = vmatpush1.bf16.msra.mxu0 %v2517
  %2545 = vmatprep.subr.bf16.mxu0 0
  %2546 = vmatpush1.bf16.msra.mxu0 0
  %2547 = vmatprep.subr.bf16.mxu0 0
  %2548 = vmatpush1.bf16.msra.mxu0 0
  %2549 = vmatprep.subr.bf16.mxu0 0
  %2550 = vmatpush1.bf16.msra.mxu0 0
  %2551 = vmatprep.subr.bf16.mxu0 0
  %2552 = vmatpush1.bf16.msra.mxu0 0
  %2553 = vmatprep.subr.bf16.mxu0 0
  %2554 = vmatpush1.bf16.msra.mxu0 0
  %2555 = vmatprep.subr.bf16.mxu0 0
  %2556 = vmatpush1.bf16.msra.mxu0 0
  %2557 = vmatprep.subr.bf16.mxu0 0
  %2558 = vmatpush1.bf16.msra.mxu0 0
  %2559 = vmatprep.subr.bf16.mxu0 0
  %2560 = vmatpush1.bf16.msra.mxu0 0
  %2561 = vmatprep.subr.bf16.mxu0 0
  %2562 = vmatpush1.bf16.msra.mxu0 0
  %2563 = vmatprep.subr.bf16.mxu0 0
  %2564 = vmatpush1.bf16.msra.mxu0 0
  %2565 = vmatprep.mubr.bf16.mxu0 0
  %2566 = vmatmul.mubr.bf16.gmra.mrb[0].mxu0 %v2525
  %v2567 = vpop.f32.mrb[0].mxu0
  %v2568 = vadd.f32 0.0, %v2567
  %v2569 = vpop.f32.mrb[0].mxu0
  %v2570 = vpop.f32.mrb[0].mxu0
  %v2571 = vadd.f32 0.0, %v2570
  %v2572 = vpop.f32.mrb[0].mxu0
  %2573 = vmatprep.mubr.bf16.mxu0 0
  %2574 = vmatmul.mubr.bf16.gmra.mrb[0].mxu0 %v2528
  %v2575 = vpop.f32.mrb[0].mxu0
  %v2576 = vadd.f32 0.0, %v2575
  %v2577 = vpop.f32.mrb[0].mxu0
  %v2578 = vpop.f32.mrb[0].mxu0
  %v2579 = vadd.f32 0.0, %v2578
  %v2580 = vpop.f32.mrb[0].mxu0
  %2581 = vmatprep.mubr.bf16.mxu0 0
  %2582 = vmatmul.mubr.bf16.gmra.mrb[0].mxu0 %v2531
  %v2583 = vpop.f32.mrb[0].mxu0
  %v2584 = vadd.f32 0.0, %v2583
  %v2585 = vpop.f32.mrb[0].mxu0
  %v2586 = vpop.f32.mrb[0].mxu0
  %v2587 = vadd.f32 0.0, %v2586
  %v2588 = vpop.f32.mrb[0].mxu0
  %2589 = vdwg.mxu0
  %v2602 = vunpack.c.l.b16 %v2439
  %v2603 = vunpack.c.l.b16 %v2440
  %v2604 = vunpack.c.l.b16 %v2441
  %v2605 = vunpack.c.l.b16 %v2442
  %v2606 = vunpack.c.l.b16 %v2443
  %v2607 = vunpack.c.l.b16 %v2444
  %v2608 = vunpack.c.l.b16 %v2445
  %v2609 = vunpack.c.l.b16 %v2446
  %v2610 = vunpack.c.l.b16 %v2447
  %v2611 = vunpack.c.l.b16 %v2448
  %v2612 = vunpack.c.l.b16 %v2449
  %v2613 = vunpack.c.l.b16 %v2450
  %v2614 = vpack.c.b16 %v2603, %v2602
  %v2615 = vpack.c.b16 %v2605, %v2604
  %v2616 = vpack.c.b16 %v2607, %v2606
  %v2617 = vpack.c.b16 %v2609, %v2608
  %v2618 = vpack.c.b16 %v2611, %v2610
  %v2619 = vpack.c.b16 %v2613, %v2612
  %v2626 = vsel %vm2432, %v2436, 0
  %v2628 = vsel %vm2432, %v2437, 0
  %v2631 = vsel %vm2432, %v2438, 0
  %2633 = vmatprep.subr.bf16.mxu0 0
  %2634 = vmatpush1.bf16.msra.mxu0 %v2614
  %2635 = vmatprep.subr.bf16.mxu0 0
  %2636 = vmatpush1.bf16.msra.mxu0 %v2615
  %2637 = vmatprep.subr.bf16.mxu0 0
  %2638 = vmatpush1.bf16.msra.mxu0 %v2616
  %2639 = vmatprep.subr.bf16.mxu0 0
  %2640 = vmatpush1.bf16.msra.mxu0 %v2617
  %2641 = vmatprep.subr.bf16.mxu0 0
  %2642 = vmatpush1.bf16.msra.mxu0 %v2618
  %2643 = vmatprep.subr.bf16.mxu0 0
  %2644 = vmatpush1.bf16.msra.mxu0 %v2619
  %2645 = vmatprep.subr.bf16.mxu0 0
  %2646 = vmatpush1.bf16.msra.mxu0 0
  %2647 = vmatprep.subr.bf16.mxu0 0
  %2648 = vmatpush1.bf16.msra.mxu0 0
  %2649 = vmatprep.subr.bf16.mxu0 0
  %2650 = vmatpush1.bf16.msra.mxu0 0
  %2651 = vmatprep.subr.bf16.mxu0 0
  %2652 = vmatpush1.bf16.msra.mxu0 0
  %2653 = vmatprep.subr.bf16.mxu0 0
  %2654 = vmatpush1.bf16.msra.mxu0 0
  %2655 = vmatprep.subr.bf16.mxu0 0
  %2656 = vmatpush1.bf16.msra.mxu0 0
  %2657 = vmatprep.subr.bf16.mxu0 0
  %2658 = vmatpush1.bf16.msra.mxu0 0
  %2659 = vmatprep.subr.bf16.mxu0 0
  %2660 = vmatpush1.bf16.msra.mxu0 0
  %2661 = vmatprep.subr.bf16.mxu0 0
  %2662 = vmatpush1.bf16.msra.mxu0 0
  %2663 = vmatprep.subr.bf16.mxu0 0
  %2664 = vmatpush1.bf16.msra.mxu0 0
  %2665 = vmatprep.mubr.bf16.mxu0 0
  %2666 = vmatmul.mubr.bf16.gmra.mrb[0].mxu0 %v2626
  %v2667 = vpop.f32.mrb[0].mxu0
  %v2668 = vadd.f32 %v2568, %v2667
  %v2669 = vpop.f32.mrb[0].mxu0
  %v2670 = vpop.f32.mrb[0].mxu0
  %v2671 = vadd.f32 %v2571, %v2670
  %v2672 = vpop.f32.mrb[0].mxu0
  %2673 = vmatprep.mubr.bf16.mxu0 0
  %2674 = vmatmul.mubr.bf16.gmra.mrb[0].mxu0 %v2628
  %v2675 = vpop.f32.mrb[0].mxu0
  %v2676 = vadd.f32 %v2576, %v2675
  %v2677 = vpop.f32.mrb[0].mxu0
  %v2678 = vpop.f32.mrb[0].mxu0
  %v2679 = vadd.f32 %v2579, %v2678
  %v2680 = vpop.f32.mrb[0].mxu0
  %2681 = vmatprep.mubr.bf16.mxu0 0
  %2682 = vmatmul.mubr.bf16.gmra.mrb[0].mxu0 %v2631
  %v2683 = vpop.f32.mrb[0].mxu0
  %v2684 = vadd.f32 %v2584, %v2683
  %v2685 = vpop.f32.mrb[0].mxu0
  %v2686 = vpop.f32.mrb[0].mxu0
  %v2687 = vadd.f32 %v2587, %v2686
  %v2688 = vpop.f32.mrb[0].mxu0
  %2689 = vdwg.mxu0
  %v2690 = vld [vmem:[#allocation3] sm:$0xfe]
  %s2691 = scalar_lea.vmem %s9, 96
  %v2692 = vld [vmem:[%s2691] sm:$0xf]
  %v2693 = vld [vmem:[%s2691 + $0x4] sm:$0xf]
  %v2694 = vld [vmem:[%s2691 + $0x8] sm:$0xf]
  %v2695 = vld [vmem:[%s2691 + $0xc] sm:$0xf]
  %v2696 = vld [vmem:[%s2691 + $0x10] sm:$0xf]
  %v2697 = vld [vmem:[%s2691 + $0x14] sm:$0xf]
  %v2698 = vld [vmem:[%s2691 + $0x18] sm:$0xf]
  %v2699 = vld [vmem:[%s2691 + $0x1c] sm:$0xf]
  %v2700 = vld [vmem:[%s2691 + $0x20] sm:$0xf]
  %v2701 = vld [vmem:[%s2691 + $0x24] sm:$0xf]
  %v2702 = vld [vmem:[%s2691 + $0x28] sm:$0xf]
  %v2703 = vld [vmem:[%s2691 + $0x2c] sm:$0xf]
  %v2707 = vrot.slane %v2690, 1
  %v2708 = vrot.slane %v2437, 1
  %v2709 = vsel %vm541, %v2707, %v2708
  %v2710 = vrot.slane %v2451, 1
  %v2711 = vsel %vm541, %v2708, %v2710
  %v2724 = vunpack.c.l.b16 %v2692
  %v2725 = vunpack.c.l.b16 %v2693
  %v2726 = vunpack.c.l.b16 %v2694
  %v2727 = vunpack.c.l.b16 %v2695
  %v2728 = vunpack.c.l.b16 %v2696
  %v2729 = vunpack.c.l.b16 %v2697
  %v2730 = vunpack.c.l.b16 %v2698
  %v2731 = vunpack.c.l.b16 %v2699
  %v2732 = vunpack.c.l.b16 %v2700
  %v2733 = vunpack.c.l.b16 %v2701
  %v2734 = vunpack.c.l.b16 %v2702
  %v2735 = vunpack.c.l.b16 %v2703
  %v2736 = vpack.c.b16 %v2725, %v2724
  %v2737 = vpack.c.b16 %v2727, %v2726
  %v2738 = vpack.c.b16 %v2729, %v2728
  %v2739 = vpack.c.b16 %v2731, %v2730
  %v2740 = vpack.c.b16 %v2733, %v2732
  %v2741 = vpack.c.b16 %v2735, %v2734
  %v2749 = vsel %vm2432, %v2709, 0
  %v2752 = vsel %vm2432, %v2711, 0
  %v2755 = vsel %vm2432, %v2710, 0
  %2757 = vmatprep.subr.bf16.mxu0 0
  %2758 = vmatpush1.bf16.msra.mxu0 %v2736
  %2759 = vmatprep.subr.bf16.mxu0 0
  %2760 = vmatpush1.bf16.msra.mxu0 %v2737
  %2761 = vmatprep.subr.bf16.mxu0 0
  %2762 = vmatpush1.bf16.msra.mxu0 %v2738
  %2763 = vmatprep.subr.bf16.mxu0 0
  %2764 = vmatpush1.bf16.msra.mxu0 %v2739
  %2765 = vmatprep.subr.bf16.mxu0 0
  %2766 = vmatpush1.bf16.msra.mxu0 %v2740
  %2767 = vmatprep.subr.bf16.mxu0 0
  %2768 = vmatpush1.bf16.msra.mxu0 %v2741
  %2769 = vmatprep.subr.bf16.mxu0 0
  %2770 = vmatpush1.bf16.msra.mxu0 0
  %2771 = vmatprep.subr.bf16.mxu0 0
  %2772 = vmatpush1.bf16.msra.mxu0 0
  %2773 = vmatprep.subr.bf16.mxu0 0
  %2774 = vmatpush1.bf16.msra.mxu0 0
  %2775 = vmatprep.subr.bf16.mxu0 0
  %2776 = vmatpush1.bf16.msra.mxu0 0
  %2777 = vmatprep.subr.bf16.mxu0 0
  %2778 = vmatpush1.bf16.msra.mxu0 0
  %2779 = vmatprep.subr.bf16.mxu0 0
  %2780 = vmatpush1.bf16.msra.mxu0 0
  %2781 = vmatprep.subr.bf16.mxu0 0
  %2782 = vmatpush1.bf16.msra.mxu0 0
  %2783 = vmatprep.subr.bf16.mxu0 0
  %2784 = vmatpush1.bf16.msra.mxu0 0
  %2785 = vmatprep.subr.bf16.mxu0 0
  %2786 = vmatpush1.bf16.msra.mxu0 0
  %2787 = vmatprep.subr.bf16.mxu0 0
  %2788 = vmatpush1.bf16.msra.mxu0 0
  %2789 = vmatprep.mubr.bf16.mxu0 0
  %2790 = vmatmul.mubr.bf16.gmra.mrb[0].mxu0 %v2749
  %v2791 = vpop.f32.mrb[0].mxu0
  %v2792 = vadd.f32 0.0, %v2791
  %v2793 = vpop.f32.mrb[0].mxu0
  %v2794 = vpop.f32.mrb[0].mxu0
  %v2795 = vadd.f32 0.0, %v2794
  %v2796 = vpop.f32.mrb[0].mxu0
  %2797 = vmatprep.mubr.bf16.mxu0 0
  %2798 = vmatmul.mubr.bf16.gmra.mrb[0].mxu0 %v2752
  %v2799 = vpop.f32.mrb[0].mxu0
  %v2800 = vadd.f32 0.0, %v2799
  %v2801 = vpop.f32.mrb[0].mxu0
  %v2802 = vpop.f32.mrb[0].mxu0
  %v2803 = vadd.f32 0.0, %v2802
  %v2804 = vpop.f32.mrb[0].mxu0
  %2805 = vmatprep.mubr.bf16.mxu0 0
  %2806 = vmatmul.mubr.bf16.gmra.mrb[0].mxu0 %v2755
  %v2807 = vpop.f32.mrb[0].mxu0
  %v2808 = vadd.f32 0.0, %v2807
  %v2809 = vpop.f32.mrb[0].mxu0
  %v2810 = vpop.f32.mrb[0].mxu0
  %v2811 = vadd.f32 0.0, %v2810
  %v2812 = vpop.f32.mrb[0].mxu0
  %2813 = vdwg.mxu0
  %v2814 = vadd.f32 %v2668, %v2792
  %v2815 = vadd.f32 %v2671, %v2795
  %v2816 = vadd.f32 %v2676, %v2800
  %v2817 = vadd.f32 %v2679, %v2803
  %v2818 = vadd.f32 %v2684, %v2808
  %v2819 = vadd.f32 %v2687, %v2811
  %v2820 = vld [vmem:[%s12] sm:$0x1]
  %v2822 = vlaneseq
  %v2823 = vshrl.u32 %v2822, 7
  %v2824 = vsub.s32 0, %v2823
  %v2825 = vrot.slane %v2820, %v2824
  %v2827 = vadd.f32 %v2814, %v2825
  %v2828 = vadd.f32 %v2815, %v2825
  %v2829 = vadd.f32 %v2816, %v2825
  %v2830 = vadd.f32 %v2817, %v2825
  %v2831 = vadd.f32 %v2818, %v2825
  %v2832 = vadd.f32 %v2819, %v2825
  %v2833 = vmax.f32 %v2827, 0.0
  %v2834 = vmax.f32 %v2828, 0.0
  %v2835 = vmax.f32 %v2829, 0.0
  %v2836 = vmax.f32 %v2830, 0.0
  %v2837 = vmax.f32 %v2831, 0.0
  %v2838 = vmax.f32 %v2832, 0.0
  %v2839 = vpack.c.bf16 %v2834, %v2833
  %v2840 = vpack.c.bf16 %v2836, %v2835
  %v2841 = vpack.c.bf16 %v2838, %v2837
  %v2842 = vld [vmem:[%s10] sm:$0xf]
  %v2843 = vld [vmem:[%s10 + $0x4] sm:$0xf]
  %v2844 = vld [vmem:[%s10 + $0x8] sm:$0xf]
  %v2845 = vld [vmem:[%s10 + $0xc] sm:$0xf]
  %v2846 = vld [vmem:[%s10 + $0x10] sm:$0xf]
  %v2847 = vld [vmem:[%s10 + $0x14] sm:$0xf]
  %v2848 = vld [vmem:[%s10 + $0x18] sm:$0xf]
  %v2849 = vld [vmem:[%s10 + $0x1c] sm:$0xf]
  %v2850 = vld [vmem:[%s10 + $0x20] sm:$0xf]
  %v2851 = vld [vmem:[%s10 + $0x24] sm:$0xf]
  %v2852 = vld [vmem:[%s10 + $0x28] sm:$0xf]
  %v2853 = vld [vmem:[%s10 + $0x2c] sm:$0xf]
  %v2854 = vld [vmem:[%s10 + $0x30] sm:$0xf]
  %v2855 = vld [vmem:[%s10 + $0x34] sm:$0xf]
  %v2856 = vld [vmem:[%s10 + $0x38] sm:$0xf]
  %v2857 = vld [vmem:[%s10 + $0x3c] sm:$0xf]
  %v2874 = vunpack.c.l.b16 %v2842
  %v2875 = vunpack.c.l.b16 %v2843
  %v2876 = vunpack.c.l.b16 %v2844
  %v2877 = vunpack.c.l.b16 %v2845
  %v2878 = vunpack.c.l.b16 %v2846
  %v2879 = vunpack.c.l.b16 %v2847
  %v2880 = vunpack.c.l.b16 %v2848
  %v2881 = vunpack.c.l.b16 %v2849
  %v2882 = vunpack.c.l.b16 %v2850
  %v2883 = vunpack.c.l.b16 %v2851
  %v2884 = vunpack.c.l.b16 %v2852
  %v2885 = vunpack.c.l.b16 %v2853
  %v2886 = vunpack.c.l.b16 %v2854
  %v2887 = vunpack.c.l.b16 %v2855
  %v2888 = vunpack.c.l.b16 %v2856
  %v2889 = vunpack.c.l.b16 %v2857
  %v2890 = vpack.c.b16 %v2875, %v2874
  %v2891 = vpack.c.b16 %v2877, %v2876
  %v2892 = vpack.c.b16 %v2879, %v2878
  %v2893 = vpack.c.b16 %v2881, %v2880
  %v2894 = vpack.c.b16 %v2883, %v2882
  %v2895 = vpack.c.b16 %v2885, %v2884
  %v2896 = vpack.c.b16 %v2887, %v2886
  %v2897 = vpack.c.b16 %v2889, %v2888
  %2906 = vmatprep.subr.bf16.mxu0 0
  %2907 = vmatpush1.bf16.msra.mxu0 %v2890
  %2908 = vmatprep.subr.bf16.mxu0 0
  %2909 = vmatpush1.bf16.msra.mxu0 %v2891
  %2910 = vmatprep.subr.bf16.mxu0 0
  %2911 = vmatpush1.bf16.msra.mxu0 %v2892
  %2912 = vmatprep.subr.bf16.mxu0 0
  %2913 = vmatpush1.bf16.msra.mxu0 %v2893
  %2914 = vmatprep.subr.bf16.mxu0 0
  %2915 = vmatpush1.bf16.msra.mxu0 %v2894
  %2916 = vmatprep.subr.bf16.mxu0 0
  %2917 = vmatpush1.bf16.msra.mxu0 %v2895
  %2918 = vmatprep.subr.bf16.mxu0 0
  %2919 = vmatpush1.bf16.msra.mxu0 %v2896
  %2920 = vmatprep.subr.bf16.mxu0 0
  %2921 = vmatpush1.bf16.msra.mxu0 %v2897
  %2922 = vmatprep.subr.bf16.mxu0 0
  %2923 = vmatpush1.bf16.msra.mxu0 0
  %2924 = vmatprep.subr.bf16.mxu0 0
  %2925 = vmatpush1.bf16.msra.mxu0 0
  %2926 = vmatprep.subr.bf16.mxu0 0
  %2927 = vmatpush1.bf16.msra.mxu0 0
  %2928 = vmatprep.subr.bf16.mxu0 0
  %2929 = vmatpush1.bf16.msra.mxu0 0
  %2930 = vmatprep.subr.bf16.mxu0 0
  %2931 = vmatpush1.bf16.msra.mxu0 0
  %2932 = vmatprep.subr.bf16.mxu0 0
  %2933 = vmatpush1.bf16.msra.mxu0 0
  %2934 = vmatprep.subr.bf16.mxu0 0
  %2935 = vmatpush1.bf16.msra.mxu0 0
  %2936 = vmatprep.subr.bf16.mxu0 0
  %2937 = vmatpush1.bf16.msra.mxu0 0
  %2938 = vmatprep.mubr.bf16.mxu0 0
  %2939 = vmatmul.mubr.bf16.gmra.mrb[0].mxu0 %v2839
  %v2940 = vpop.f32.mrb[0].mxu0
  %v2941 = vadd.f32 0.0, %v2940
  %v2942 = vpop.f32.mrb[0].mxu0
  %v2943 = vpop.f32.mrb[0].mxu0
  %v2944 = vadd.f32 0.0, %v2943
  %v2945 = vpop.f32.mrb[0].mxu0
  %2946 = vmatprep.mubr.bf16.mxu0 0
  %2947 = vmatmul.mubr.bf16.gmra.mrb[0].mxu0 %v2840
  %v2948 = vpop.f32.mrb[0].mxu0
  %v2949 = vadd.f32 0.0, %v2948
  %v2950 = vpop.f32.mrb[0].mxu0
  %v2951 = vpop.f32.mrb[0].mxu0
  %v2952 = vadd.f32 0.0, %v2951
  %v2953 = vpop.f32.mrb[0].mxu0
  %2954 = vmatprep.mubr.bf16.mxu0 0
  %2955 = vmatmul.mubr.bf16.gmra.mrb[0].mxu0 %v2841
  %v2956 = vpop.f32.mrb[0].mxu0
  %v2957 = vadd.f32 0.0, %v2956
  %v2958 = vpop.f32.mrb[0].mxu0
  %v2959 = vpop.f32.mrb[0].mxu0
  %v2960 = vadd.f32 0.0, %v2959
  %v2961 = vpop.f32.mrb[0].mxu0
  %2962 = vdwg.mxu0
  %s2963 = scalar_lea.vmem %s10, 64
  %v2964 = vld [vmem:[%s2963] sm:$0xf]
  %v2965 = vld [vmem:[%s2963 + $0x4] sm:$0xf]
  %v2966 = vld [vmem:[%s2963 + $0x8] sm:$0xf]
  %v2967 = vld [vmem:[%s2963 + $0xc] sm:$0xf]
  %v2968 = vld [vmem:[%s2963 + $0x10] sm:$0xf]
  %v2969 = vld [vmem:[%s2963 + $0x14] sm:$0xf]
  %v2970 = vld [vmem:[%s2963 + $0x18] sm:$0xf]
  %v2971 = vld [vmem:[%s2963 + $0x1c] sm:$0xf]
  %v2972 = vld [vmem:[%s2963 + $0x20] sm:$0xf]
  %v2973 = vld [vmem:[%s2963 + $0x24] sm:$0xf]
  %v2974 = vld [vmem:[%s2963 + $0x28] sm:$0xf]
  %v2975 = vld [vmem:[%s2963 + $0x2c] sm:$0xf]
  %v2976 = vld [vmem:[%s2963 + $0x30] sm:$0xf]
  %v2977 = vld [vmem:[%s2963 + $0x34] sm:$0xf]
  %v2978 = vld [vmem:[%s2963 + $0x38] sm:$0xf]
  %v2979 = vld [vmem:[%s2963 + $0x3c] sm:$0xf]
  %v2996 = vunpack.c.l.b16 %v2964
  %v2997 = vunpack.c.l.b16 %v2965
  %v2998 = vunpack.c.l.b16 %v2966
  %v2999 = vunpack.c.l.b16 %v2967
  %v3000 = vunpack.c.l.b16 %v2968
  %v3001 = vunpack.c.l.b16 %v2969
  %v3002 = vunpack.c.l.b16 %v2970
  %v3003 = vunpack.c.l.b16 %v2971
  %v3004 = vunpack.c.l.b16 %v2972
  %v3005 = vunpack.c.l.b16 %v2973
  %v3006 = vunpack.c.l.b16 %v2974
  %v3007 = vunpack.c.l.b16 %v2975
  %v3008 = vunpack.c.l.b16 %v2976
  %v3009 = vunpack.c.l.b16 %v2977
  %v3010 = vunpack.c.l.b16 %v2978
  %v3011 = vunpack.c.l.b16 %v2979
  %v3012 = vpack.c.b16 %v2997, %v2996
  %v3013 = vpack.c.b16 %v2999, %v2998
  %v3014 = vpack.c.b16 %v3001, %v3000
  %v3015 = vpack.c.b16 %v3003, %v3002
  %v3016 = vpack.c.b16 %v3005, %v3004
  %v3017 = vpack.c.b16 %v3007, %v3006
  %v3018 = vpack.c.b16 %v3009, %v3008
  %v3019 = vpack.c.b16 %v3011, %v3010
  %3028 = vmatprep.subr.bf16.mxu0 0
  %3029 = vmatpush1.bf16.msra.mxu0 %v3012
  %3030 = vmatprep.subr.bf16.mxu0 0
  %3031 = vmatpush1.bf16.msra.mxu0 %v3013
  %3032 = vmatprep.subr.bf16.mxu0 0
  %3033 = vmatpush1.bf16.msra.mxu0 %v3014
  %3034 = vmatprep.subr.bf16.mxu0 0
  %3035 = vmatpush1.bf16.msra.mxu0 %v3015
  %3036 = vmatprep.subr.bf16.mxu0 0
  %3037 = vmatpush1.bf16.msra.mxu0 %v3016
  %3038 = vmatprep.subr.bf16.mxu0 0
  %3039 = vmatpush1.bf16.msra.mxu0 %v3017
  %3040 = vmatprep.subr.bf16.mxu0 0
  %3041 = vmatpush1.bf16.msra.mxu0 %v3018
  %3042 = vmatprep.subr.bf16.mxu0 0
  %3043 = vmatpush1.bf16.msra.mxu0 %v3019
  %3044 = vmatprep.subr.bf16.mxu0 0
  %3045 = vmatpush1.bf16.msra.mxu0 0
  %3046 = vmatprep.subr.bf16.mxu0 0
  %3047 = vmatpush1.bf16.msra.mxu0 0
  %3048 = vmatprep.subr.bf16.mxu0 0
  %3049 = vmatpush1.bf16.msra.mxu0 0
  %3050 = vmatprep.subr.bf16.mxu0 0
  %3051 = vmatpush1.bf16.msra.mxu0 0
  %3052 = vmatprep.subr.bf16.mxu0 0
  %3053 = vmatpush1.bf16.msra.mxu0 0
  %3054 = vmatprep.subr.bf16.mxu0 0
  %3055 = vmatpush1.bf16.msra.mxu0 0
  %3056 = vmatprep.subr.bf16.mxu0 0
  %3057 = vmatpush1.bf16.msra.mxu0 0
  %3058 = vmatprep.subr.bf16.mxu0 0
  %3059 = vmatpush1.bf16.msra.mxu0 0
  %3060 = vmatprep.mubr.bf16.mxu0 0
  %3061 = vmatmul.mubr.bf16.gmra.mrb[0].mxu0 %v2839
  %v3062 = vpop.f32.mrb[0].mxu0
  %v3063 = vadd.f32 0.0, %v3062
  %v3064 = vpop.f32.mrb[0].mxu0
  %v3065 = vpop.f32.mrb[0].mxu0
  %v3066 = vadd.f32 0.0, %v3065
  %v3067 = vpop.f32.mrb[0].mxu0
  %3068 = vmatprep.mubr.bf16.mxu0 0
  %3069 = vmatmul.mubr.bf16.gmra.mrb[0].mxu0 %v2840
  %v3070 = vpop.f32.mrb[0].mxu0
  %v3071 = vadd.f32 0.0, %v3070
  %v3072 = vpop.f32.mrb[0].mxu0
  %v3073 = vpop.f32.mrb[0].mxu0
  %v3074 = vadd.f32 0.0, %v3073
  %v3075 = vpop.f32.mrb[0].mxu0
  %3076 = vmatprep.mubr.bf16.mxu0 0
  %3077 = vmatmul.mubr.bf16.gmra.mrb[0].mxu0 %v2841
  %v3078 = vpop.f32.mrb[0].mxu0
  %v3079 = vadd.f32 0.0, %v3078
  %v3080 = vpop.f32.mrb[0].mxu0
  %v3081 = vpop.f32.mrb[0].mxu0
  %v3082 = vadd.f32 0.0, %v3081
  %v3083 = vpop.f32.mrb[0].mxu0
  %3084 = vdwg.mxu0
  %v3085 = vmax.f32 %v2941, %v3063
  %v3086 = vmax.f32 %v2944, %v3066
  %v3087 = vmax.f32 %v2949, %v3071
  %v3088 = vmax.f32 %v2952, %v3074
  %v3089 = vmax.f32 %v2957, %v3079
  %v3090 = vmax.f32 %v2960, %v3082
  %s3091 = scalar_lea.vmem %s10, 128
  %v3092 = vld [vmem:[%s3091] sm:$0xf]
  %v3093 = vld [vmem:[%s3091 + $0x4] sm:$0xf]
  %v3094 = vld [vmem:[%s3091 + $0x8] sm:$0xf]
  %v3095 = vld [vmem:[%s3091 + $0xc] sm:$0xf]
  %v3096 = vld [vmem:[%s3091 + $0x10] sm:$0xf]
  %v3097 = vld [vmem:[%s3091 + $0x14] sm:$0xf]
  %v3098 = vld [vmem:[%s3091 + $0x18] sm:$0xf]
  %v3099 = vld [vmem:[%s3091 + $0x1c] sm:$0xf]
  %v3100 = vld [vmem:[%s3091 + $0x20] sm:$0xf]
  %v3101 = vld [vmem:[%s3091 + $0x24] sm:$0xf]
  %v3102 = vld [vmem:[%s3091 + $0x28] sm:$0xf]
  %v3103 = vld [vmem:[%s3091 + $0x2c] sm:$0xf]
  %v3104 = vld [vmem:[%s3091 + $0x30] sm:$0xf]
  %v3105 = vld [vmem:[%s3091 + $0x34] sm:$0xf]
  %v3106 = vld [vmem:[%s3091 + $0x38] sm:$0xf]
  %v3107 = vld [vmem:[%s3091 + $0x3c] sm:$0xf]
  %v3124 = vunpack.c.l.b16 %v3092
  %v3125 = vunpack.c.l.b16 %v3093
  %v3126 = vunpack.c.l.b16 %v3094
  %v3127 = vunpack.c.l.b16 %v3095
  %v3128 = vunpack.c.l.b16 %v3096
  %v3129 = vunpack.c.l.b16 %v3097
  %v3130 = vunpack.c.l.b16 %v3098
  %v3131 = vunpack.c.l.b16 %v3099
  %v3132 = vunpack.c.l.b16 %v3100
  %v3133 = vunpack.c.l.b16 %v3101
  %v3134 = vunpack.c.l.b16 %v3102
  %v3135 = vunpack.c.l.b16 %v3103
  %v3136 = vunpack.c.l.b16 %v3104
  %v3137 = vunpack.c.l.b16 %v3105
  %v3138 = vunpack.c.l.b16 %v3106
  %v3139 = vunpack.c.l.b16 %v3107
  %v3140 = vpack.c.b16 %v3125, %v3124
  %v3141 = vpack.c.b16 %v3127, %v3126
  %v3142 = vpack.c.b16 %v3129, %v3128
  %v3143 = vpack.c.b16 %v3131, %v3130
  %v3144 = vpack.c.b16 %v3133, %v3132
  %v3145 = vpack.c.b16 %v3135, %v3134
  %v3146 = vpack.c.b16 %v3137, %v3136
  %v3147 = vpack.c.b16 %v3139, %v3138
  %3156 = vmatprep.subr.bf16.mxu0 0
  %3157 = vmatpush1.bf16.msra.mxu0 %v3140
  %3158 = vmatprep.subr.bf16.mxu0 0
  %3159 = vmatpush1.bf16.msra.mxu0 %v3141
  %3160 = vmatprep.subr.bf16.mxu0 0
  %3161 = vmatpush1.bf16.msra.mxu0 %v3142
  %3162 = vmatprep.subr.bf16.mxu0 0
  %3163 = vmatpush1.bf16.msra.mxu0 %v3143
  %3164 = vmatprep.subr.bf16.mxu0 0
  %3165 = vmatpush1.bf16.msra.mxu0 %v3144
  %3166 = vmatprep.subr.bf16.mxu0 0
  %3167 = vmatpush1.bf16.msra.mxu0 %v3145
  %3168 = vmatprep.subr.bf16.mxu0 0
  %3169 = vmatpush1.bf16.msra.mxu0 %v3146
  %3170 = vmatprep.subr.bf16.mxu0 0
  %3171 = vmatpush1.bf16.msra.mxu0 %v3147
  %3172 = vmatprep.subr.bf16.mxu0 0
  %3173 = vmatpush1.bf16.msra.mxu0 0
  %3174 = vmatprep.subr.bf16.mxu0 0
  %3175 = vmatpush1.bf16.msra.mxu0 0
  %3176 = vmatprep.subr.bf16.mxu0 0
  %3177 = vmatpush1.bf16.msra.mxu0 0
  %3178 = vmatprep.subr.bf16.mxu0 0
  %3179 = vmatpush1.bf16.msra.mxu0 0
  %3180 = vmatprep.subr.bf16.mxu0 0
  %3181 = vmatpush1.bf16.msra.mxu0 0
  %3182 = vmatprep.subr.bf16.mxu0 0
  %3183 = vmatpush1.bf16.msra.mxu0 0
  %3184 = vmatprep.subr.bf16.mxu0 0
  %3185 = vmatpush1.bf16.msra.mxu0 0
  %3186 = vmatprep.subr.bf16.mxu0 0
  %3187 = vmatpush1.bf16.msra.mxu0 0
  %3188 = vmatprep.mubr.bf16.mxu0 0
  %3189 = vmatmul.mubr.bf16.gmra.mrb[0].mxu0 %v2839
  %v3190 = vpop.f32.mrb[0].mxu0
  %v3191 = vadd.f32 0.0, %v3190
  %v3192 = vpop.f32.mrb[0].mxu0
  %v3193 = vpop.f32.mrb[0].mxu0
  %v3194 = vadd.f32 0.0, %v3193
  %v3195 = vpop.f32.mrb[0].mxu0
  %3196 = vmatprep.mubr.bf16.mxu0 0
  %3197 = vmatmul.mubr.bf16.gmra.mrb[0].mxu0 %v2840
  %v3198 = vpop.f32.mrb[0].mxu0
  %v3199 = vadd.f32 0.0, %v3198
  %v3200 = vpop.f32.mrb[0].mxu0
  %v3201 = vpop.f32.mrb[0].mxu0
  %v3202 = vadd.f32 0.0, %v3201
  %v3203 = vpop.f32.mrb[0].mxu0
  %3204 = vmatprep.mubr.bf16.mxu0 0
  %3205 = vmatmul.mubr.bf16.gmra.mrb[0].mxu0 %v2841
  %v3206 = vpop.f32.mrb[0].mxu0
  %v3207 = vadd.f32 0.0, %v3206
  %v3208 = vpop.f32.mrb[0].mxu0
  %v3209 = vpop.f32.mrb[0].mxu0
  %v3210 = vadd.f32 0.0, %v3209
  %v3211 = vpop.f32.mrb[0].mxu0
  %3212 = vdwg.mxu0
  %v3213 = vmax.f32 %v3085, %v3191
  %v3214 = vmax.f32 %v3086, %v3194
  %v3215 = vmax.f32 %v3087, %v3199
  %v3216 = vmax.f32 %v3088, %v3202
  %v3217 = vmax.f32 %v3089, %v3207
  %v3218 = vmax.f32 %v3090, %v3210
  %s3219 = scalar_lea.vmem %s10, 192
  %v3220 = vld [vmem:[%s3219] sm:$0xf]
  %v3221 = vld [vmem:[%s3219 + $0x4] sm:$0xf]
  %v3222 = vld [vmem:[%s3219 + $0x8] sm:$0xf]
  %v3223 = vld [vmem:[%s3219 + $0xc] sm:$0xf]
  %v3224 = vld [vmem:[%s3219 + $0x10] sm:$0xf]
  %v3225 = vld [vmem:[%s3219 + $0x14] sm:$0xf]
  %v3226 = vld [vmem:[%s3219 + $0x18] sm:$0xf]
  %v3227 = vld [vmem:[%s3219 + $0x1c] sm:$0xf]
  %v3228 = vld [vmem:[%s3219 + $0x20] sm:$0xf]
  %v3229 = vld [vmem:[%s3219 + $0x24] sm:$0xf]
  %v3230 = vld [vmem:[%s3219 + $0x28] sm:$0xf]
  %v3231 = vld [vmem:[%s3219 + $0x2c] sm:$0xf]
  %v3232 = vld [vmem:[%s3219 + $0x30] sm:$0xf]
  %v3233 = vld [vmem:[%s3219 + $0x34] sm:$0xf]
  %v3234 = vld [vmem:[%s3219 + $0x38] sm:$0xf]
  %v3235 = vld [vmem:[%s3219 + $0x3c] sm:$0xf]
  %v3252 = vunpack.c.l.b16 %v3220
  %v3253 = vunpack.c.l.b16 %v3221
  %v3254 = vunpack.c.l.b16 %v3222
  %v3255 = vunpack.c.l.b16 %v3223
  %v3256 = vunpack.c.l.b16 %v3224
  %v3257 = vunpack.c.l.b16 %v3225
  %v3258 = vunpack.c.l.b16 %v3226
  %v3259 = vunpack.c.l.b16 %v3227
  %v3260 = vunpack.c.l.b16 %v3228
  %v3261 = vunpack.c.l.b16 %v3229
  %v3262 = vunpack.c.l.b16 %v3230
  %v3263 = vunpack.c.l.b16 %v3231
  %v3264 = vunpack.c.l.b16 %v3232
  %v3265 = vunpack.c.l.b16 %v3233
  %v3266 = vunpack.c.l.b16 %v3234
  %v3267 = vunpack.c.l.b16 %v3235
  %v3268 = vpack.c.b16 %v3253, %v3252
  %v3269 = vpack.c.b16 %v3255, %v3254
  %v3270 = vpack.c.b16 %v3257, %v3256
  %v3271 = vpack.c.b16 %v3259, %v3258
  %v3272 = vpack.c.b16 %v3261, %v3260
  %v3273 = vpack.c.b16 %v3263, %v3262
  %v3274 = vpack.c.b16 %v3265, %v3264
  %v3275 = vpack.c.b16 %v3267, %v3266
  %3284 = vmatprep.subr.bf16.mxu0 0
  %3285 = vmatpush1.bf16.msra.mxu0 %v3268
  %3286 = vmatprep.subr.bf16.mxu0 0
  %3287 = vmatpush1.bf16.msra.mxu0 %v3269
  %3288 = vmatprep.subr.bf16.mxu0 0
  %3289 = vmatpush1.bf16.msra.mxu0 %v3270
  %3290 = vmatprep.subr.bf16.mxu0 0
  %3291 = vmatpush1.bf16.msra.mxu0 %v3271
  %3292 = vmatprep.subr.bf16.mxu0 0
  %3293 = vmatpush1.bf16.msra.mxu0 %v3272
  %3294 = vmatprep.subr.bf16.mxu0 0
  %3295 = vmatpush1.bf16.msra.mxu0 %v3273
  %3296 = vmatprep.subr.bf16.mxu0 0
  %3297 = vmatpush1.bf16.msra.mxu0 %v3274
  %3298 = vmatprep.subr.bf16.mxu0 0
  %3299 = vmatpush1.bf16.msra.mxu0 %v3275
  %3300 = vmatprep.subr.bf16.mxu0 0
  %3301 = vmatpush1.bf16.msra.mxu0 0
  %3302 = vmatprep.subr.bf16.mxu0 0
  %3303 = vmatpush1.bf16.msra.mxu0 0
  %3304 = vmatprep.subr.bf16.mxu0 0
  %3305 = vmatpush1.bf16.msra.mxu0 0
  %3306 = vmatprep.subr.bf16.mxu0 0
  %3307 = vmatpush1.bf16.msra.mxu0 0
  %3308 = vmatprep.subr.bf16.mxu0 0
  %3309 = vmatpush1.bf16.msra.mxu0 0
  %3310 = vmatprep.subr.bf16.mxu0 0
  %3311 = vmatpush1.bf16.msra.mxu0 0
  %3312 = vmatprep.subr.bf16.mxu0 0
  %3313 = vmatpush1.bf16.msra.mxu0 0
  %3314 = vmatprep.subr.bf16.mxu0 0
  %3315 = vmatpush1.bf16.msra.mxu0 0
  %3316 = vmatprep.mubr.bf16.mxu0 0
  %3317 = vmatmul.mubr.bf16.gmra.mrb[0].mxu0 %v2839
  %v3318 = vpop.f32.mrb[0].mxu0
  %v3319 = vadd.f32 0.0, %v3318
  %v3320 = vpop.f32.mrb[0].mxu0
  %v3321 = vpop.f32.mrb[0].mxu0
  %v3322 = vadd.f32 0.0, %v3321
  %v3323 = vpop.f32.mrb[0].mxu0
  %3324 = vmatprep.mubr.bf16.mxu0 0
  %3325 = vmatmul.mubr.bf16.gmra.mrb[0].mxu0 %v2840
  %v3326 = vpop.f32.mrb[0].mxu0
  %v3327 = vadd.f32 0.0, %v3326
  %v3328 = vpop.f32.mrb[0].mxu0
  %v3329 = vpop.f32.mrb[0].mxu0
  %v3330 = vadd.f32 0.0, %v3329
  %v3331 = vpop.f32.mrb[0].mxu0
  %3332 = vmatprep.mubr.bf16.mxu0 0
  %3333 = vmatmul.mubr.bf16.gmra.mrb[0].mxu0 %v2841
  %v3334 = vpop.f32.mrb[0].mxu0
  %v3335 = vadd.f32 0.0, %v3334
  %v3336 = vpop.f32.mrb[0].mxu0
  %v3337 = vpop.f32.mrb[0].mxu0
  %v3338 = vadd.f32 0.0, %v3337
  %v3339 = vpop.f32.mrb[0].mxu0
  %3340 = vdwg.mxu0
  %v3341 = vmax.f32 %v3213, %v3319
  %v3342 = vmax.f32 %v3214, %v3322
  %v3343 = vmax.f32 %v3215, %v3327
  %v3344 = vmax.f32 %v3216, %v3330
  %v3345 = vmax.f32 %v3217, %v3335
  %v3346 = vmax.f32 %v3218, %v3338
  %v3347 = vpack.c.bf16 %v3342, %v3341
  %v3348 = vpack.c.bf16 %v3344, %v3343
  %v3349 = vpack.c.bf16 %v3346, %v3345
  %v3350 = vld [vmem:[%s11] sm:$0xf]
  %vm3351 = vcmask 375808
  %v3353 = vsel %vm3351, %v3350, 0
  %v3356 = vsel %vm1228, %v3349, 0
  %3358 = vmatprep.subr.bf16.mxu0 0
  %3359 = vmatpush1.bf16.msra.mxu0 %v3347
  %3360 = vmatprep.subr.bf16.mxu0 0
  %3361 = vmatpush1.bf16.msra.mxu0 %v3348
  %3362 = vmatprep.subr.bf16.mxu0 0
  %3363 = vmatpush1.bf16.msra.mxu0 %v3356
  %3364 = vmatprep.subr.bf16.mxu0 0
  %3365 = vmatpush1.bf16.msra.mxu0 0
  %3366 = vmatprep.subr.bf16.mxu0 0
  %3367 = vmatpush1.bf16.msra.mxu0 0
  %3368 = vmatprep.subr.bf16.mxu0 0
  %3369 = vmatpush1.bf16.msra.mxu0 0
  %3370 = vmatprep.subr.bf16.mxu0 0
  %3371 = vmatpush1.bf16.msra.mxu0 0
  %3372 = vmatprep.subr.bf16.mxu0 0
  %3373 = vmatpush1.bf16.msra.mxu0 0
  %3374 = vmatprep.subr.bf16.mxu0 0
  %3375 = vmatpush1.bf16.msra.mxu0 0
  %3376 = vmatprep.subr.bf16.mxu0 0
  %3377 = vmatpush1.bf16.msra.mxu0 0
  %3378 = vmatprep.subr.bf16.mxu0 0
  %3379 = vmatpush1.bf16.msra.mxu0 0
  %3380 = vmatprep.subr.bf16.mxu0 0
  %3381 = vmatpush1.bf16.msra.mxu0 0
  %3382 = vmatprep.subr.bf16.mxu0 0
  %3383 = vmatpush1.bf16.msra.mxu0 0
  %3384 = vmatprep.subr.bf16.mxu0 0
  %3385 = vmatpush1.bf16.msra.mxu0 0
  %3386 = vmatprep.subr.bf16.mxu0 0
  %3387 = vmatpush1.bf16.msra.mxu0 0
  %3388 = vmatprep.subr.bf16.mxu0 0
  %3389 = vmatpush1.bf16.msra.mxu0 0
  %3390 = vmatprep.mubr.bf16.mxu0 0
  %3391 = vmatmul.mubr.bf16.gmra.mrb[0].mxu0 %v3353
  %v3392 = vpop.f32.mrb[0].mxu0
  %v3393 = vadd.f32 0.0, %v3392
  %v3394 = vpop.f32.mrb[0].mxu0
  %v3395 = vpop.f32.mrb[0].mxu0
  %v3396 = vpop.f32.mrb[0].mxu0
  %3397 = vdwg.mxu0
  %s3398 = scalar_lea.vmem %s11, 4
  %v3399 = vld [vmem:[%s3398] sm:$0xf]
  %v3401 = vsel %vm3351, %v3399, 0
  %3403 = vmatprep.subr.bf16.mxu0 0
  %3404 = vmatpush1.bf16.msra.mxu0 %v3347
  %3405 = vmatprep.subr.bf16.mxu0 0
  %3406 = vmatpush1.bf16.msra.mxu0 %v3348
  %3407 = vmatprep.subr.bf16.mxu0 0
  %3408 = vmatpush1.bf16.msra.mxu0 %v3356
  %3409 = vmatprep.subr.bf16.mxu0 0
  %3410 = vmatpush1.bf16.msra.mxu0 0
  %3411 = vmatprep.subr.bf16.mxu0 0
  %3412 = vmatpush1.bf16.msra.mxu0 0
  %3413 = vmatprep.subr.bf16.mxu0 0
  %3414 = vmatpush1.bf16.msra.mxu0 0
  %3415 = vmatprep.subr.bf16.mxu0 0
  %3416 = vmatpush1.bf16.msra.mxu0 0
  %3417 = vmatprep.subr.bf16.mxu0 0
  %3418 = vmatpush1.bf16.msra.mxu0 0
  %3419 = vmatprep.subr.bf16.mxu0 0
  %3420 = vmatpush1.bf16.msra.mxu0 0
  %3421 = vmatprep.subr.bf16.mxu0 0
  %3422 = vmatpush1.bf16.msra.mxu0 0
  %3423 = vmatprep.subr.bf16.mxu0 0
  %3424 = vmatpush1.bf16.msra.mxu0 0
  %3425 = vmatprep.subr.bf16.mxu0 0
  %3426 = vmatpush1.bf16.msra.mxu0 0
  %3427 = vmatprep.subr.bf16.mxu0 0
  %3428 = vmatpush1.bf16.msra.mxu0 0
  %3429 = vmatprep.subr.bf16.mxu0 0
  %3430 = vmatpush1.bf16.msra.mxu0 0
  %3431 = vmatprep.subr.bf16.mxu0 0
  %3432 = vmatpush1.bf16.msra.mxu0 0
  %3433 = vmatprep.subr.bf16.mxu0 0
  %3434 = vmatpush1.bf16.msra.mxu0 0
  %3435 = vmatprep.mubr.bf16.mxu0 0
  %3436 = vmatmul.mubr.bf16.gmra.mrb[0].mxu0 %v3401
  %v3437 = vpop.f32.mrb[0].mxu0
  %v3438 = vadd.f32 0.0, %v3437
  %v3439 = vpop.f32.mrb[0].mxu0
  %v3440 = vpop.f32.mrb[0].mxu0
  %v3441 = vpop.f32.mrb[0].mxu0
  %3442 = vdwg.mxu0
  %v3443 = vmax.f32 %v3393, %v3438
  %s3444 = scalar_lea.vmem %s11, 8
  %v3445 = vld [vmem:[%s3444] sm:$0xf]
  %v3447 = vsel %vm3351, %v3445, 0
  %3449 = vmatprep.subr.bf16.mxu0 0
  %3450 = vmatpush1.bf16.msra.mxu0 %v3347
  %3451 = vmatprep.subr.bf16.mxu0 0
  %3452 = vmatpush1.bf16.msra.mxu0 %v3348
  %3453 = vmatprep.subr.bf16.mxu0 0
  %3454 = vmatpush1.bf16.msra.mxu0 %v3356
  %3455 = vmatprep.subr.bf16.mxu0 0
  %3456 = vmatpush1.bf16.msra.mxu0 0
  %3457 = vmatprep.subr.bf16.mxu0 0
  %3458 = vmatpush1.bf16.msra.mxu0 0
  %3459 = vmatprep.subr.bf16.mxu0 0
  %3460 = vmatpush1.bf16.msra.mxu0 0
  %3461 = vmatprep.subr.bf16.mxu0 0
  %3462 = vmatpush1.bf16.msra.mxu0 0
  %3463 = vmatprep.subr.bf16.mxu0 0
  %3464 = vmatpush1.bf16.msra.mxu0 0
  %3465 = vmatprep.subr.bf16.mxu0 0
  %3466 = vmatpush1.bf16.msra.mxu0 0
  %3467 = vmatprep.subr.bf16.mxu0 0
  %3468 = vmatpush1.bf16.msra.mxu0 0
  %3469 = vmatprep.subr.bf16.mxu0 0
  %3470 = vmatpush1.bf16.msra.mxu0 0
  %3471 = vmatprep.subr.bf16.mxu0 0
  %3472 = vmatpush1.bf16.msra.mxu0 0
  %3473 = vmatprep.subr.bf16.mxu0 0
  %3474 = vmatpush1.bf16.msra.mxu0 0
  %3475 = vmatprep.subr.bf16.mxu0 0
  %3476 = vmatpush1.bf16.msra.mxu0 0
  %3477 = vmatprep.subr.bf16.mxu0 0
  %3478 = vmatpush1.bf16.msra.mxu0 0
  %3479 = vmatprep.subr.bf16.mxu0 0
  %3480 = vmatpush1.bf16.msra.mxu0 0
  %3481 = vmatprep.mubr.bf16.mxu0 0
  %3482 = vmatmul.mubr.bf16.gmra.mrb[0].mxu0 %v3447
  %v3483 = vpop.f32.mrb[0].mxu0
  %v3484 = vadd.f32 0.0, %v3483
  %v3485 = vpop.f32.mrb[0].mxu0
  %v3486 = vpop.f32.mrb[0].mxu0
  %v3487 = vpop.f32.mrb[0].mxu0
  %3488 = vdwg.mxu0
  %v3489 = vmax.f32 %v3443, %v3484
  %s3490 = scalar_lea.vmem %s11, 12
  %v3491 = vld [vmem:[%s3490] sm:$0xf]
  %v3493 = vsel %vm3351, %v3491, 0
  %3495 = vmatprep.subr.bf16.mxu0 0
  %3496 = vmatpush1.bf16.msra.mxu0 %v3347
  %3497 = vmatprep.subr.bf16.mxu0 0
  %3498 = vmatpush1.bf16.msra.mxu0 %v3348
  %3499 = vmatprep.subr.bf16.mxu0 0
  %3500 = vmatpush1.bf16.msra.mxu0 %v3356
  %3501 = vmatprep.subr.bf16.mxu0 0
  %3502 = vmatpush1.bf16.msra.mxu0 0
  %3503 = vmatprep.subr.bf16.mxu0 0
  %3504 = vmatpush1.bf16.msra.mxu0 0
  %3505 = vmatprep.subr.bf16.mxu0 0
  %3506 = vmatpush1.bf16.msra.mxu0 0
  %3507 = vmatprep.subr.bf16.mxu0 0
  %3508 = vmatpush1.bf16.msra.mxu0 0
  %3509 = vmatprep.subr.bf16.mxu0 0
  %3510 = vmatpush1.bf16.msra.mxu0 0
  %3511 = vmatprep.subr.bf16.mxu0 0
  %3512 = vmatpush1.bf16.msra.mxu0 0
  %3513 = vmatprep.subr.bf16.mxu0 0
  %3514 = vmatpush1.bf16.msra.mxu0 0
  %3515 = vmatprep.subr.bf16.mxu0 0
  %3516 = vmatpush1.bf16.msra.mxu0 0
  %3517 = vmatprep.subr.bf16.mxu0 0
  %3518 = vmatpush1.bf16.msra.mxu0 0
  %3519 = vmatprep.subr.bf16.mxu0 0
  %3520 = vmatpush1.bf16.msra.mxu0 0
  %3521 = vmatprep.subr.bf16.mxu0 0
  %3522 = vmatpush1.bf16.msra.mxu0 0
  %3523 = vmatprep.subr.bf16.mxu0 0
  %3524 = vmatpush1.bf16.msra.mxu0 0
  %3525 = vmatprep.subr.bf16.mxu0 0
  %3526 = vmatpush1.bf16.msra.mxu0 0
  %3527 = vmatprep.mubr.bf16.mxu0 0
  %3528 = vmatmul.mubr.bf16.gmra.mrb[0].mxu0 %v3493
  %v3529 = vpop.f32.mrb[0].mxu0
  %v3530 = vadd.f32 0.0, %v3529
  %v3531 = vpop.f32.mrb[0].mxu0
  %v3532 = vpop.f32.mrb[0].mxu0
  %v3533 = vpop.f32.mrb[0].mxu0
  %3534 = vdwg.mxu0
  %v3535 = vmax.f32 %v3489, %v3530
  %v3536 = vld [vmem:[%s13] sm:$0xff]
  %v3537 = vld [vmem:[%s13 + $0x8] sm:$0xff]
  %v3538 = vld [vmem:[%s13 + $0x10] sm:$0xff]
  %v3539 = vld [vmem:[%s13 + $0x18] sm:$0xff]
  %v3540 = vld [vmem:[%s14] sm:$0x1]
  %v3542 = vlaneseq
  %v3543 = vshrl.u32 %v3542, 7
  %v3544 = vsub.s32 0, %v3543
  %v3545 = vrot.slane %v3540, %v3544
  %vm3547 = vcmask 261120
  %v3549 = vsel %vm3547, %v3535, 0
  %3551 = vmatprep.subr.mxu0 0.0
  %3552 = vmatpush1.msra.mxu0 %v3536
  %3553 = vmatprep.subr.mxu0 0.0
  %3554 = vmatpush1.msra.mxu0 %v3537
  %3555 = vmatprep.subr.mxu0 0.0
  %3556 = vmatpush1.msra.mxu0 %v3538
  %3557 = vmatprep.subr.mxu0 0.0
  %3558 = vmatpush1.msra.mxu0 %v3539
  %3559 = vmatprep.subr.mxu0 0.0
  %3560 = vmatpush1.msra.mxu0 0.0
  %3561 = vmatprep.subr.mxu0 0.0
  %3562 = vmatpush1.msra.mxu0 0.0
  %3563 = vmatprep.subr.mxu0 0.0
  %3564 = vmatpush1.msra.mxu0 0.0
  %3565 = vmatprep.subr.mxu0 0.0
  %3566 = vmatpush1.msra.mxu0 0.0
  %3567 = vmatprep.subr.mxu0 0.0
  %3568 = vmatpush1.msra.mxu0 0.0
  %3569 = vmatprep.subr.mxu0 0.0
  %3570 = vmatpush1.msra.mxu0 0.0
  %3571 = vmatprep.subr.mxu0 0.0
  %3572 = vmatpush1.msra.mxu0 0.0
  %3573 = vmatprep.subr.mxu0 0.0
  %3574 = vmatpush1.msra.mxu0 0.0
  %3575 = vmatprep.subr.mxu0 0.0
  %3576 = vmatpush1.msra.mxu0 0.0
  %3577 = vmatprep.subr.mxu0 0.0
  %3578 = vmatpush1.msra.mxu0 0.0
  %3579 = vmatprep.subr.mxu0 0.0
  %3580 = vmatpush1.msra.mxu0 0.0
  %3581 = vmatprep.subr.mxu0 0.0
  %3582 = vmatpush1.msra.mxu0 0.0
  %3583 = vmatprep.subr.mxu0 0.0
  %3584 = vmatpush1.msra.mxu0 0.0
  %3585 = vmatprep.subr.mxu0 0.0
  %3586 = vmatpush1.msra.mxu0 0.0
  %3587 = vmatprep.subr.mxu0 0.0
  %3588 = vmatpush1.msra.mxu0 0.0
  %3589 = vmatprep.subr.mxu0 0.0
  %3590 = vmatpush1.msra.mxu0 0.0
  %3591 = vmatprep.subr.mxu0 0.0
  %3592 = vmatpush1.msra.mxu0 0.0
  %3593 = vmatprep.subr.mxu0 0.0
  %3594 = vmatpush1.msra.mxu0 0.0
  %3595 = vmatprep.subr.mxu0 0.0
  %3596 = vmatpush1.msra.mxu0 0.0
  %3597 = vmatprep.subr.mxu0 0.0
  %3598 = vmatpush1.msra.mxu0 0.0
  %3599 = vmatprep.subr.mxu0 0.0
  %3600 = vmatpush1.msra.mxu0 0.0
  %3601 = vmatprep.subr.mxu0 0.0
  %3602 = vmatpush1.msra.mxu0 0.0
  %3603 = vmatprep.subr.mxu0 0.0
  %3604 = vmatpush1.msra.mxu0 0.0
  %3605 = vmatprep.subr.mxu0 0.0
  %3606 = vmatpush1.msra.mxu0 0.0
  %3607 = vmatprep.subr.mxu0 0.0
  %3608 = vmatpush1.msra.mxu0 0.0
  %3609 = vmatprep.subr.mxu0 0.0
  %3610 = vmatpush1.msra.mxu0 0.0
  %3611 = vmatprep.subr.mxu0 0.0
  %3612 = vmatpush1.msra.mxu0 0.0
  %3613 = vmatprep.subr.mxu0 0.0
  %3614 = vmatpush1.msra.mxu0 0.0
  %3615 = vmatprep.mubr.f32.mxu0 0.0
  %3616 = vmatmul.mubr.f32.gmra.mrb[0].mxu0 %v3549
  %v3617 = vpop.f32.mrb[0].mxu0
  %v3618 = vadd.f32 %v3545, %v3617
  %v3619 = vpop.f32.mrb[0].mxu0
  %3620 = vdwg.mxu0
  %3621 = vst [vmem:[%s15] sm:$0xff] %v3618
  // Predicated region
  $region62: #{cifar_forward.1} parent=0 // pred_check
    _
  $region63: #{cifar_forward.1} parent=0 // pred_check_branch
    %3623 = sbr.rel (0) target = $region65
  $region64: #{cifar_forward.1} parent=0 // pred_region
    _
  $region65: #{cifar_forward.1} parent=0 // pred_fallthru
    _
  // Predicated region
  $region66: #{cifar_forward.1} parent=0 // pred_check
    _
  $region67: #{cifar_forward.1} parent=0 // pred_check_branch
    %3625 = sbr.rel (0) target = $region69
  $region68: #{cifar_forward.1} parent=0 // pred_region
    _
  $region69: #{cifar_forward.1} parent=0 // pred_fallthru
    _

</llo_original>
